<compile_context>
chip_gen: v6e
topology: v6e:2x2x1
jax: 0.10.0
libtpu: 0.0.40
codegen_flags: <defaults>
</compile_context>

<pallas_src>
import functools

import jax
import jax.numpy as jnp
from jax import lax
from jax.experimental import pallas as pl
from jax.experimental.pallas import tpu as pltpu

SMEM = pltpu.MemorySpace.SMEM
HEADS = 3            # GATConv heads=3 in the module
NEG_INF = -1e30


def _round_up(n, m):
    return ((n + m - 1) // m) * m


# --------------------------------------------------------------------------
# Fused forward kernel.  One grid step == one branch (0 = source, 1 = target).
# Per branch: domain GRU + shared GRU -> domain GAT + shared GAT ->
#             two max-pool+sigmoid features -> predictor head.
# --------------------------------------------------------------------------
def _fused_kernel(alpha_ref, x_ref,
                  wih_d_ref, whh_d_ref, bih_d_ref, bhh_d_ref,
                  wih_b_ref, whh_b_ref, bih_b_ref, bhh_b_ref,
                  wg_d_ref, asrc_d_ref, adst_d_ref, bgat_d_ref,
                  wg_b_ref, asrc_b_ref, adst_b_ref, bgat_b_ref,
                  adj_ref, eatt_ref, mask_ref,
                  w1_ref, b1_ref, w3_ref, b3_ref,
                  pred_ref, feat_ref,
                  *, seq_len, hidden, heads, out_channels, n_pad, num_graphs):
    L, H, C, Np, B = seq_len, hidden, out_channels, n_pad, num_graphs

    x2 = x_ref[...]                      # (L*Np, I), time-major rows
    adj = adj_ref[...]                   # (Np, Np); adj[i, j] = 1 iff edge j -> i
    eatt = eatt_ref[...]                 # (2, heads, Np, Np): [domain GAT, shared GAT]
    mask = mask_ref[...]                 # (Np, B) one-hot node->graph assignment
    alpha = alpha_ref[0, 0]

    def gru(wih, whh, bih, bhh):
        # wih (I, 3H), whh (H, 3H), bih/bhh (1, 3H); lane layout r | z | n.
        # Input projections for all gates and all timesteps in ONE MXU pass.
        gi = jnp.dot(x2, wih, preferred_element_type=jnp.float32) + bih     # (L*Np, 3H)
        h = jnp.zeros((Np, H), jnp.float32)
        hs = []
        for t in range(L):               # static unroll; fine at small L (scaling guard)
            gi_t = gi[t * Np:(t + 1) * Np]                                   # aligned sublanes
            # ONE recurrent matmul per timestep (was 3)
            gh = jnp.dot(h, whh, preferred_element_type=jnp.float32) + bhh   # (Np, 3H)
            rz = jax.nn.sigmoid(gi_t[:, :2 * H] + gh[:, :2 * H])             # one EUP pass
            r, z = rz[:, :H], rz[:, H:]
            n = jnp.tanh(gi_t[:, 2 * H:] + r * gh[:, 2 * H:])
            h = (1.0 - z) * n + z * h
            hs.append(h)
        return jnp.concatenate(hs, axis=-1)                                  # (Np, L*H)

    def gat(gin, w_all, asrc_bd, adst_flat, bias, ea):
        # Single wide projection for all heads: (Np, F) @ (F, heads*C).
        xh_all = jnp.dot(gin, w_all, preferred_element_type=jnp.float32)     # (Np, heads*C)
        # target-node logits for all heads: one broadcast VPU multiply,
        # per-head lane reduces below.
        ad_prod = xh_all * adst_flat                                          # (Np, heads*C)
        # source-node logits for all heads in ONE MXU pass (block-diag att_src),
        # landing directly in row orientation (heads, Np).
        a_src_all = lax.dot_general(asrc_bd, xh_all, (((1,), (1,)), ((), ())),
                                    preferred_element_type=jnp.float32)
        attns, xhs = [], []
        for hh in range(heads):
            xh = xh_all[:, hh * C:(hh + 1) * C]                               # (Np, C)
            a_dst = jnp.sum(ad_prod[:, hh * C:(hh + 1) * C],
                            axis=-1, keepdims=True)                           # (Np, 1)
            e = a_dst + a_src_all[hh:hh + 1, :] + ea[hh]                      # (Np, Np)
            e = jnp.where(e > 0, e, 0.2 * e)                                  # leaky_relu(0.2)
            e = jnp.where(adj > 0, e, NEG_INF)                                # mask non-edges
            m = jnp.max(e, axis=-1, keepdims=True)
            p = jnp.exp(e - m) * adj
            ssum = jnp.sum(p, axis=-1, keepdims=True)
            # EUP reciprocal instead of a VPU divide sequence
            attns.append(p * pl.reciprocal(jnp.maximum(ssum, 1e-16), approx=True))
            xhs.append(xh)
        # Fuse the 3 per-head aggregations into ONE matmul:
        # (Np, heads*Np) @ (heads*Np, C) produces the head-sum directly.
        attn_cat = jnp.concatenate(attns, axis=-1)
        xh_cat = jnp.concatenate(xhs, axis=0)
        acc = jnp.dot(attn_cat, xh_cat, preferred_element_type=jnp.float32)
        return acc * (1.0 / heads) + bias                                     # head mean + bias

    def pool(x):
        # global_max_pool over the node->graph one-hot (B is tiny & static).
        rows = []
        for b in range(B):
            col = mask[:, b:b + 1]                                            # (Np, 1)
            rows.append(jnp.max(jnp.where(col > 0, x, NEG_INF),
                                axis=0, keepdims=True))                       # (1, C)
        return jnp.concatenate(rows, axis=0)                                  # (B, C)

    gin_d = gru(wih_d_ref[...], whh_d_ref[...], bih_d_ref[...], bhh_d_ref[...])
    gin_b = gru(wih_b_ref[...], whh_b_ref[...], bih_b_ref[...], bhh_b_ref[...])

    gout_d = gat(gin_d, wg_d_ref[...], asrc_d_ref[...], adst_d_ref[...],
                 bgat_d_ref[...], eatt[0])
    gout_b = gat(gin_b, wg_b_ref[...], asrc_b_ref[...], adst_b_ref[...],
                 bgat_b_ref[...], eatt[1])

    # Both pooled features concatenated into a single lane-dense (B, 2C) slab
    # (2C == 128 lanes -> unmasked store), one sigmoid EUP pass for both.
    feat_ref[...] = jax.nn.sigmoid(
        jnp.concatenate([pool(gout_d), pool(gout_b)], axis=-1))

    # predictor_1 (block-diagonal over history) -> relu -> predictor_3 -> relu
    lin = gout_d + alpha * gout_b                                             # (Np, L*Cg)
    h1 = jnp.maximum(jnp.dot(lin, w1_ref[...],
                             preferred_element_type=jnp.float32) + b1_ref[...], 0.0)
    pred_ref[...] = jnp.maximum(jnp.dot(h1, w3_ref[...],
                                        preferred_element_type=jnp.float32) + b3_ref[...], 0.0)


def fused_forward(alpha_arr, x_all, gru_dom, gru_both, gat_dom, gat_both,
                  adj_all, eatt_all, mask_all, w1big, b1row, w3t, b3row,
                  *, seq_len, hidden, input_size, heads, out_channels,
                  n_pad, num_graphs, pred_len):
    L, H, I = seq_len, hidden, input_size
    C, Np, B, P = out_channels, n_pad, num_graphs, pred_len
    F = L * H

    kernel = functools.partial(_fused_kernel, seq_len=L, hidden=H, heads=heads,
                               out_channels=C, n_pad=Np, num_graphs=B)

    def branch(*blk):          # branch-indexed array, leading axis squeezed
        return pl.BlockSpec(blk, lambda i, _n=len(blk): (i,) + (0,) * (_n - 1))

    def shared(*shape):        # shared weights, same block every grid step
        return pl.BlockSpec(shape, lambda i, _n=len(shape): (0,) * _n)

    in_specs = [
        pl.BlockSpec(memory_space=SMEM),                   # alpha (1, 1)
        branch(None, L * Np, I),                           # x (time-major rows)
        branch(None, I, 3 * H), branch(None, H, 3 * H),    # domain GRU weights (packed)
        branch(None, 1, 3 * H), branch(None, 1, 3 * H),    # domain GRU biases
        shared(I, 3 * H), shared(H, 3 * H),                # shared GRU weights
        shared(1, 3 * H), shared(1, 3 * H),                # shared GRU biases
        branch(None, F, heads * C), branch(None, heads, heads * C),
        branch(None, 1, heads * C), branch(None, 1, C),    # domain GAT (w, asrc_bd, adst, b)
        shared(F, heads * C), shared(heads, heads * C),
        shared(1, heads * C), shared(1, C),                # shared GAT
        branch(None, Np, Np),                              # adjacency
        branch(None, 2, heads, Np, Np),                    # edge attention [dom, shared]
        branch(None, Np, B),                               # pooling mask
        shared(C, L), shared(1, L), shared(L, P), shared(1, P),   # predictor
    ]
    out_specs = [
        branch(None, Np, P),                               # predictions
        branch(None, B, 2 * C),                            # pooled features (dom | shared)
    ]
    out_shape = (
        jax.ShapeDtypeStruct((2, Np, P), jnp.float32),
        jax.ShapeDtypeStruct((2, B, 2 * C), jnp.float32),
    )
    return pl.pallas_call(
        kernel,
        grid=(2,),
        in_specs=in_specs,
        out_specs=out_specs,
        out_shape=out_shape,
        compiler_params=pltpu.CompilerParams(dimension_semantics=("parallel",)),
    )(alpha_arr, x_all,
      gru_dom[0], gru_dom[1], gru_dom[2], gru_dom[3],
      gru_both[0], gru_both[1], gru_both[2], gru_both[3],
      gat_dom[0], gat_dom[1], gat_dom[2], gat_dom[3],
      gat_both[0], gat_both[1], gat_both[2], gat_both[3],
      adj_all, eatt_all, mask_all, w1big, b1row, w3t, b3row)


# --------------------------------------------------------------------------
# Glue: parameter repacking + dense graph construction (runs once under jit)
# --------------------------------------------------------------------------
def _gru_pack(p):
    # Pack all three gates (r|z|n) along lanes: one matmul per projection.
    return p['w_ih'].T, p['w_hh'].T, p['b_ih'][None, :], p['b_hh'][None, :]


def _gat_pack(p, heads, C):
    w = p['lin_w'].T                                        # (F, heads*C)
    eye = jnp.eye(heads, dtype=jnp.float32)
    # Block-diagonal att_src: one MXU pass gives all heads' source logits.
    asrc_bd = jnp.einsum('hc,hk->hkc', p['att_src'], eye).reshape(heads, heads * C)
    adst_flat = p['att_dst'].reshape(1, heads * C)
    return w, asrc_bd, adst_flat, p['bias'][None, :]


def _edge_attention(edge_index, edge_attr, gat_p, n_pad, heads, out_channels):
    C = out_channels
    e_lin = (edge_attr @ gat_p['lin_edge_w'].T).reshape(-1, heads, C)   # lin_edge(edge_attr)
    a_edge = jnp.sum(e_lin * gat_p['att_edge'][None], axis=-1)          # (E, heads)
    src, dst = edge_index[0], edge_index[1]                             # messages: src -> dst
    adj = jnp.zeros((n_pad, n_pad), jnp.float32).at[dst, src].set(1.0)
    eatt = jnp.zeros((heads, n_pad, n_pad), jnp.float32).at[:, dst, src].set(a_edge.T)
    # TODO(synk): duplicate (src, dst) pairs overwrite instead of producing
    # separate softmax terms (PyG edge-wise softmax would); fine for simple graphs.
    return adj, eatt


def mytry_forward(params, cfg, x_source, ei_s, ea_s, batch_s,
                  x_target, ei_t, ea_t, batch_t, alpha):
    I, H = cfg['gru_input_size'], cfg['gru_hidden_size']
    L, P = cfg['history_len'], cfg['prediction_len']
    Cg = cfg['gat_out_channel']
    C = Cg * L
    B, n_s = x_source.shape[0], x_source.shape[1]
    n_t = x_target.shape[1]
    Ns, Nt = B * n_s, B * n_t
    Np = _round_up(max(Ns, Nt), 8)       # both branches padded to the same node count

    def prep_x(x, N):
        x3 = x.reshape(N, L, I).transpose(1, 0, 2)                  # (L, N, I)
        x3 = jnp.pad(x3, ((0, 0), (0, Np - N), (0, 0)))
        return x3.reshape(L * Np, I)                                # time-major rows
    x_all = jnp.stack([prep_x(x_source, Ns), prep_x(x_target, Nt)], 0)

    def prep_mask(batch, N):
        m = (batch[:, None] == jnp.arange(B)[None, :]).astype(jnp.float32)
        return jnp.pad(m, ((0, Np - N), (0, 0)))
    mask_all = jnp.stack([prep_mask(batch_s, Ns), prep_mask(batch_t, Nt)], 0)

    adj_s, eatt_ss = _edge_attention(ei_s, ea_s, params['gat_s'], Np, HEADS, C)
    _, eatt_sb = _edge_attention(ei_s, ea_s, params['gat_b'], Np, HEADS, C)
    adj_t, eatt_tt = _edge_attention(ei_t, ea_t, params['gat_t'], Np, HEADS, C)
    _, eatt_tb = _edge_attention(ei_t, ea_t, params['gat_b'], Np, HEADS, C)
    adj_all = jnp.stack([adj_s, adj_t], 0)                                 # (2, Np, Np)
    eatt_all = jnp.stack([jnp.stack([eatt_ss, eatt_sb], 0),
                          jnp.stack([eatt_tt, eatt_tb], 0)], 0)            # (2, 2, H, Np, Np)
    # TODO(synk): at large Np the dense (2,2,heads,Np,Np) eatt blocks must be
    # tiled along the target-node axis for v7x's 64 MiB VMEM; fine at toy scale.

    gs = _gru_pack(params['gru_s'])
    gt = _gru_pack(params['gru_t'])
    gru_both = _gru_pack(params['gru_b'])
    gru_dom = tuple(jnp.stack([a, b], 0) for a, b in zip(gs, gt))

    as_p = _gat_pack(params['gat_s'], HEADS, C)
    at_p = _gat_pack(params['gat_t'], HEADS, C)
    gat_both = _gat_pack(params['gat_b'], HEADS, C)
    gat_dom = tuple(jnp.stack([a, b], 0) for a, b in zip(as_p, at_p))

    # predictor_1 expanded block-diagonally over the (L, Cg) flattening
    w1big = jnp.kron(jnp.eye(L, dtype=jnp.float32), params['p1_w'][0][:, None])  # (L*Cg, L)
    b1row = jnp.full((1, L), params['p1_b'][0], jnp.float32)
    w3t = params['p3_w'].T                                                        # (L, P)
    b3row = params['p3_b'][None, :]

    alpha_arr = jnp.asarray(alpha, jnp.float32).reshape(1, 1)

    pred, feat = fused_forward(
        alpha_arr, x_all, gru_dom, gru_both, gat_dom, gat_both,
        adj_all, eatt_all, mask_all, w1big, b1row, w3t, b3row,
        seq_len=L, hidden=H, input_size=I, heads=HEADS, out_channels=C,
        n_pad=Np, num_graphs=B, pred_len=P)

    feat_d, feat_b = feat[:, :, :C], feat[:, :, C:]
    pred_s = pred[0, :Ns].reshape(B, n_s, P)
    pred_t = pred[1, :Nt].reshape(B, n_t, P)
    return pred_s, pred_t, feat_d[0], feat_d[1], feat_b[0], feat_b[1]


# --------------------------------------------------------------------------
# Parameter init (deterministic, synthetic)
# --------------------------------------------------------------------------
def init_params(key, cfg):
    I, H = cfg['gru_input_size'], cfg['gru_hidden_size']
    L, P = cfg['history_len'], cfg['prediction_len']
    Cg = cfg['gat_out_channel']
    F_in, C_out = H * L, Cg * L
    keys = iter(jax.random.split(key, 64))

    def nrm(shape, scale=0.1):
        return scale * jax.random.normal(next(keys), shape, jnp.float32)

    def gru_p():
        return {'w_ih': nrm((3 * H, I)), 'w_hh': nrm((3 * H, H)),
                'b_ih': nrm((3 * H,)), 'b_hh': nrm((3 * H,))}

    def gat_p():
        return {'lin_w': nrm((HEADS * C_out, F_in)),
                'att_src': nrm((HEADS, C_out)), 'att_dst': nrm((HEADS, C_out)),
                'att_edge': nrm((HEADS, C_out)), 'lin_edge_w': nrm((HEADS * C_out, 1)),
                'bias': nrm((C_out,))}

    return {
        'gru_s': gru_p(), 'gru_t': gru_p(), 'gru_b': gru_p(),
        'gat_s': gat_p(), 'gat_t': gat_p(), 'gat_b': gat_p(),
        'p1_w': nrm((1, Cg)), 'p1_b': nrm((1,)),
        'p3_w': nrm((P, L)), 'p3_b': nrm((P,)),
        # TODO(synk): predictor_2 / predictor_4 / softmax / GRL are defined in
        # __init__ but never used in forward(), so they are not instantiated.
    }


# --------------------------------------------------------------------------
if __name__ == "__main__":
    cfg = dict(gru_input_size=8, gru_hidden_size=32, gat_out_channel=16,
               output_dim=3, history_len=4, prediction_len=3, batch_size=2)
    key = jax.random.PRNGKey(0)
    k_param, k_xs, k_xt, k_es, k_et = jax.random.split(key, 5)
    params = init_params(k_param, cfg)

    B, L, I = cfg['batch_size'], cfg['history_len'], cfg['gru_input_size']
    node_s, node_t = 5, 6
    x_source = jax.random.normal(k_xs, (B, node_s, L, I), jnp.float32)
    x_target = jax.random.normal(k_xt, (B, node_t, L, I), jnp.float32)

    def ring_graph(num_graphs, nodes_per_graph, k):
        src, dst = [], []
        for g in range(num_graphs):
            off = g * nodes_per_graph
            for n in range(nodes_per_graph):
                a, b = off + n, off + (n + 1) % nodes_per_graph
                src += [a, b]
                dst += [b, a]
        ei = jnp.array([src, dst], jnp.int32)
        ea = jax.random.uniform(k, (ei.shape[1], 1), jnp.float32)
        batch = jnp.repeat(jnp.arange(num_graphs, dtype=jnp.int32), nodes_per_graph)
        return ei, ea, batch

    ei_s, ea_s, batch_s = ring_graph(B, node_s, k_es)
    ei_t, ea_t, batch_t = ring_graph(B, node_t, k_et)

    @jax.jit
    def run(params, xs, eis, eas, bs, xt, eit, eat, bt, alpha):
        return mytry_forward(params, cfg, xs, eis, eas, bs, xt, eit, eat, bt, alpha)

    alpha = jnp.float32(0.5)
    outs = run(params, x_source, ei_s, ea_s, batch_s,
               x_target, ei_t, ea_t, batch_t, alpha)
    outs = jax.block_until_ready(outs)

    # sanity on output shapes (matches the torch module's return tuple)
    assert outs[0].shape == (B, node_s, cfg['prediction_len'])
    assert outs[1].shape == (B, node_t, cfg['prediction_len'])
    for o in outs[2:]:
        assert o.shape == (B, cfg['gat_out_channel'] * cfg['history_len'])
    print("KERNEL_OK")
</pallas_src>

<mosaic_0001>
module attributes {stable_mosaic.version = 11 : i64} {
  func.func @_fused_kernel(%arg0: i32, %arg1: memref<1x1xf32, #tpu.memory_space<smem>>, %arg2: memref<1x64x8xf32, #tpu.memory_space<vmem>>, %arg3: memref<1x8x96xf32, #tpu.memory_space<vmem>>, %arg4: memref<1x32x96xf32, #tpu.memory_space<vmem>>, %arg5: memref<1x1x96xf32, #tpu.memory_space<vmem>>, %arg6: memref<1x1x96xf32, #tpu.memory_space<vmem>>, %arg7: memref<8x96xf32, #tpu.memory_space<vmem>>, %arg8: memref<32x96xf32, #tpu.memory_space<vmem>>, %arg9: memref<1x96xf32, #tpu.memory_space<vmem>>, %arg10: memref<1x96xf32, #tpu.memory_space<vmem>>, %arg11: memref<1x128x192xf32, #tpu.memory_space<vmem>>, %arg12: memref<1x3x192xf32, #tpu.memory_space<vmem>>, %arg13: memref<1x1x192xf32, #tpu.memory_space<vmem>>, %arg14: memref<1x1x64xf32, #tpu.memory_space<vmem>>, %arg15: memref<128x192xf32, #tpu.memory_space<vmem>>, %arg16: memref<3x192xf32, #tpu.memory_space<vmem>>, %arg17: memref<1x192xf32, #tpu.memory_space<vmem>>, %arg18: memref<1x64xf32, #tpu.memory_space<vmem>>, %arg19: memref<1x16x16xf32, #tpu.memory_space<vmem>>, %arg20: memref<1x2x3x16x16xf32, #tpu.memory_space<vmem>>, %arg21: memref<1x16x2xf32, #tpu.memory_space<vmem>>, %arg22: memref<64x4xf32, #tpu.memory_space<vmem>>, %arg23: memref<1x4xf32, #tpu.memory_space<vmem>>, %arg24: memref<4x3xf32, #tpu.memory_space<vmem>>, %arg25: memref<1x3xf32, #tpu.memory_space<vmem>>, %arg26: memref<1x16x3xf32, #tpu.memory_space<vmem>>, %arg27: memref<1x2x128xf32, #tpu.memory_space<vmem>>) attributes {dimension_semantics = [#tpu.dimension_semantics<parallel>], iteration_bounds = array<i64: 2>, scalar_prefetch = 0 : i64, scratch_operands = 0 : i64, tpu.core_type = #tpu.core_type<tc>, window_params = [{transform_indices = @transform_0, window_bounds = array<i64: 1, 1>}, {transform_indices = @transform_1, window_bounds = array<i64: 1, 64, 8>}, {transform_indices = @transform_2, window_bounds = array<i64: 1, 8, 96>}, {transform_indices = @transform_3, window_bounds = array<i64: 1, 32, 96>}, {transform_indices = @transform_4, window_bounds = array<i64: 1, 1, 96>}, {transform_indices = @transform_5, window_bounds = array<i64: 1, 1, 96>}, {pipeline_mode = #tpu.pipeline_mode<synchronous>, transform_indices = @transform_6, window_bounds = array<i64: 8, 96>}, {pipeline_mode = #tpu.pipeline_mode<synchronous>, transform_indices = @transform_7, window_bounds = array<i64: 32, 96>}, {pipeline_mode = #tpu.pipeline_mode<synchronous>, transform_indices = @transform_8, window_bounds = array<i64: 1, 96>}, {pipeline_mode = #tpu.pipeline_mode<synchronous>, transform_indices = @transform_9, window_bounds = array<i64: 1, 96>}, {transform_indices = @transform_10, window_bounds = array<i64: 1, 128, 192>}, {transform_indices = @transform_11, window_bounds = array<i64: 1, 3, 192>}, {transform_indices = @transform_12, window_bounds = array<i64: 1, 1, 192>}, {transform_indices = @transform_13, window_bounds = array<i64: 1, 1, 64>}, {pipeline_mode = #tpu.pipeline_mode<synchronous>, transform_indices = @transform_14, window_bounds = array<i64: 128, 192>}, {pipeline_mode = #tpu.pipeline_mode<synchronous>, transform_indices = @transform_15, window_bounds = array<i64: 3, 192>}, {pipeline_mode = #tpu.pipeline_mode<synchronous>, transform_indices = @transform_16, window_bounds = array<i64: 1, 192>}, {pipeline_mode = #tpu.pipeline_mode<synchronous>, transform_indices = @transform_17, window_bounds = array<i64: 1, 64>}, {transform_indices = @transform_18, window_bounds = array<i64: 1, 16, 16>}, {transform_indices = @transform_19, window_bounds = array<i64: 1, 2, 3, 16, 16>}, {transform_indices = @transform_20, window_bounds = array<i64: 1, 16, 2>}, {pipeline_mode = #tpu.pipeline_mode<synchronous>, transform_indices = @transform_21, window_bounds = array<i64: 64, 4>}, {pipeline_mode = #tpu.pipeline_mode<synchronous>, transform_indices = @transform_22, window_bounds = array<i64: 1, 4>}, {pipeline_mode = #tpu.pipeline_mode<synchronous>, transform_indices = @transform_23, window_bounds = array<i64: 4, 3>}, {pipeline_mode = #tpu.pipeline_mode<synchronous>, transform_indices = @transform_24, window_bounds = array<i64: 1, 3>}, {transform_indices = @transform_25, window_bounds = array<i64: 1, 16, 3>}, {transform_indices = @transform_26, window_bounds = array<i64: 1, 2, 128>}]} {
    %c0 = arith.constant 0 : index
    %c0_0 = arith.constant 0 : index
    %c0_1 = arith.constant 0 : index
    %0 = vector.load %arg2[%c0, %c0_0, %c0_1] : memref<1x64x8xf32, #tpu.memory_space<vmem>>, vector<1x64x8xf32>
    %1 = vector.shape_cast %0 : vector<1x64x8xf32> to vector<64x8xf32>
    %c0_2 = arith.constant 0 : index
    %c0_3 = arith.constant 0 : index
    %c0_4 = arith.constant 0 : index
    %2 = vector.load %arg19[%c0_2, %c0_3, %c0_4] : memref<1x16x16xf32, #tpu.memory_space<vmem>>, vector<1x16x16xf32>
    %3 = vector.shape_cast %2 : vector<1x16x16xf32> to vector<16x16xf32>
    %c0_5 = arith.constant 0 : index
    %c0_6 = arith.constant 0 : index
    %c0_7 = arith.constant 0 : index
    %c0_8 = arith.constant 0 : index
    %c0_9 = arith.constant 0 : index
    %4 = vector.load %arg20[%c0_5, %c0_6, %c0_7, %c0_8, %c0_9] : memref<1x2x3x16x16xf32, #tpu.memory_space<vmem>>, vector<1x2x3x16x16xf32>
    %5 = vector.shape_cast %4 : vector<1x2x3x16x16xf32> to vector<2x3x16x16xf32>
    %c0_10 = arith.constant 0 : index
    %c0_11 = arith.constant 0 : index
    %c0_12 = arith.constant 0 : index
    %6 = vector.load %arg21[%c0_10, %c0_11, %c0_12] : memref<1x16x2xf32, #tpu.memory_space<vmem>>, vector<1x16x2xf32>
    %7 = vector.shape_cast %6 : vector<1x16x2xf32> to vector<16x2xf32>
    %c0_13 = arith.constant 0 : index
    %c0_14 = arith.constant 0 : index
    %8 = memref.load %arg1[%c0_13, %c0_14] : memref<1x1xf32, #tpu.memory_space<smem>>
    %c0_15 = arith.constant 0 : index
    %c0_16 = arith.constant 0 : index
    %c0_17 = arith.constant 0 : index
    %9 = vector.load %arg3[%c0_15, %c0_16, %c0_17] : memref<1x8x96xf32, #tpu.memory_space<vmem>>, vector<1x8x96xf32>
    %10 = vector.shape_cast %9 : vector<1x8x96xf32> to vector<8x96xf32>
    %c0_18 = arith.constant 0 : index
    %c0_19 = arith.constant 0 : index
    %c0_20 = arith.constant 0 : index
    %11 = vector.load %arg4[%c0_18, %c0_19, %c0_20] : memref<1x32x96xf32, #tpu.memory_space<vmem>>, vector<1x32x96xf32>
    %12 = vector.shape_cast %11 : vector<1x32x96xf32> to vector<32x96xf32>
    %c0_21 = arith.constant 0 : index
    %c0_22 = arith.constant 0 : index
    %c0_23 = arith.constant 0 : index
    %13 = vector.load %arg5[%c0_21, %c0_22, %c0_23] : memref<1x1x96xf32, #tpu.memory_space<vmem>>, vector<1x1x96xf32>
    %14 = vector.shape_cast %13 : vector<1x1x96xf32> to vector<1x96xf32>
    %c0_24 = arith.constant 0 : index
    %c0_25 = arith.constant 0 : index
    %c0_26 = arith.constant 0 : index
    %15 = vector.load %arg6[%c0_24, %c0_25, %c0_26] : memref<1x1x96xf32, #tpu.memory_space<vmem>>, vector<1x1x96xf32>
    %16 = vector.shape_cast %15 : vector<1x1x96xf32> to vector<1x96xf32>
    %cst = arith.constant dense<0.000000e+00> : vector<64x96xf32>
    %17 = tpu.matmul %1, %10, %cst {dimension_numbers = #tpu.dot_dimension_numbers<[1], [0], [0], [1], [0, 0, 1, 1], [], []>} : vector<64x8xf32>, vector<8x96xf32>, vector<64x96xf32> -> vector<64x96xf32>
    %18 = vector.broadcast %14 : vector<1x96xf32> to vector<64x96xf32>
    %19 = arith.addf %17, %18 : vector<64x96xf32>
    %cst_27 = arith.constant 0.000000e+00 : f32
    %20 = vector.broadcast %cst_27 : f32 to vector<16x32xf32>
    %21 = vector.extract_strided_slice %19 {offsets = [0, 0], sizes = [16, 96], strides = [1, 1]} : vector<64x96xf32> to vector<16x96xf32>
    %cst_28 = arith.constant dense<0.000000e+00> : vector<16x96xf32>
    %22 = tpu.matmul %20, %12, %cst_28 {dimension_numbers = #tpu.dot_dimension_numbers<[1], [0], [0], [1], [0, 0, 1, 1], [], []>} : vector<16x32xf32>, vector<32x96xf32>, vector<16x96xf32> -> vector<16x96xf32>
    %23 = vector.broadcast %16 : vector<1x96xf32> to vector<16x96xf32>
    %24 = arith.addf %22, %23 : vector<16x96xf32>
    %25 = vector.extract_strided_slice %21 {offsets = [0, 0], sizes = [16, 64], strides = [1, 1]} : vector<16x96xf32> to vector<16x64xf32>
    %26 = vector.extract_strided_slice %24 {offsets = [0, 0], sizes = [16, 64], strides = [1, 1]} : vector<16x96xf32> to vector<16x64xf32>
    %27 = arith.addf %25, %26 : vector<16x64xf32>
    %28 = arith.negf %27 : vector<16x64xf32>
    %29 = math.exp %28 : vector<16x64xf32>
    %cst_29 = arith.constant 1.000000e+00 : f32
    %30 = vector.broadcast %cst_29 : f32 to vector<16x64xf32>
    %31 = arith.addf %30, %29 : vector<16x64xf32>
    %32 = arith.divf %30, %31 : vector<16x64xf32>
    %33 = vector.extract_strided_slice %32 {offsets = [0, 0], sizes = [16, 32], strides = [1, 1]} : vector<16x64xf32> to vector<16x32xf32>
    %34 = vector.extract_strided_slice %32 {offsets = [0, 32], sizes = [16, 32], strides = [1, 1]} : vector<16x64xf32> to vector<16x32xf32>
    %35 = vector.extract_strided_slice %21 {offsets = [0, 64], sizes = [16, 32], strides = [1, 1]} : vector<16x96xf32> to vector<16x32xf32>
    %36 = vector.extract_strided_slice %24 {offsets = [0, 64], sizes = [16, 32], strides = [1, 1]} : vector<16x96xf32> to vector<16x32xf32>
    %37 = arith.mulf %33, %36 : vector<16x32xf32>
    %38 = arith.addf %35, %37 : vector<16x32xf32>
    %39 = math.tanh %38 : vector<16x32xf32>
    %cst_30 = arith.constant 1.000000e+00 : f32
    %40 = vector.broadcast %cst_30 : f32 to vector<16x32xf32>
    %41 = arith.subf %40, %34 : vector<16x32xf32>
    %42 = arith.mulf %41, %39 : vector<16x32xf32>
    %43 = arith.mulf %34, %20 : vector<16x32xf32>
    %44 = arith.addf %42, %43 : vector<16x32xf32>
    %45 = vector.extract_strided_slice %19 {offsets = [16, 0], sizes = [16, 96], strides = [1, 1]} : vector<64x96xf32> to vector<16x96xf32>
    %cst_31 = arith.constant dense<0.000000e+00> : vector<16x96xf32>
    %46 = tpu.matmul %44, %12, %cst_31 {dimension_numbers = #tpu.dot_dimension_numbers<[1], [0], [0], [1], [0, 0, 1, 1], [], []>} : vector<16x32xf32>, vector<32x96xf32>, vector<16x96xf32> -> vector<16x96xf32>
    %47 = vector.broadcast %16 : vector<1x96xf32> to vector<16x96xf32>
    %48 = arith.addf %46, %47 : vector<16x96xf32>
    %49 = vector.extract_strided_slice %45 {offsets = [0, 0], sizes = [16, 64], strides = [1, 1]} : vector<16x96xf32> to vector<16x64xf32>
    %50 = vector.extract_strided_slice %48 {offsets = [0, 0], sizes = [16, 64], strides = [1, 1]} : vector<16x96xf32> to vector<16x64xf32>
    %51 = arith.addf %49, %50 : vector<16x64xf32>
    %52 = arith.negf %51 : vector<16x64xf32>
    %53 = math.exp %52 : vector<16x64xf32>
    %cst_32 = arith.constant 1.000000e+00 : f32
    %54 = vector.broadcast %cst_32 : f32 to vector<16x64xf32>
    %55 = arith.addf %54, %53 : vector<16x64xf32>
    %56 = arith.divf %54, %55 : vector<16x64xf32>
    %57 = vector.extract_strided_slice %56 {offsets = [0, 0], sizes = [16, 32], strides = [1, 1]} : vector<16x64xf32> to vector<16x32xf32>
    %58 = vector.extract_strided_slice %56 {offsets = [0, 32], sizes = [16, 32], strides = [1, 1]} : vector<16x64xf32> to vector<16x32xf32>
    %59 = vector.extract_strided_slice %45 {offsets = [0, 64], sizes = [16, 32], strides = [1, 1]} : vector<16x96xf32> to vector<16x32xf32>
    %60 = vector.extract_strided_slice %48 {offsets = [0, 64], sizes = [16, 32], strides = [1, 1]} : vector<16x96xf32> to vector<16x32xf32>
    %61 = arith.mulf %57, %60 : vector<16x32xf32>
    %62 = arith.addf %59, %61 : vector<16x32xf32>
    %63 = math.tanh %62 : vector<16x32xf32>
    %cst_33 = arith.constant 1.000000e+00 : f32
    %64 = vector.broadcast %cst_33 : f32 to vector<16x32xf32>
    %65 = arith.subf %64, %58 : vector<16x32xf32>
    %66 = arith.mulf %65, %63 : vector<16x32xf32>
    %67 = arith.mulf %58, %44 : vector<16x32xf32>
    %68 = arith.addf %66, %67 : vector<16x32xf32>
    %69 = vector.extract_strided_slice %19 {offsets = [32, 0], sizes = [16, 96], strides = [1, 1]} : vector<64x96xf32> to vector<16x96xf32>
    %cst_34 = arith.constant dense<0.000000e+00> : vector<16x96xf32>
    %70 = tpu.matmul %68, %12, %cst_34 {dimension_numbers = #tpu.dot_dimension_numbers<[1], [0], [0], [1], [0, 0, 1, 1], [], []>} : vector<16x32xf32>, vector<32x96xf32>, vector<16x96xf32> -> vector<16x96xf32>
    %71 = vector.broadcast %16 : vector<1x96xf32> to vector<16x96xf32>
    %72 = arith.addf %70, %71 : vector<16x96xf32>
    %73 = vector.extract_strided_slice %69 {offsets = [0, 0], sizes = [16, 64], strides = [1, 1]} : vector<16x96xf32> to vector<16x64xf32>
    %74 = vector.extract_strided_slice %72 {offsets = [0, 0], sizes = [16, 64], strides = [1, 1]} : vector<16x96xf32> to vector<16x64xf32>
    %75 = arith.addf %73, %74 : vector<16x64xf32>
    %76 = arith.negf %75 : vector<16x64xf32>
    %77 = math.exp %76 : vector<16x64xf32>
    %cst_35 = arith.constant 1.000000e+00 : f32
    %78 = vector.broadcast %cst_35 : f32 to vector<16x64xf32>
    %79 = arith.addf %78, %77 : vector<16x64xf32>
    %80 = arith.divf %78, %79 : vector<16x64xf32>
    %81 = vector.extract_strided_slice %80 {offsets = [0, 0], sizes = [16, 32], strides = [1, 1]} : vector<16x64xf32> to vector<16x32xf32>
    %82 = vector.extract_strided_slice %80 {offsets = [0, 32], sizes = [16, 32], strides = [1, 1]} : vector<16x64xf32> to vector<16x32xf32>
    %83 = vector.extract_strided_slice %69 {offsets = [0, 64], sizes = [16, 32], strides = [1, 1]} : vector<16x96xf32> to vector<16x32xf32>
    %84 = vector.extract_strided_slice %72 {offsets = [0, 64], sizes = [16, 32], strides = [1, 1]} : vector<16x96xf32> to vector<16x32xf32>
    %85 = arith.mulf %81, %84 : vector<16x32xf32>
    %86 = arith.addf %83, %85 : vector<16x32xf32>
    %87 = math.tanh %86 : vector<16x32xf32>
    %cst_36 = arith.constant 1.000000e+00 : f32
    %88 = vector.broadcast %cst_36 : f32 to vector<16x32xf32>
    %89 = arith.subf %88, %82 : vector<16x32xf32>
    %90 = arith.mulf %89, %87 : vector<16x32xf32>
    %91 = arith.mulf %82, %68 : vector<16x32xf32>
    %92 = arith.addf %90, %91 : vector<16x32xf32>
    %93 = vector.extract_strided_slice %19 {offsets = [48, 0], sizes = [16, 96], strides = [1, 1]} : vector<64x96xf32> to vector<16x96xf32>
    %cst_37 = arith.constant dense<0.000000e+00> : vector<16x96xf32>
    %94 = tpu.matmul %92, %12, %cst_37 {dimension_numbers = #tpu.dot_dimension_numbers<[1], [0], [0], [1], [0, 0, 1, 1], [], []>} : vector<16x32xf32>, vector<32x96xf32>, vector<16x96xf32> -> vector<16x96xf32>
    %95 = vector.broadcast %16 : vector<1x96xf32> to vector<16x96xf32>
    %96 = arith.addf %94, %95 : vector<16x96xf32>
    %97 = vector.extract_strided_slice %93 {offsets = [0, 0], sizes = [16, 64], strides = [1, 1]} : vector<16x96xf32> to vector<16x64xf32>
    %98 = vector.extract_strided_slice %96 {offsets = [0, 0], sizes = [16, 64], strides = [1, 1]} : vector<16x96xf32> to vector<16x64xf32>
    %99 = arith.addf %97, %98 : vector<16x64xf32>
    %100 = arith.negf %99 : vector<16x64xf32>
    %101 = math.exp %100 : vector<16x64xf32>
    %cst_38 = arith.constant 1.000000e+00 : f32
    %102 = vector.broadcast %cst_38 : f32 to vector<16x64xf32>
    %103 = arith.addf %102, %101 : vector<16x64xf32>
    %104 = arith.divf %102, %103 : vector<16x64xf32>
    %105 = vector.extract_strided_slice %104 {offsets = [0, 0], sizes = [16, 32], strides = [1, 1]} : vector<16x64xf32> to vector<16x32xf32>
    %106 = vector.extract_strided_slice %104 {offsets = [0, 32], sizes = [16, 32], strides = [1, 1]} : vector<16x64xf32> to vector<16x32xf32>
    %107 = vector.extract_strided_slice %93 {offsets = [0, 64], sizes = [16, 32], strides = [1, 1]} : vector<16x96xf32> to vector<16x32xf32>
    %108 = vector.extract_strided_slice %96 {offsets = [0, 64], sizes = [16, 32], strides = [1, 1]} : vector<16x96xf32> to vector<16x32xf32>
    %109 = arith.mulf %105, %108 : vector<16x32xf32>
    %110 = arith.addf %107, %109 : vector<16x32xf32>
    %111 = math.tanh %110 : vector<16x32xf32>
    %cst_39 = arith.constant 1.000000e+00 : f32
    %112 = vector.broadcast %cst_39 : f32 to vector<16x32xf32>
    %113 = arith.subf %112, %106 : vector<16x32xf32>
    %114 = arith.mulf %113, %111 : vector<16x32xf32>
    %115 = arith.mulf %106, %92 : vector<16x32xf32>
    %116 = arith.addf %114, %115 : vector<16x32xf32>
    %117 = tpu.concatenate %44, %68, %92, %116 in 1 : vector<16x32xf32>, vector<16x32xf32>, vector<16x32xf32>, vector<16x32xf32> -> vector<16x128xf32>
    %c0_40 = arith.constant 0 : index
    %c0_41 = arith.constant 0 : index
    %118 = vector.load %arg7[%c0_40, %c0_41] : memref<8x96xf32, #tpu.memory_space<vmem>>, vector<8x96xf32>
    %c0_42 = arith.constant 0 : index
    %c0_43 = arith.constant 0 : index
    %119 = vector.load %arg8[%c0_42, %c0_43] : memref<32x96xf32, #tpu.memory_space<vmem>>, vector<32x96xf32>
    %c0_44 = arith.constant 0 : index
    %c0_45 = arith.constant 0 : index
    %120 = vector.load %arg9[%c0_44, %c0_45] : memref<1x96xf32, #tpu.memory_space<vmem>>, vector<1x96xf32>
    %c0_46 = arith.constant 0 : index
    %c0_47 = arith.constant 0 : index
    %121 = vector.load %arg10[%c0_46, %c0_47] : memref<1x96xf32, #tpu.memory_space<vmem>>, vector<1x96xf32>
    %cst_48 = arith.constant dense<0.000000e+00> : vector<64x96xf32>
    %122 = tpu.matmul %1, %118, %cst_48 {dimension_numbers = #tpu.dot_dimension_numbers<[1], [0], [0], [1], [0, 0, 1, 1], [], []>} : vector<64x8xf32>, vector<8x96xf32>, vector<64x96xf32> -> vector<64x96xf32>
    %123 = vector.broadcast %120 : vector<1x96xf32> to vector<64x96xf32>
    %124 = arith.addf %122, %123 : vector<64x96xf32>
    %cst_49 = arith.constant 0.000000e+00 : f32
    %125 = vector.broadcast %cst_49 : f32 to vector<16x32xf32>
    %126 = vector.extract_strided_slice %124 {offsets = [0, 0], sizes = [16, 96], strides = [1, 1]} : vector<64x96xf32> to vector<16x96xf32>
    %cst_50 = arith.constant dense<0.000000e+00> : vector<16x96xf32>
    %127 = tpu.matmul %125, %119, %cst_50 {dimension_numbers = #tpu.dot_dimension_numbers<[1], [0], [0], [1], [0, 0, 1, 1], [], []>} : vector<16x32xf32>, vector<32x96xf32>, vector<16x96xf32> -> vector<16x96xf32>
    %128 = vector.broadcast %121 : vector<1x96xf32> to vector<16x96xf32>
    %129 = arith.addf %127, %128 : vector<16x96xf32>
    %130 = vector.extract_strided_slice %126 {offsets = [0, 0], sizes = [16, 64], strides = [1, 1]} : vector<16x96xf32> to vector<16x64xf32>
    %131 = vector.extract_strided_slice %129 {offsets = [0, 0], sizes = [16, 64], strides = [1, 1]} : vector<16x96xf32> to vector<16x64xf32>
    %132 = arith.addf %130, %131 : vector<16x64xf32>
    %133 = arith.negf %132 : vector<16x64xf32>
    %134 = math.exp %133 : vector<16x64xf32>
    %cst_51 = arith.constant 1.000000e+00 : f32
    %135 = vector.broadcast %cst_51 : f32 to vector<16x64xf32>
    %136 = arith.addf %135, %134 : vector<16x64xf32>
    %137 = arith.divf %135, %136 : vector<16x64xf32>
    %138 = vector.extract_strided_slice %137 {offsets = [0, 0], sizes = [16, 32], strides = [1, 1]} : vector<16x64xf32> to vector<16x32xf32>
    %139 = vector.extract_strided_slice %137 {offsets = [0, 32], sizes = [16, 32], strides = [1, 1]} : vector<16x64xf32> to vector<16x32xf32>
    %140 = vector.extract_strided_slice %126 {offsets = [0, 64], sizes = [16, 32], strides = [1, 1]} : vector<16x96xf32> to vector<16x32xf32>
    %141 = vector.extract_strided_slice %129 {offsets = [0, 64], sizes = [16, 32], strides = [1, 1]} : vector<16x96xf32> to vector<16x32xf32>
    %142 = arith.mulf %138, %141 : vector<16x32xf32>
    %143 = arith.addf %140, %142 : vector<16x32xf32>
    %144 = math.tanh %143 : vector<16x32xf32>
    %cst_52 = arith.constant 1.000000e+00 : f32
    %145 = vector.broadcast %cst_52 : f32 to vector<16x32xf32>
    %146 = arith.subf %145, %139 : vector<16x32xf32>
    %147 = arith.mulf %146, %144 : vector<16x32xf32>
    %148 = arith.mulf %139, %125 : vector<16x32xf32>
    %149 = arith.addf %147, %148 : vector<16x32xf32>
    %150 = vector.extract_strided_slice %124 {offsets = [16, 0], sizes = [16, 96], strides = [1, 1]} : vector<64x96xf32> to vector<16x96xf32>
    %cst_53 = arith.constant dense<0.000000e+00> : vector<16x96xf32>
    %151 = tpu.matmul %149, %119, %cst_53 {dimension_numbers = #tpu.dot_dimension_numbers<[1], [0], [0], [1], [0, 0, 1, 1], [], []>} : vector<16x32xf32>, vector<32x96xf32>, vector<16x96xf32> -> vector<16x96xf32>
    %152 = vector.broadcast %121 : vector<1x96xf32> to vector<16x96xf32>
    %153 = arith.addf %151, %152 : vector<16x96xf32>
    %154 = vector.extract_strided_slice %150 {offsets = [0, 0], sizes = [16, 64], strides = [1, 1]} : vector<16x96xf32> to vector<16x64xf32>
    %155 = vector.extract_strided_slice %153 {offsets = [0, 0], sizes = [16, 64], strides = [1, 1]} : vector<16x96xf32> to vector<16x64xf32>
    %156 = arith.addf %154, %155 : vector<16x64xf32>
    %157 = arith.negf %156 : vector<16x64xf32>
    %158 = math.exp %157 : vector<16x64xf32>
    %cst_54 = arith.constant 1.000000e+00 : f32
    %159 = vector.broadcast %cst_54 : f32 to vector<16x64xf32>
    %160 = arith.addf %159, %158 : vector<16x64xf32>
    %161 = arith.divf %159, %160 : vector<16x64xf32>
    %162 = vector.extract_strided_slice %161 {offsets = [0, 0], sizes = [16, 32], strides = [1, 1]} : vector<16x64xf32> to vector<16x32xf32>
    %163 = vector.extract_strided_slice %161 {offsets = [0, 32], sizes = [16, 32], strides = [1, 1]} : vector<16x64xf32> to vector<16x32xf32>
    %164 = vector.extract_strided_slice %150 {offsets = [0, 64], sizes = [16, 32], strides = [1, 1]} : vector<16x96xf32> to vector<16x32xf32>
    %165 = vector.extract_strided_slice %153 {offsets = [0, 64], sizes = [16, 32], strides = [1, 1]} : vector<16x96xf32> to vector<16x32xf32>
    %166 = arith.mulf %162, %165 : vector<16x32xf32>
    %167 = arith.addf %164, %166 : vector<16x32xf32>
    %168 = math.tanh %167 : vector<16x32xf32>
    %cst_55 = arith.constant 1.000000e+00 : f32
    %169 = vector.broadcast %cst_55 : f32 to vector<16x32xf32>
    %170 = arith.subf %169, %163 : vector<16x32xf32>
    %171 = arith.mulf %170, %168 : vector<16x32xf32>
    %172 = arith.mulf %163, %149 : vector<16x32xf32>
    %173 = arith.addf %171, %172 : vector<16x32xf32>
    %174 = vector.extract_strided_slice %124 {offsets = [32, 0], sizes = [16, 96], strides = [1, 1]} : vector<64x96xf32> to vector<16x96xf32>
    %cst_56 = arith.constant dense<0.000000e+00> : vector<16x96xf32>
    %175 = tpu.matmul %173, %119, %cst_56 {dimension_numbers = #tpu.dot_dimension_numbers<[1], [0], [0], [1], [0, 0, 1, 1], [], []>} : vector<16x32xf32>, vector<32x96xf32>, vector<16x96xf32> -> vector<16x96xf32>
    %176 = vector.broadcast %121 : vector<1x96xf32> to vector<16x96xf32>
    %177 = arith.addf %175, %176 : vector<16x96xf32>
    %178 = vector.extract_strided_slice %174 {offsets = [0, 0], sizes = [16, 64], strides = [1, 1]} : vector<16x96xf32> to vector<16x64xf32>
    %179 = vector.extract_strided_slice %177 {offsets = [0, 0], sizes = [16, 64], strides = [1, 1]} : vector<16x96xf32> to vector<16x64xf32>
    %180 = arith.addf %178, %179 : vector<16x64xf32>
    %181 = arith.negf %180 : vector<16x64xf32>
    %182 = math.exp %181 : vector<16x64xf32>
    %cst_57 = arith.constant 1.000000e+00 : f32
    %183 = vector.broadcast %cst_57 : f32 to vector<16x64xf32>
    %184 = arith.addf %183, %182 : vector<16x64xf32>
    %185 = arith.divf %183, %184 : vector<16x64xf32>
    %186 = vector.extract_strided_slice %185 {offsets = [0, 0], sizes = [16, 32], strides = [1, 1]} : vector<16x64xf32> to vector<16x32xf32>
    %187 = vector.extract_strided_slice %185 {offsets = [0, 32], sizes = [16, 32], strides = [1, 1]} : vector<16x64xf32> to vector<16x32xf32>
    %188 = vector.extract_strided_slice %174 {offsets = [0, 64], sizes = [16, 32], strides = [1, 1]} : vector<16x96xf32> to vector<16x32xf32>
    %189 = vector.extract_strided_slice %177 {offsets = [0, 64], sizes = [16, 32], strides = [1, 1]} : vector<16x96xf32> to vector<16x32xf32>
    %190 = arith.mulf %186, %189 : vector<16x32xf32>
    %191 = arith.addf %188, %190 : vector<16x32xf32>
    %192 = math.tanh %191 : vector<16x32xf32>
    %cst_58 = arith.constant 1.000000e+00 : f32
    %193 = vector.broadcast %cst_58 : f32 to vector<16x32xf32>
    %194 = arith.subf %193, %187 : vector<16x32xf32>
    %195 = arith.mulf %194, %192 : vector<16x32xf32>
    %196 = arith.mulf %187, %173 : vector<16x32xf32>
    %197 = arith.addf %195, %196 : vector<16x32xf32>
    %198 = vector.extract_strided_slice %124 {offsets = [48, 0], sizes = [16, 96], strides = [1, 1]} : vector<64x96xf32> to vector<16x96xf32>
    %cst_59 = arith.constant dense<0.000000e+00> : vector<16x96xf32>
    %199 = tpu.matmul %197, %119, %cst_59 {dimension_numbers = #tpu.dot_dimension_numbers<[1], [0], [0], [1], [0, 0, 1, 1], [], []>} : vector<16x32xf32>, vector<32x96xf32>, vector<16x96xf32> -> vector<16x96xf32>
    %200 = vector.broadcast %121 : vector<1x96xf32> to vector<16x96xf32>
    %201 = arith.addf %199, %200 : vector<16x96xf32>
    %202 = vector.extract_strided_slice %198 {offsets = [0, 0], sizes = [16, 64], strides = [1, 1]} : vector<16x96xf32> to vector<16x64xf32>
    %203 = vector.extract_strided_slice %201 {offsets = [0, 0], sizes = [16, 64], strides = [1, 1]} : vector<16x96xf32> to vector<16x64xf32>
    %204 = arith.addf %202, %203 : vector<16x64xf32>
    %205 = arith.negf %204 : vector<16x64xf32>
    %206 = math.exp %205 : vector<16x64xf32>
    %cst_60 = arith.constant 1.000000e+00 : f32
    %207 = vector.broadcast %cst_60 : f32 to vector<16x64xf32>
    %208 = arith.addf %207, %206 : vector<16x64xf32>
    %209 = arith.divf %207, %208 : vector<16x64xf32>
    %210 = vector.extract_strided_slice %209 {offsets = [0, 0], sizes = [16, 32], strides = [1, 1]} : vector<16x64xf32> to vector<16x32xf32>
    %211 = vector.extract_strided_slice %209 {offsets = [0, 32], sizes = [16, 32], strides = [1, 1]} : vector<16x64xf32> to vector<16x32xf32>
    %212 = vector.extract_strided_slice %198 {offsets = [0, 64], sizes = [16, 32], strides = [1, 1]} : vector<16x96xf32> to vector<16x32xf32>
    %213 = vector.extract_strided_slice %201 {offsets = [0, 64], sizes = [16, 32], strides = [1, 1]} : vector<16x96xf32> to vector<16x32xf32>
    %214 = arith.mulf %210, %213 : vector<16x32xf32>
    %215 = arith.addf %212, %214 : vector<16x32xf32>
    %216 = math.tanh %215 : vector<16x32xf32>
    %cst_61 = arith.constant 1.000000e+00 : f32
    %217 = vector.broadcast %cst_61 : f32 to vector<16x32xf32>
    %218 = arith.subf %217, %211 : vector<16x32xf32>
    %219 = arith.mulf %218, %216 : vector<16x32xf32>
    %220 = arith.mulf %211, %197 : vector<16x32xf32>
    %221 = arith.addf %219, %220 : vector<16x32xf32>
    %222 = tpu.concatenate %149, %173, %197, %221 in 1 : vector<16x32xf32>, vector<16x32xf32>, vector<16x32xf32>, vector<16x32xf32> -> vector<16x128xf32>
    %c0_62 = arith.constant 0 : index
    %c0_63 = arith.constant 0 : index
    %c0_64 = arith.constant 0 : index
    %223 = vector.load %arg11[%c0_62, %c0_63, %c0_64] : memref<1x128x192xf32, #tpu.memory_space<vmem>>, vector<1x128x192xf32>
    %224 = vector.shape_cast %223 : vector<1x128x192xf32> to vector<128x192xf32>
    %c0_65 = arith.constant 0 : index
    %c0_66 = arith.constant 0 : index
    %c0_67 = arith.constant 0 : index
    %225 = vector.load %arg12[%c0_65, %c0_66, %c0_67] : memref<1x3x192xf32, #tpu.memory_space<vmem>>, vector<1x3x192xf32>
    %226 = vector.shape_cast %225 : vector<1x3x192xf32> to vector<3x192xf32>
    %c0_68 = arith.constant 0 : index
    %c0_69 = arith.constant 0 : index
    %c0_70 = arith.constant 0 : index
    %227 = vector.load %arg13[%c0_68, %c0_69, %c0_70] : memref<1x1x192xf32, #tpu.memory_space<vmem>>, vector<1x1x192xf32>
    %228 = vector.shape_cast %227 : vector<1x1x192xf32> to vector<1x192xf32>
    %c0_71 = arith.constant 0 : index
    %c0_72 = arith.constant 0 : index
    %c0_73 = arith.constant 0 : index
    %229 = vector.load %arg14[%c0_71, %c0_72, %c0_73] : memref<1x1x64xf32, #tpu.memory_space<vmem>>, vector<1x1x64xf32>
    %230 = vector.shape_cast %229 : vector<1x1x64xf32> to vector<1x64xf32>
    %231 = vector.extract_strided_slice %5 {offsets = [0, 0, 0, 0], sizes = [1, 3, 16, 16], strides = [1, 1, 1, 1]} : vector<2x3x16x16xf32> to vector<1x3x16x16xf32>
    %232 = vector.shape_cast %231 : vector<1x3x16x16xf32> to vector<3x16x16xf32>
    %cst_74 = arith.constant dense<0.000000e+00> : vector<16x192xf32>
    %233 = tpu.matmul %117, %224, %cst_74 {dimension_numbers = #tpu.dot_dimension_numbers<[1], [0], [0], [1], [0, 0, 1, 1], [], []>} : vector<16x128xf32>, vector<128x192xf32>, vector<16x192xf32> -> vector<16x192xf32>
    %234 = vector.broadcast %228 : vector<1x192xf32> to vector<16x192xf32>
    %235 = arith.mulf %233, %234 : vector<16x192xf32>
    %cst_75 = arith.constant dense<0.000000e+00> : vector<3x16xf32>
    %236 = tpu.matmul %226, %233, %cst_75 {dimension_numbers = #tpu.dot_dimension_numbers<[1], [1], [0], [0], [0, 0, 1, 0], [], []>} : vector<3x192xf32>, vector<16x192xf32>, vector<3x16xf32> -> vector<3x16xf32>
    %237 = vector.extract_strided_slice %233 {offsets = [0, 0], sizes = [16, 64], strides = [1, 1]} : vector<16x192xf32> to vector<16x64xf32>
    %238 = vector.extract_strided_slice %235 {offsets = [0, 0], sizes = [16, 64], strides = [1, 1]} : vector<16x192xf32> to vector<16x64xf32>
    %cst_76 = arith.constant dense<0.000000e+00> : vector<16xf32>
    %239 = vector.multi_reduction <add>, %238, %cst_76 [1] : vector<16x64xf32> to vector<16xf32>
    %240 = vector.shape_cast %239 : vector<16xf32> to vector<16x1xf32>
    %241 = vector.extract_strided_slice %236 {offsets = [0, 0], sizes = [1, 16], strides = [1, 1]} : vector<3x16xf32> to vector<1x16xf32>
    %242 = vector.broadcast %240 : vector<16x1xf32> to vector<16x16xf32>
    %243 = vector.broadcast %241 : vector<1x16xf32> to vector<16x16xf32>
    %244 = arith.addf %242, %243 : vector<16x16xf32>
    %245 = vector.extract_strided_slice %232 {offsets = [0, 0, 0], sizes = [1, 16, 16], strides = [1, 1, 1]} : vector<3x16x16xf32> to vector<1x16x16xf32>
    %246 = vector.shape_cast %245 : vector<1x16x16xf32> to vector<16x16xf32>
    %247 = arith.addf %244, %246 : vector<16x16xf32>
    %cst_77 = arith.constant 0.000000e+00 : f32
    %248 = vector.broadcast %cst_77 : f32 to vector<16x16xf32>
    %249 = arith.cmpf ogt, %247, %248 : vector<16x16xf32>
    %cst_78 = arith.constant 2.000000e-01 : f32
    %250 = vector.broadcast %cst_78 : f32 to vector<16x16xf32>
    %251 = arith.mulf %250, %247 : vector<16x16xf32>
    %252 = arith.select %249, %247, %251 : vector<16x16xi1>, vector<16x16xf32>
    %cst_79 = arith.constant 0.000000e+00 : f32
    %253 = vector.broadcast %cst_79 : f32 to vector<16x16xf32>
    %254 = arith.cmpf ogt, %3, %253 : vector<16x16xf32>
    %cst_80 = arith.constant -1.000000e+30 : f32
    %255 = vector.broadcast %cst_80 : f32 to vector<16x16xf32>
    %256 = arith.select %254, %252, %255 : vector<16x16xi1>, vector<16x16xf32>
    %cst_81 = arith.constant dense<0xFF800000> : vector<16xf32>
    %257 = vector.multi_reduction <maximumf>, %256, %cst_81 [1] : vector<16x16xf32> to vector<16xf32>
    %258 = vector.shape_cast %257 : vector<16xf32> to vector<16x1xf32>
    %259 = vector.broadcast %258 : vector<16x1xf32> to vector<16x16xf32>
    %260 = arith.subf %256, %259 : vector<16x16xf32>
    %261 = math.exp %260 : vector<16x16xf32>
    %262 = arith.mulf %261, %3 : vector<16x16xf32>
    %cst_82 = arith.constant dense<0.000000e+00> : vector<16xf32>
    %263 = vector.multi_reduction <add>, %262, %cst_82 [1] : vector<16x16xf32> to vector<16xf32>
    %264 = vector.shape_cast %263 : vector<16xf32> to vector<16x1xf32>
    %cst_83 = arith.constant 1.000000e-16 : f32
    %265 = vector.broadcast %cst_83 : f32 to vector<16x1xf32>
    %266 = arith.maximumf %264, %265 : vector<16x1xf32>
    %267 = tpu.reciprocal %266 {approx = true} : vector<16x1xf32> -> vector<16x1xf32>
    %268 = vector.broadcast %267 : vector<16x1xf32> to vector<16x16xf32>
    %269 = arith.mulf %262, %268 : vector<16x16xf32>
    %270 = vector.extract_strided_slice %233 {offsets = [0, 64], sizes = [16, 64], strides = [1, 1]} : vector<16x192xf32> to vector<16x64xf32>
    %271 = vector.extract_strided_slice %235 {offsets = [0, 64], sizes = [16, 64], strides = [1, 1]} : vector<16x192xf32> to vector<16x64xf32>
    %cst_84 = arith.constant dense<0.000000e+00> : vector<16xf32>
    %272 = vector.multi_reduction <add>, %271, %cst_84 [1] : vector<16x64xf32> to vector<16xf32>
    %273 = vector.shape_cast %272 : vector<16xf32> to vector<16x1xf32>
    %274 = vector.extract_strided_slice %236 {offsets = [1, 0], sizes = [1, 16], strides = [1, 1]} : vector<3x16xf32> to vector<1x16xf32>
    %275 = vector.broadcast %273 : vector<16x1xf32> to vector<16x16xf32>
    %276 = vector.broadcast %274 : vector<1x16xf32> to vector<16x16xf32>
    %277 = arith.addf %275, %276 : vector<16x16xf32>
    %278 = vector.extract_strided_slice %232 {offsets = [1, 0, 0], sizes = [1, 16, 16], strides = [1, 1, 1]} : vector<3x16x16xf32> to vector<1x16x16xf32>
    %279 = vector.shape_cast %278 : vector<1x16x16xf32> to vector<16x16xf32>
    %280 = arith.addf %277, %279 : vector<16x16xf32>
    %cst_85 = arith.constant 0.000000e+00 : f32
    %281 = vector.broadcast %cst_85 : f32 to vector<16x16xf32>
    %282 = arith.cmpf ogt, %280, %281 : vector<16x16xf32>
    %cst_86 = arith.constant 2.000000e-01 : f32
    %283 = vector.broadcast %cst_86 : f32 to vector<16x16xf32>
    %284 = arith.mulf %283, %280 : vector<16x16xf32>
    %285 = arith.select %282, %280, %284 : vector<16x16xi1>, vector<16x16xf32>
    %cst_87 = arith.constant 0.000000e+00 : f32
    %286 = vector.broadcast %cst_87 : f32 to vector<16x16xf32>
    %287 = arith.cmpf ogt, %3, %286 : vector<16x16xf32>
    %cst_88 = arith.constant -1.000000e+30 : f32
    %288 = vector.broadcast %cst_88 : f32 to vector<16x16xf32>
    %289 = arith.select %287, %285, %288 : vector<16x16xi1>, vector<16x16xf32>
    %cst_89 = arith.constant dense<0xFF800000> : vector<16xf32>
    %290 = vector.multi_reduction <maximumf>, %289, %cst_89 [1] : vector<16x16xf32> to vector<16xf32>
    %291 = vector.shape_cast %290 : vector<16xf32> to vector<16x1xf32>
    %292 = vector.broadcast %291 : vector<16x1xf32> to vector<16x16xf32>
    %293 = arith.subf %289, %292 : vector<16x16xf32>
    %294 = math.exp %293 : vector<16x16xf32>
    %295 = arith.mulf %294, %3 : vector<16x16xf32>
    %cst_90 = arith.constant dense<0.000000e+00> : vector<16xf32>
    %296 = vector.multi_reduction <add>, %295, %cst_90 [1] : vector<16x16xf32> to vector<16xf32>
    %297 = vector.shape_cast %296 : vector<16xf32> to vector<16x1xf32>
    %cst_91 = arith.constant 1.000000e-16 : f32
    %298 = vector.broadcast %cst_91 : f32 to vector<16x1xf32>
    %299 = arith.maximumf %297, %298 : vector<16x1xf32>
    %300 = tpu.reciprocal %299 {approx = true} : vector<16x1xf32> -> vector<16x1xf32>
    %301 = vector.broadcast %300 : vector<16x1xf32> to vector<16x16xf32>
    %302 = arith.mulf %295, %301 : vector<16x16xf32>
    %303 = vector.extract_strided_slice %233 {offsets = [0, 128], sizes = [16, 64], strides = [1, 1]} : vector<16x192xf32> to vector<16x64xf32>
    %304 = vector.extract_strided_slice %235 {offsets = [0, 128], sizes = [16, 64], strides = [1, 1]} : vector<16x192xf32> to vector<16x64xf32>
    %cst_92 = arith.constant dense<0.000000e+00> : vector<16xf32>
    %305 = vector.multi_reduction <add>, %304, %cst_92 [1] : vector<16x64xf32> to vector<16xf32>
    %306 = vector.shape_cast %305 : vector<16xf32> to vector<16x1xf32>
    %307 = vector.extract_strided_slice %236 {offsets = [2, 0], sizes = [1, 16], strides = [1, 1]} : vector<3x16xf32> to vector<1x16xf32>
    %308 = vector.broadcast %306 : vector<16x1xf32> to vector<16x16xf32>
    %309 = vector.broadcast %307 : vector<1x16xf32> to vector<16x16xf32>
    %310 = arith.addf %308, %309 : vector<16x16xf32>
    %311 = vector.extract_strided_slice %232 {offsets = [2, 0, 0], sizes = [1, 16, 16], strides = [1, 1, 1]} : vector<3x16x16xf32> to vector<1x16x16xf32>
    %312 = vector.shape_cast %311 : vector<1x16x16xf32> to vector<16x16xf32>
    %313 = arith.addf %310, %312 : vector<16x16xf32>
    %cst_93 = arith.constant 0.000000e+00 : f32
    %314 = vector.broadcast %cst_93 : f32 to vector<16x16xf32>
    %315 = arith.cmpf ogt, %313, %314 : vector<16x16xf32>
    %cst_94 = arith.constant 2.000000e-01 : f32
    %316 = vector.broadcast %cst_94 : f32 to vector<16x16xf32>
    %317 = arith.mulf %316, %313 : vector<16x16xf32>
    %318 = arith.select %315, %313, %317 : vector<16x16xi1>, vector<16x16xf32>
    %cst_95 = arith.constant 0.000000e+00 : f32
    %319 = vector.broadcast %cst_95 : f32 to vector<16x16xf32>
    %320 = arith.cmpf ogt, %3, %319 : vector<16x16xf32>
    %cst_96 = arith.constant -1.000000e+30 : f32
    %321 = vector.broadcast %cst_96 : f32 to vector<16x16xf32>
    %322 = arith.select %320, %318, %321 : vector<16x16xi1>, vector<16x16xf32>
    %cst_97 = arith.constant dense<0xFF800000> : vector<16xf32>
    %323 = vector.multi_reduction <maximumf>, %322, %cst_97 [1] : vector<16x16xf32> to vector<16xf32>
    %324 = vector.shape_cast %323 : vector<16xf32> to vector<16x1xf32>
    %325 = vector.broadcast %324 : vector<16x1xf32> to vector<16x16xf32>
    %326 = arith.subf %322, %325 : vector<16x16xf32>
    %327 = math.exp %326 : vector<16x16xf32>
    %328 = arith.mulf %327, %3 : vector<16x16xf32>
    %cst_98 = arith.constant dense<0.000000e+00> : vector<16xf32>
    %329 = vector.multi_reduction <add>, %328, %cst_98 [1] : vector<16x16xf32> to vector<16xf32>
    %330 = vector.shape_cast %329 : vector<16xf32> to vector<16x1xf32>
    %cst_99 = arith.constant 1.000000e-16 : f32
    %331 = vector.broadcast %cst_99 : f32 to vector<16x1xf32>
    %332 = arith.maximumf %330, %331 : vector<16x1xf32>
    %333 = tpu.reciprocal %332 {approx = true} : vector<16x1xf32> -> vector<16x1xf32>
    %334 = vector.broadcast %333 : vector<16x1xf32> to vector<16x16xf32>
    %335 = arith.mulf %328, %334 : vector<16x16xf32>
    %336 = tpu.concatenate %269, %302, %335 in 1 : vector<16x16xf32>, vector<16x16xf32>, vector<16x16xf32> -> vector<16x48xf32>
    %337 = tpu.concatenate %237, %270, %303 in 0 : vector<16x64xf32>, vector<16x64xf32>, vector<16x64xf32> -> vector<48x64xf32>
    %cst_100 = arith.constant dense<0.000000e+00> : vector<16x64xf32>
    %338 = tpu.matmul %336, %337, %cst_100 {dimension_numbers = #tpu.dot_dimension_numbers<[1], [0], [0], [1], [0, 0, 1, 1], [], []>} : vector<16x48xf32>, vector<48x64xf32>, vector<16x64xf32> -> vector<16x64xf32>
    %cst_101 = arith.constant 0.333333343 : f32
    %339 = vector.broadcast %cst_101 : f32 to vector<16x64xf32>
    %340 = arith.mulf %338, %339 : vector<16x64xf32>
    %341 = vector.broadcast %230 : vector<1x64xf32> to vector<16x64xf32>
    %342 = arith.addf %340, %341 : vector<16x64xf32>
    %c0_102 = arith.constant 0 : index
    %c0_103 = arith.constant 0 : index
    %343 = vector.load %arg15[%c0_102, %c0_103] : memref<128x192xf32, #tpu.memory_space<vmem>>, vector<128x192xf32>
    %c0_104 = arith.constant 0 : index
    %c0_105 = arith.constant 0 : index
    %344 = vector.load %arg16[%c0_104, %c0_105] : memref<3x192xf32, #tpu.memory_space<vmem>>, vector<3x192xf32>
    %c0_106 = arith.constant 0 : index
    %c0_107 = arith.constant 0 : index
    %345 = vector.load %arg17[%c0_106, %c0_107] : memref<1x192xf32, #tpu.memory_space<vmem>>, vector<1x192xf32>
    %c0_108 = arith.constant 0 : index
    %c0_109 = arith.constant 0 : index
    %346 = vector.load %arg18[%c0_108, %c0_109] : memref<1x64xf32, #tpu.memory_space<vmem>>, vector<1x64xf32>
    %347 = vector.extract_strided_slice %5 {offsets = [1, 0, 0, 0], sizes = [1, 3, 16, 16], strides = [1, 1, 1, 1]} : vector<2x3x16x16xf32> to vector<1x3x16x16xf32>
    %348 = vector.shape_cast %347 : vector<1x3x16x16xf32> to vector<3x16x16xf32>
    %cst_110 = arith.constant dense<0.000000e+00> : vector<16x192xf32>
    %349 = tpu.matmul %222, %343, %cst_110 {dimension_numbers = #tpu.dot_dimension_numbers<[1], [0], [0], [1], [0, 0, 1, 1], [], []>} : vector<16x128xf32>, vector<128x192xf32>, vector<16x192xf32> -> vector<16x192xf32>
    %350 = vector.broadcast %345 : vector<1x192xf32> to vector<16x192xf32>
    %351 = arith.mulf %349, %350 : vector<16x192xf32>
    %cst_111 = arith.constant dense<0.000000e+00> : vector<3x16xf32>
    %352 = tpu.matmul %344, %349, %cst_111 {dimension_numbers = #tpu.dot_dimension_numbers<[1], [1], [0], [0], [0, 0, 1, 0], [], []>} : vector<3x192xf32>, vector<16x192xf32>, vector<3x16xf32> -> vector<3x16xf32>
    %353 = vector.extract_strided_slice %349 {offsets = [0, 0], sizes = [16, 64], strides = [1, 1]} : vector<16x192xf32> to vector<16x64xf32>
    %354 = vector.extract_strided_slice %351 {offsets = [0, 0], sizes = [16, 64], strides = [1, 1]} : vector<16x192xf32> to vector<16x64xf32>
    %cst_112 = arith.constant dense<0.000000e+00> : vector<16xf32>
    %355 = vector.multi_reduction <add>, %354, %cst_112 [1] : vector<16x64xf32> to vector<16xf32>
    %356 = vector.shape_cast %355 : vector<16xf32> to vector<16x1xf32>
    %357 = vector.extract_strided_slice %352 {offsets = [0, 0], sizes = [1, 16], strides = [1, 1]} : vector<3x16xf32> to vector<1x16xf32>
    %358 = vector.broadcast %356 : vector<16x1xf32> to vector<16x16xf32>
    %359 = vector.broadcast %357 : vector<1x16xf32> to vector<16x16xf32>
    %360 = arith.addf %358, %359 : vector<16x16xf32>
    %361 = vector.extract_strided_slice %348 {offsets = [0, 0, 0], sizes = [1, 16, 16], strides = [1, 1, 1]} : vector<3x16x16xf32> to vector<1x16x16xf32>
    %362 = vector.shape_cast %361 : vector<1x16x16xf32> to vector<16x16xf32>
    %363 = arith.addf %360, %362 : vector<16x16xf32>
    %cst_113 = arith.constant 0.000000e+00 : f32
    %364 = vector.broadcast %cst_113 : f32 to vector<16x16xf32>
    %365 = arith.cmpf ogt, %363, %364 : vector<16x16xf32>
    %cst_114 = arith.constant 2.000000e-01 : f32
    %366 = vector.broadcast %cst_114 : f32 to vector<16x16xf32>
    %367 = arith.mulf %366, %363 : vector<16x16xf32>
    %368 = arith.select %365, %363, %367 : vector<16x16xi1>, vector<16x16xf32>
    %cst_115 = arith.constant 0.000000e+00 : f32
    %369 = vector.broadcast %cst_115 : f32 to vector<16x16xf32>
    %370 = arith.cmpf ogt, %3, %369 : vector<16x16xf32>
    %cst_116 = arith.constant -1.000000e+30 : f32
    %371 = vector.broadcast %cst_116 : f32 to vector<16x16xf32>
    %372 = arith.select %370, %368, %371 : vector<16x16xi1>, vector<16x16xf32>
    %cst_117 = arith.constant dense<0xFF800000> : vector<16xf32>
    %373 = vector.multi_reduction <maximumf>, %372, %cst_117 [1] : vector<16x16xf32> to vector<16xf32>
    %374 = vector.shape_cast %373 : vector<16xf32> to vector<16x1xf32>
    %375 = vector.broadcast %374 : vector<16x1xf32> to vector<16x16xf32>
    %376 = arith.subf %372, %375 : vector<16x16xf32>
    %377 = math.exp %376 : vector<16x16xf32>
    %378 = arith.mulf %377, %3 : vector<16x16xf32>
    %cst_118 = arith.constant dense<0.000000e+00> : vector<16xf32>
    %379 = vector.multi_reduction <add>, %378, %cst_118 [1] : vector<16x16xf32> to vector<16xf32>
    %380 = vector.shape_cast %379 : vector<16xf32> to vector<16x1xf32>
    %cst_119 = arith.constant 1.000000e-16 : f32
    %381 = vector.broadcast %cst_119 : f32 to vector<16x1xf32>
    %382 = arith.maximumf %380, %381 : vector<16x1xf32>
    %383 = tpu.reciprocal %382 {approx = true} : vector<16x1xf32> -> vector<16x1xf32>
    %384 = vector.broadcast %383 : vector<16x1xf32> to vector<16x16xf32>
    %385 = arith.mulf %378, %384 : vector<16x16xf32>
    %386 = vector.extract_strided_slice %349 {offsets = [0, 64], sizes = [16, 64], strides = [1, 1]} : vector<16x192xf32> to vector<16x64xf32>
    %387 = vector.extract_strided_slice %351 {offsets = [0, 64], sizes = [16, 64], strides = [1, 1]} : vector<16x192xf32> to vector<16x64xf32>
    %cst_120 = arith.constant dense<0.000000e+00> : vector<16xf32>
    %388 = vector.multi_reduction <add>, %387, %cst_120 [1] : vector<16x64xf32> to vector<16xf32>
    %389 = vector.shape_cast %388 : vector<16xf32> to vector<16x1xf32>
    %390 = vector.extract_strided_slice %352 {offsets = [1, 0], sizes = [1, 16], strides = [1, 1]} : vector<3x16xf32> to vector<1x16xf32>
    %391 = vector.broadcast %389 : vector<16x1xf32> to vector<16x16xf32>
    %392 = vector.broadcast %390 : vector<1x16xf32> to vector<16x16xf32>
    %393 = arith.addf %391, %392 : vector<16x16xf32>
    %394 = vector.extract_strided_slice %348 {offsets = [1, 0, 0], sizes = [1, 16, 16], strides = [1, 1, 1]} : vector<3x16x16xf32> to vector<1x16x16xf32>
    %395 = vector.shape_cast %394 : vector<1x16x16xf32> to vector<16x16xf32>
    %396 = arith.addf %393, %395 : vector<16x16xf32>
    %cst_121 = arith.constant 0.000000e+00 : f32
    %397 = vector.broadcast %cst_121 : f32 to vector<16x16xf32>
    %398 = arith.cmpf ogt, %396, %397 : vector<16x16xf32>
    %cst_122 = arith.constant 2.000000e-01 : f32
    %399 = vector.broadcast %cst_122 : f32 to vector<16x16xf32>
    %400 = arith.mulf %399, %396 : vector<16x16xf32>
    %401 = arith.select %398, %396, %400 : vector<16x16xi1>, vector<16x16xf32>
    %cst_123 = arith.constant 0.000000e+00 : f32
    %402 = vector.broadcast %cst_123 : f32 to vector<16x16xf32>
    %403 = arith.cmpf ogt, %3, %402 : vector<16x16xf32>
    %cst_124 = arith.constant -1.000000e+30 : f32
    %404 = vector.broadcast %cst_124 : f32 to vector<16x16xf32>
    %405 = arith.select %403, %401, %404 : vector<16x16xi1>, vector<16x16xf32>
    %cst_125 = arith.constant dense<0xFF800000> : vector<16xf32>
    %406 = vector.multi_reduction <maximumf>, %405, %cst_125 [1] : vector<16x16xf32> to vector<16xf32>
    %407 = vector.shape_cast %406 : vector<16xf32> to vector<16x1xf32>
    %408 = vector.broadcast %407 : vector<16x1xf32> to vector<16x16xf32>
    %409 = arith.subf %405, %408 : vector<16x16xf32>
    %410 = math.exp %409 : vector<16x16xf32>
    %411 = arith.mulf %410, %3 : vector<16x16xf32>
    %cst_126 = arith.constant dense<0.000000e+00> : vector<16xf32>
    %412 = vector.multi_reduction <add>, %411, %cst_126 [1] : vector<16x16xf32> to vector<16xf32>
    %413 = vector.shape_cast %412 : vector<16xf32> to vector<16x1xf32>
    %cst_127 = arith.constant 1.000000e-16 : f32
    %414 = vector.broadcast %cst_127 : f32 to vector<16x1xf32>
    %415 = arith.maximumf %413, %414 : vector<16x1xf32>
    %416 = tpu.reciprocal %415 {approx = true} : vector<16x1xf32> -> vector<16x1xf32>
    %417 = vector.broadcast %416 : vector<16x1xf32> to vector<16x16xf32>
    %418 = arith.mulf %411, %417 : vector<16x16xf32>
    %419 = vector.extract_strided_slice %349 {offsets = [0, 128], sizes = [16, 64], strides = [1, 1]} : vector<16x192xf32> to vector<16x64xf32>
    %420 = vector.extract_strided_slice %351 {offsets = [0, 128], sizes = [16, 64], strides = [1, 1]} : vector<16x192xf32> to vector<16x64xf32>
    %cst_128 = arith.constant dense<0.000000e+00> : vector<16xf32>
    %421 = vector.multi_reduction <add>, %420, %cst_128 [1] : vector<16x64xf32> to vector<16xf32>
    %422 = vector.shape_cast %421 : vector<16xf32> to vector<16x1xf32>
    %423 = vector.extract_strided_slice %352 {offsets = [2, 0], sizes = [1, 16], strides = [1, 1]} : vector<3x16xf32> to vector<1x16xf32>
    %424 = vector.broadcast %422 : vector<16x1xf32> to vector<16x16xf32>
    %425 = vector.broadcast %423 : vector<1x16xf32> to vector<16x16xf32>
    %426 = arith.addf %424, %425 : vector<16x16xf32>
    %427 = vector.extract_strided_slice %348 {offsets = [2, 0, 0], sizes = [1, 16, 16], strides = [1, 1, 1]} : vector<3x16x16xf32> to vector<1x16x16xf32>
    %428 = vector.shape_cast %427 : vector<1x16x16xf32> to vector<16x16xf32>
    %429 = arith.addf %426, %428 : vector<16x16xf32>
    %cst_129 = arith.constant 0.000000e+00 : f32
    %430 = vector.broadcast %cst_129 : f32 to vector<16x16xf32>
    %431 = arith.cmpf ogt, %429, %430 : vector<16x16xf32>
    %cst_130 = arith.constant 2.000000e-01 : f32
    %432 = vector.broadcast %cst_130 : f32 to vector<16x16xf32>
    %433 = arith.mulf %432, %429 : vector<16x16xf32>
    %434 = arith.select %431, %429, %433 : vector<16x16xi1>, vector<16x16xf32>
    %cst_131 = arith.constant 0.000000e+00 : f32
    %435 = vector.broadcast %cst_131 : f32 to vector<16x16xf32>
    %436 = arith.cmpf ogt, %3, %435 : vector<16x16xf32>
    %cst_132 = arith.constant -1.000000e+30 : f32
    %437 = vector.broadcast %cst_132 : f32 to vector<16x16xf32>
    %438 = arith.select %436, %434, %437 : vector<16x16xi1>, vector<16x16xf32>
    %cst_133 = arith.constant dense<0xFF800000> : vector<16xf32>
    %439 = vector.multi_reduction <maximumf>, %438, %cst_133 [1] : vector<16x16xf32> to vector<16xf32>
    %440 = vector.shape_cast %439 : vector<16xf32> to vector<16x1xf32>
    %441 = vector.broadcast %440 : vector<16x1xf32> to vector<16x16xf32>
    %442 = arith.subf %438, %441 : vector<16x16xf32>
    %443 = math.exp %442 : vector<16x16xf32>
    %444 = arith.mulf %443, %3 : vector<16x16xf32>
    %cst_134 = arith.constant dense<0.000000e+00> : vector<16xf32>
    %445 = vector.multi_reduction <add>, %444, %cst_134 [1] : vector<16x16xf32> to vector<16xf32>
    %446 = vector.shape_cast %445 : vector<16xf32> to vector<16x1xf32>
    %cst_135 = arith.constant 1.000000e-16 : f32
    %447 = vector.broadcast %cst_135 : f32 to vector<16x1xf32>
    %448 = arith.maximumf %446, %447 : vector<16x1xf32>
    %449 = tpu.reciprocal %448 {approx = true} : vector<16x1xf32> -> vector<16x1xf32>
    %450 = vector.broadcast %449 : vector<16x1xf32> to vector<16x16xf32>
    %451 = arith.mulf %444, %450 : vector<16x16xf32>
    %452 = tpu.concatenate %385, %418, %451 in 1 : vector<16x16xf32>, vector<16x16xf32>, vector<16x16xf32> -> vector<16x48xf32>
    %453 = tpu.concatenate %353, %386, %419 in 0 : vector<16x64xf32>, vector<16x64xf32>, vector<16x64xf32> -> vector<48x64xf32>
    %cst_136 = arith.constant dense<0.000000e+00> : vector<16x64xf32>
    %454 = tpu.matmul %452, %453, %cst_136 {dimension_numbers = #tpu.dot_dimension_numbers<[1], [0], [0], [1], [0, 0, 1, 1], [], []>} : vector<16x48xf32>, vector<48x64xf32>, vector<16x64xf32> -> vector<16x64xf32>
    %cst_137 = arith.constant 0.333333343 : f32
    %455 = vector.broadcast %cst_137 : f32 to vector<16x64xf32>
    %456 = arith.mulf %454, %455 : vector<16x64xf32>
    %457 = vector.broadcast %346 : vector<1x64xf32> to vector<16x64xf32>
    %458 = arith.addf %456, %457 : vector<16x64xf32>
    %459 = vector.extract_strided_slice %7 {offsets = [0, 0], sizes = [16, 1], strides = [1, 1]} : vector<16x2xf32> to vector<16x1xf32>
    %cst_138 = arith.constant 0.000000e+00 : f32
    %460 = vector.broadcast %cst_138 : f32 to vector<16x1xf32>
    %461 = arith.cmpf ogt, %459, %460 : vector<16x1xf32>
    %cst_139 = arith.constant -1.000000e+30 : f32
    %462 = vector.shape_cast %461 : vector<16x1xi1> to vector<16x1xi1>
    %463 = vector.broadcast %462 : vector<16x1xi1> to vector<16x64xi1>
    %464 = vector.broadcast %cst_139 : f32 to vector<16x64xf32>
    %465 = arith.select %463, %342, %464 : vector<16x64xi1>, vector<16x64xf32>
    %cst_140 = arith.constant dense<0xFF800000> : vector<64xf32>
    %466 = vector.multi_reduction <maximumf>, %465, %cst_140 [0] : vector<16x64xf32> to vector<64xf32>
    %467 = vector.shape_cast %466 : vector<64xf32> to vector<1x64xf32>
    %468 = vector.extract_strided_slice %7 {offsets = [0, 1], sizes = [16, 1], strides = [1, 1]} : vector<16x2xf32> to vector<16x1xf32>
    %cst_141 = arith.constant 0.000000e+00 : f32
    %469 = vector.broadcast %cst_141 : f32 to vector<16x1xf32>
    %470 = arith.cmpf ogt, %468, %469 : vector<16x1xf32>
    %cst_142 = arith.constant -1.000000e+30 : f32
    %471 = vector.shape_cast %470 : vector<16x1xi1> to vector<16x1xi1>
    %472 = vector.broadcast %471 : vector<16x1xi1> to vector<16x64xi1>
    %473 = vector.broadcast %cst_142 : f32 to vector<16x64xf32>
    %474 = arith.select %472, %342, %473 : vector<16x64xi1>, vector<16x64xf32>
    %cst_143 = arith.constant dense<0xFF800000> : vector<64xf32>
    %475 = vector.multi_reduction <maximumf>, %474, %cst_143 [0] : vector<16x64xf32> to vector<64xf32>
    %476 = vector.shape_cast %475 : vector<64xf32> to vector<1x64xf32>
    %477 = tpu.concatenate %467, %476 in 0 : vector<1x64xf32>, vector<1x64xf32> -> vector<2x64xf32>
    %478 = vector.extract_strided_slice %7 {offsets = [0, 0], sizes = [16, 1], strides = [1, 1]} : vector<16x2xf32> to vector<16x1xf32>
    %cst_144 = arith.constant 0.000000e+00 : f32
    %479 = vector.broadcast %cst_144 : f32 to vector<16x1xf32>
    %480 = arith.cmpf ogt, %478, %479 : vector<16x1xf32>
    %cst_145 = arith.constant -1.000000e+30 : f32
    %481 = vector.shape_cast %480 : vector<16x1xi1> to vector<16x1xi1>
    %482 = vector.broadcast %481 : vector<16x1xi1> to vector<16x64xi1>
    %483 = vector.broadcast %cst_145 : f32 to vector<16x64xf32>
    %484 = arith.select %482, %458, %483 : vector<16x64xi1>, vector<16x64xf32>
    %cst_146 = arith.constant dense<0xFF800000> : vector<64xf32>
    %485 = vector.multi_reduction <maximumf>, %484, %cst_146 [0] : vector<16x64xf32> to vector<64xf32>
    %486 = vector.shape_cast %485 : vector<64xf32> to vector<1x64xf32>
    %487 = vector.extract_strided_slice %7 {offsets = [0, 1], sizes = [16, 1], strides = [1, 1]} : vector<16x2xf32> to vector<16x1xf32>
    %cst_147 = arith.constant 0.000000e+00 : f32
    %488 = vector.broadcast %cst_147 : f32 to vector<16x1xf32>
    %489 = arith.cmpf ogt, %487, %488 : vector<16x1xf32>
    %cst_148 = arith.constant -1.000000e+30 : f32
    %490 = vector.shape_cast %489 : vector<16x1xi1> to vector<16x1xi1>
    %491 = vector.broadcast %490 : vector<16x1xi1> to vector<16x64xi1>
    %492 = vector.broadcast %cst_148 : f32 to vector<16x64xf32>
    %493 = arith.select %491, %458, %492 : vector<16x64xi1>, vector<16x64xf32>
    %cst_149 = arith.constant dense<0xFF800000> : vector<64xf32>
    %494 = vector.multi_reduction <maximumf>, %493, %cst_149 [0] : vector<16x64xf32> to vector<64xf32>
    %495 = vector.shape_cast %494 : vector<64xf32> to vector<1x64xf32>
    %496 = tpu.concatenate %486, %495 in 0 : vector<1x64xf32>, vector<1x64xf32> -> vector<2x64xf32>
    %497 = tpu.concatenate %477, %496 in 1 : vector<2x64xf32>, vector<2x64xf32> -> vector<2x128xf32>
    %498 = arith.negf %497 : vector<2x128xf32>
    %499 = math.exp %498 : vector<2x128xf32>
    %cst_150 = arith.constant 1.000000e+00 : f32
    %500 = vector.broadcast %cst_150 : f32 to vector<2x128xf32>
    %501 = arith.addf %500, %499 : vector<2x128xf32>
    %502 = arith.divf %500, %501 : vector<2x128xf32>
    %c0_151 = arith.constant 0 : index
    %c0_152 = arith.constant 0 : index
    %c0_153 = arith.constant 0 : index
    %503 = vector.load %arg27[%c0_151, %c0_152, %c0_153] : memref<1x2x128xf32, #tpu.memory_space<vmem>>, vector<1x2x128xf32>
    %504 = vector.shape_cast %503 : vector<1x2x128xf32> to vector<2x128xf32>
    %505 = vector.shape_cast %502 : vector<2x128xf32> to vector<1x2x128xf32>
    tpu.vector_store %arg27[%c0_151, %c0_152, %c0_153], %505 {strides = array<i32>} : memref<1x2x128xf32, #tpu.memory_space<vmem>>, vector<1x2x128xf32>,
    %506 = vector.broadcast %8 : f32 to vector<16x64xf32>
    %507 = arith.mulf %506, %458 : vector<16x64xf32>
    %508 = arith.addf %342, %507 : vector<16x64xf32>
    %c0_154 = arith.constant 0 : index
    %c0_155 = arith.constant 0 : index
    %509 = vector.load %arg22[%c0_154, %c0_155] : memref<64x4xf32, #tpu.memory_space<vmem>>, vector<64x4xf32>
    %cst_156 = arith.constant dense<0.000000e+00> : vector<16x4xf32>
    %510 = tpu.matmul %508, %509, %cst_156 {dimension_numbers = #tpu.dot_dimension_numbers<[1], [0], [0], [1], [0, 0, 1, 1], [], []>} : vector<16x64xf32>, vector<64x4xf32>, vector<16x4xf32> -> vector<16x4xf32>
    %c0_157 = arith.constant 0 : index
    %c0_158 = arith.constant 0 : index
    %511 = vector.load %arg23[%c0_157, %c0_158] : memref<1x4xf32, #tpu.memory_space<vmem>>, vector<1x4xf32>
    %512 = vector.broadcast %511 : vector<1x4xf32> to vector<16x4xf32>
    %513 = arith.addf %510, %512 : vector<16x4xf32>
    %cst_159 = arith.constant 0.000000e+00 : f32
    %514 = vector.broadcast %cst_159 : f32 to vector<16x4xf32>
    %515 = arith.maximumf %513, %514 : vector<16x4xf32>
    %c0_160 = arith.constant 0 : index
    %c0_161 = arith.constant 0 : index
    %516 = vector.load %arg24[%c0_160, %c0_161] : memref<4x3xf32, #tpu.memory_space<vmem>>, vector<4x3xf32>
    %cst_162 = arith.constant dense<0.000000e+00> : vector<16x3xf32>
    %517 = tpu.matmul %515, %516, %cst_162 {dimension_numbers = #tpu.dot_dimension_numbers<[1], [0], [0], [1], [0, 0, 1, 1], [], []>} : vector<16x4xf32>, vector<4x3xf32>, vector<16x3xf32> -> vector<16x3xf32>
    %c0_163 = arith.constant 0 : index
    %c0_164 = arith.constant 0 : index
    %518 = vector.load %arg25[%c0_163, %c0_164] : memref<1x3xf32, #tpu.memory_space<vmem>>, vector<1x3xf32>
    %519 = vector.broadcast %518 : vector<1x3xf32> to vector<16x3xf32>
    %520 = arith.addf %517, %519 : vector<16x3xf32>
    %cst_165 = arith.constant 0.000000e+00 : f32
    %521 = vector.broadcast %cst_165 : f32 to vector<16x3xf32>
    %522 = arith.maximumf %520, %521 : vector<16x3xf32>
    %c0_166 = arith.constant 0 : index
    %c0_167 = arith.constant 0 : index
    %c0_168 = arith.constant 0 : index
    %523 = vector.load %arg26[%c0_166, %c0_167, %c0_168] : memref<1x16x3xf32, #tpu.memory_space<vmem>>, vector<1x16x3xf32>
    %524 = vector.shape_cast %523 : vector<1x16x3xf32> to vector<16x3xf32>
    %525 = vector.shape_cast %522 : vector<16x3xf32> to vector<1x16x3xf32>
    tpu.vector_store %arg26[%c0_166, %c0_167, %c0_168], %525 {strides = array<i32>} : memref<1x16x3xf32, #tpu.memory_space<vmem>>, vector<1x16x3xf32>,
    return
  }
  func.func @transform_0(%arg0: i32) -> (i32, i32) {
    %c0_i32 = arith.constant 0 : i32
    %c0_i32_0 = arith.constant 0 : i32
    %c0_i32_1 = arith.constant 0 : i32
    return %c0_i32, %c0_i32_0 : i32, i32
  }
  func.func @transform_1(%arg0: i32) -> (i32, i32, i32) {
    %c0_i32 = arith.constant 0 : i32
    %c0_i32_0 = arith.constant 0 : i32
    %c0_i32_1 = arith.constant 0 : i32
    return %arg0, %c0_i32, %c0_i32_0 : i32, i32, i32
  }
  func.func @transform_2(%arg0: i32) -> (i32, i32, i32) {
    %c0_i32 = arith.constant 0 : i32
    %c0_i32_0 = arith.constant 0 : i32
    %c0_i32_1 = arith.constant 0 : i32
    return %arg0, %c0_i32, %c0_i32_0 : i32, i32, i32
  }
  func.func @transform_3(%arg0: i32) -> (i32, i32, i32) {
    %c0_i32 = arith.constant 0 : i32
    %c0_i32_0 = arith.constant 0 : i32
    %c0_i32_1 = arith.constant 0 : i32
    return %arg0, %c0_i32, %c0_i32_0 : i32, i32, i32
  }
  func.func @transform_4(%arg0: i32) -> (i32, i32, i32) {
    %c0_i32 = arith.constant 0 : i32
    %c0_i32_0 = arith.constant 0 : i32
    %c0_i32_1 = arith.constant 0 : i32
    return %arg0, %c0_i32, %c0_i32_0 : i32, i32, i32
  }
  func.func @transform_5(%arg0: i32) -> (i32, i32, i32) {
    %c0_i32 = arith.constant 0 : i32
    %c0_i32_0 = arith.constant 0 : i32
    %c0_i32_1 = arith.constant 0 : i32
    return %arg0, %c0_i32, %c0_i32_0 : i32, i32, i32
  }
  func.func @transform_6(%arg0: i32) -> (i32, i32) {
    %c0_i32 = arith.constant 0 : i32
    %c0_i32_0 = arith.constant 0 : i32
    %c0_i32_1 = arith.constant 0 : i32
    return %c0_i32, %c0_i32_0 : i32, i32
  }
  func.func @transform_7(%arg0: i32) -> (i32, i32) {
    %c0_i32 = arith.constant 0 : i32
    %c0_i32_0 = arith.constant 0 : i32
    %c0_i32_1 = arith.constant 0 : i32
    return %c0_i32, %c0_i32_0 : i32, i32
  }
  func.func @transform_8(%arg0: i32) -> (i32, i32) {
    %c0_i32 = arith.constant 0 : i32
    %c0_i32_0 = arith.constant 0 : i32
    %c0_i32_1 = arith.constant 0 : i32
    return %c0_i32, %c0_i32_0 : i32, i32
  }
  func.func @transform_9(%arg0: i32) -> (i32, i32) {
    %c0_i32 = arith.constant 0 : i32
    %c0_i32_0 = arith.constant 0 : i32
    %c0_i32_1 = arith.constant 0 : i32
    return %c0_i32, %c0_i32_0 : i32, i32
  }
  func.func @transform_10(%arg0: i32) -> (i32, i32, i32) {
    %c0_i32 = arith.constant 0 : i32
    %c0_i32_0 = arith.constant 0 : i32
    %c0_i32_1 = arith.constant 0 : i32
    return %arg0, %c0_i32, %c0_i32_0 : i32, i32, i32
  }
  func.func @transform_11(%arg0: i32) -> (i32, i32, i32) {
    %c0_i32 = arith.constant 0 : i32
    %c0_i32_0 = arith.constant 0 : i32
    %c0_i32_1 = arith.constant 0 : i32
    return %arg0, %c0_i32, %c0_i32_0 : i32, i32, i32
  }
  func.func @transform_12(%arg0: i32) -> (i32, i32, i32) {
    %c0_i32 = arith.constant 0 : i32
    %c0_i32_0 = arith.constant 0 : i32
    %c0_i32_1 = arith.constant 0 : i32
    return %arg0, %c0_i32, %c0_i32_0 : i32, i32, i32
  }
  func.func @transform_13(%arg0: i32) -> (i32, i32, i32) {
    %c0_i32 = arith.constant 0 : i32
    %c0_i32_0 = arith.constant 0 : i32
    %c0_i32_1 = arith.constant 0 : i32
    return %arg0, %c0_i32, %c0_i32_0 : i32, i32, i32
  }
  func.func @transform_14(%arg0: i32) -> (i32, i32) {
    %c0_i32 = arith.constant 0 : i32
    %c0_i32_0 = arith.constant 0 : i32
    %c0_i32_1 = arith.constant 0 : i32
    return %c0_i32, %c0_i32_0 : i32, i32
  }
  func.func @transform_15(%arg0: i32) -> (i32, i32) {
    %c0_i32 = arith.constant 0 : i32
    %c0_i32_0 = arith.constant 0 : i32
    %c0_i32_1 = arith.constant 0 : i32
    return %c0_i32, %c0_i32_0 : i32, i32
  }
  func.func @transform_16(%arg0: i32) -> (i32, i32) {
    %c0_i32 = arith.constant 0 : i32
    %c0_i32_0 = arith.constant 0 : i32
    %c0_i32_1 = arith.constant 0 : i32
    return %c0_i32, %c0_i32_0 : i32, i32
  }
  func.func @transform_17(%arg0: i32) -> (i32, i32) {
    %c0_i32 = arith.constant 0 : i32
    %c0_i32_0 = arith.constant 0 : i32
    %c0_i32_1 = arith.constant 0 : i32
    return %c0_i32, %c0_i32_0 : i32, i32
  }
  func.func @transform_18(%arg0: i32) -> (i32, i32, i32) {
    %c0_i32 = arith.constant 0 : i32
    %c0_i32_0 = arith.constant 0 : i32
    %c0_i32_1 = arith.constant 0 : i32
    return %arg0, %c0_i32, %c0_i32_0 : i32, i32, i32
  }
  func.func @transform_19(%arg0: i32) -> (i32, i32, i32, i32, i32) {
    %c0_i32 = arith.constant 0 : i32
    %c0_i32_0 = arith.constant 0 : i32
    %c0_i32_1 = arith.constant 0 : i32
    %c0_i32_2 = arith.constant 0 : i32
    %c0_i32_3 = arith.constant 0 : i32
    return %arg0, %c0_i32, %c0_i32_0, %c0_i32_1, %c0_i32_2 : i32, i32, i32, i32, i32
  }
  func.func @transform_20(%arg0: i32) -> (i32, i32, i32) {
    %c0_i32 = arith.constant 0 : i32
    %c0_i32_0 = arith.constant 0 : i32
    %c0_i32_1 = arith.constant 0 : i32
    return %arg0, %c0_i32, %c0_i32_0 : i32, i32, i32
  }
  func.func @transform_21(%arg0: i32) -> (i32, i32) {
    %c0_i32 = arith.constant 0 : i32
    %c0_i32_0 = arith.constant 0 : i32
    %c0_i32_1 = arith.constant 0 : i32
    return %c0_i32, %c0_i32_0 : i32, i32
  }
  func.func @transform_22(%arg0: i32) -> (i32, i32) {
    %c0_i32 = arith.constant 0 : i32
    %c0_i32_0 = arith.constant 0 : i32
    %c0_i32_1 = arith.constant 0 : i32
    return %c0_i32, %c0_i32_0 : i32, i32
  }
  func.func @transform_23(%arg0: i32) -> (i32, i32) {
    %c0_i32 = arith.constant 0 : i32
    %c0_i32_0 = arith.constant 0 : i32
    %c0_i32_1 = arith.constant 0 : i32
    return %c0_i32, %c0_i32_0 : i32, i32
  }
  func.func @transform_24(%arg0: i32) -> (i32, i32) {
    %c0_i32 = arith.constant 0 : i32
    %c0_i32_0 = arith.constant 0 : i32
    %c0_i32_1 = arith.constant 0 : i32
    return %c0_i32, %c0_i32_0 : i32, i32
  }
  func.func @transform_25(%arg0: i32) -> (i32, i32, i32) {
    %c0_i32 = arith.constant 0 : i32
    %c0_i32_0 = arith.constant 0 : i32
    %c0_i32_1 = arith.constant 0 : i32
    return %arg0, %c0_i32, %c0_i32_0 : i32, i32, i32
  }
  func.func @transform_26(%arg0: i32) -> (i32, i32, i32) {
    %c0_i32 = arith.constant 0 : i32
    %c0_i32_0 = arith.constant 0 : i32
    %c0_i32_1 = arith.constant 0 : i32
    return %arg0, %c0_i32, %c0_i32_0 : i32, i32, i32
  }
}

</mosaic_0001>

<llo_original>
// kernel: squeeze.26
$region0: #{squeeze.26}
  %s0 = inlined_call_operand.vmem [shape: f32[1,10,3], index: 0, kind: input, shape index: {}]
  %s1 = inlined_call_operand.hbm [shape: f32[2,5,3], index: 1, kind: output, shape index: {}]
  $region1: #{squeeze.26} parent=0
    #allocation0 [shape = 'u8[3072]{0}', space=vmem, size = 0xc00, scoped, tag = 'operand span for operand 1']
    #allocation1 [shape = 's32[1]{0}', space=sflag, size = 0x4, scoped, tag = 'scoped memory for squeeze.26']
    #allocation2 [shape = 'u8[12288]{0}', space=vmem, size = 0x3000, scoped, tag = 'scoped mem for output reshape']
    #allocation3 [shape = 'u8[4096]{0}', space=vmem, size = 0x1000, scoped, tag = 'scoped mem for input reshape']
    %2 = vsyncpa [#allocation1], 0
    %s4 = sshll.u32 1, 4
    %s5 = ssub.s32 %s4, 1
    %v6 = vld [vmem:[%s0] sm:%s5]
    %7 = vst [vmem:[#allocation3] sm:%s5] %v6
    %v8 = vld [vmem:[#allocation3] sm:$0x7]
    %vm9 = vcmask 39936
    %10 = vst.msk [vmem:[#allocation2] ss:$8 sm:$0x7] %vm9, %v8
    %v11 = vld [vmem:[#allocation3] sm:$0x7]
    %12 = vrot.lane.b32.xlu0 %v11, 123
    %v13 = vpop.permute.xlu0 %12
    %vm14 = vcmask 39936
    %s15 = scalar_lea.vmem [#allocation2], 1
    %16 = vst.msk [vmem:[%s15] ss:$8 sm:$0x7] %vm14, %v13
    %s18 = sshll.u32 1, 2
    %s19 = ssub.s32 %s18, 1
    %v21 = vld [vmem:[#allocation2] sm:%s19]
    %s22 = sshll.u32 1, 2
    %s23 = ssub.s32 %s22, 1
    %24 = vst [vmem:[#allocation0] sm:%s23] %v21
    %s25 = scalar_lea.vmem [#allocation2], 8
    %v26 = vld [vmem:[%s25] sm:%s19]
    %s27 = sshll.u32 1, 2
    %s28 = ssub.s32 %s27, 1
    %s29 = scalar_lea.vmem [#allocation0], 2
    %30 = vst [vmem:[%s29] sm:%s28] %v26
    %s31 = scalar_lea.vmem [#allocation2], 16
    %v32 = vld [vmem:[%s31] sm:%s19]
    %s33 = sshll.u32 1, 2
    %s34 = ssub.s32 %s33, 1
    %s35 = smul.addr 2, 2
    %s36 = scalar_lea.vmem [#allocation0], %s35
    %37 = vst [vmem:[%s36] sm:%s34] %v32
    %s39 = ssub.s32 96, 96
    %40 = vsyncadd [#allocation1], %s39
    %s42 = sshll.u32 [#allocation0], 4
    %s43 = int_to_ptr.vmem [resolvable:$true] %s42
    %45 = dma.vmem_to_hbm [thread:$0]  %s43, 96, %s1, [#allocation1]
    %46 = dma.done [#allocation1], 96
    %47 = vsyncpa [#allocation1], 1

// kernel: squeeze.27
$region0: #{squeeze.27}
  %s0 = inlined_call_operand.vmem [shape: f32[1,12,3], index: 0, kind: input, shape index: {}]
  %s1 = inlined_call_operand.hbm [shape: f32[2,6,3], index: 1, kind: output, shape index: {}]
  $region1: #{squeeze.27} parent=0
    #allocation0 [shape = 'u8[3072]{0}', space=vmem, size = 0xc00, scoped, tag = 'operand span for operand 1']
    #allocation1 [shape = 's32[1]{0}', space=sflag, size = 0x4, scoped, tag = 'scoped memory for squeeze.27']
    #allocation2 [shape = 'u8[12288]{0}', space=vmem, size = 0x3000, scoped, tag = 'scoped mem for output reshape']
    #allocation3 [shape = 'u8[4096]{0}', space=vmem, size = 0x1000, scoped, tag = 'scoped mem for input reshape']
    %2 = vsyncpa [#allocation1], 0
    %s4 = sshll.u32 1, 4
    %s5 = ssub.s32 %s4, 1
    %v6 = vld [vmem:[%s0] sm:%s5]
    %7 = vst [vmem:[#allocation3] sm:%s5] %v6
    %v8 = vld [vmem:[#allocation3] sm:$0x7]
    %vm9 = vcmask 48128
    %10 = vst.msk [vmem:[#allocation2] ss:$8 sm:$0x7] %vm9, %v8
    %v11 = vld [vmem:[#allocation3] sm:$0x7]
    %12 = vrot.lane.b32.xlu0 %v11, 122
    %v13 = vpop.permute.xlu0 %12
    %vm14 = vcmask 48128
    %s15 = scalar_lea.vmem [#allocation2], 1
    %16 = vst.msk [vmem:[%s15] ss:$8 sm:$0x7] %vm14, %v13
    %s18 = sshll.u32 1, 2
    %s19 = ssub.s32 %s18, 1
    %v21 = vld [vmem:[#allocation2] sm:%s19]
    %s22 = sshll.u32 1, 2
    %s23 = ssub.s32 %s22, 1
    %24 = vst [vmem:[#allocation0] sm:%s23] %v21
    %s25 = scalar_lea.vmem [#allocation2], 8
    %v26 = vld [vmem:[%s25] sm:%s19]
    %s27 = sshll.u32 1, 2
    %s28 = ssub.s32 %s27, 1
    %s29 = scalar_lea.vmem [#allocation0], 2
    %30 = vst [vmem:[%s29] sm:%s28] %v26
    %s31 = scalar_lea.vmem [#allocation2], 16
    %v32 = vld [vmem:[%s31] sm:%s19]
    %s33 = sshll.u32 1, 2
    %s34 = ssub.s32 %s33, 1
    %s35 = smul.addr 2, 2
    %s36 = scalar_lea.vmem [#allocation0], %s35
    %37 = vst [vmem:[%s36] sm:%s34] %v32
    %s39 = ssub.s32 96, 96
    %40 = vsyncadd [#allocation1], %s39
    %s42 = sshll.u32 [#allocation0], 4
    %s43 = int_to_ptr.vmem [resolvable:$true] %s42
    %45 = dma.vmem_to_hbm [thread:$0]  %s43, 96, %s1, [#allocation1]
    %46 = dma.done [#allocation1], 96
    %47 = vsyncpa [#allocation1], 1

// kernel: run.1
$region0: #{run.1}
  #allocation0 [shape = 'u32[]', space=smem, size = 0x4, offset = 0x4, fixed_abs, tag = 'smem constant byte address 0x4 - core index']
  #allocation1 [shape = 'u32[144,128]{1,0:T(1,128)}', space=vmem, size = 0x12000, scoped, tag = 'internal scratch']
  #allocation2 [shape = 'f32[1,1]{1,0:T(1,128)S(6)}', space=smem, size = 0x200, scoped, tag = 'scoped memory for run.1']
  %s0 = inlined_call_operand.<no memory space> [shape: f32[1,1], index: 0, kind: input, shape index: {}]
  %s1 = inlined_call_operand.vmem [shape: f32[2,64,8], index: 1, kind: input, shape index: {}]
  %s2 = inlined_call_operand.vmem [shape: f32[2,8,96], index: 2, kind: input, shape index: {}]
  %s3 = inlined_call_operand.vmem [shape: f32[2,32,96], index: 3, kind: input, shape index: {}]
  %s4 = inlined_call_operand.vmem [shape: f32[2,1,96], index: 4, kind: input, shape index: {}]
  %s5 = inlined_call_operand.vmem [shape: f32[2,1,96], index: 5, kind: input, shape index: {}]
  %s6 = inlined_call_operand.vmem [shape: f32[8,96], index: 6, kind: input, shape index: {}]
  %s7 = inlined_call_operand.vmem [shape: f32[32,96], index: 7, kind: input, shape index: {}]
  %s8 = inlined_call_operand.vmem [shape: f32[1,96], index: 8, kind: input, shape index: {}]
  %s9 = inlined_call_operand.vmem [shape: f32[1,96], index: 9, kind: input, shape index: {}]
  %s10 = inlined_call_operand.vmem [shape: f32[2,128,192], index: 10, kind: input, shape index: {}]
  %s11 = inlined_call_operand.vmem [shape: f32[2,3,192], index: 11, kind: input, shape index: {}]
  %s12 = inlined_call_operand.vmem [shape: f32[2,1,192], index: 12, kind: input, shape index: {}]
  %s13 = inlined_call_operand.vmem [shape: f32[2,1,64], index: 13, kind: input, shape index: {}]
  %s14 = inlined_call_operand.vmem [shape: f32[128,192], index: 14, kind: input, shape index: {}]
  %s15 = inlined_call_operand.vmem [shape: f32[3,192], index: 15, kind: input, shape index: {}]
  %s16 = inlined_call_operand.vmem [shape: f32[1,192], index: 16, kind: input, shape index: {}]
  %s17 = inlined_call_operand.vmem [shape: f32[1,64], index: 17, kind: input, shape index: {}]
  %s18 = inlined_call_operand.vmem [shape: f32[2,16,16], index: 18, kind: input, shape index: {}]
  %s19 = inlined_call_operand.vmem [shape: f32[2,2,3,16,16], index: 19, kind: input, shape index: {}]
  %s20 = inlined_call_operand.vmem [shape: f32[2,16,2], index: 20, kind: input, shape index: {}]
  %s21 = inlined_call_operand.vmem [shape: f32[64,4], index: 21, kind: input, shape index: {}]
  %s22 = inlined_call_operand.vmem [shape: f32[1,4], index: 22, kind: input, shape index: {}]
  %s23 = inlined_call_operand.vmem [shape: f32[4,3], index: 23, kind: input, shape index: {}]
  %s24 = inlined_call_operand.vmem [shape: f32[1,3], index: 24, kind: input, shape index: {}]
  %s25 = inlined_call_operand.vmem [shape: f32[2,16,3], index: 25, kind: output, shape index: {0}]
  %s26 = inlined_call_operand.vmem [shape: f32[2,2,128], index: 26, kind: output, shape index: {1}]
  %27 = xla_tuple %s25, %s26
  %s28 = sld [smem:[#allocation0]]
  $region141: #{run.1} parent=0
    _
  %s30 = ssub.s32 1, %s28
  %s31 = scalar_select 0, %s30, %s28
  %32 = sst [smem:[#allocation2]] %s0
  loop: start=0, step=1, limit=4
  $region2: #{run.1} parent=0 // loop_pre_header
    _
  $region3: #{run.1} parent=0 // loop_header
    %s34 = sphi 0, %s38
    %p35 = scmp.ge.s32.totalorder %s34, 4
    %s42 = sphi 0, %s42
    %s44 = sphi 0, %s42
    %s45 = sphi 0, %s44
    %s59 = sphi 0, %s45
    %s65 = sphi 0, %s67
    %s68 = sphi 0, %s65
    %s69 = sphi 0, %s68
    %s85 = sphi 0, %s69
    %s91 = sphi 0, %s93
    %s94 = sphi 0, %s91
    %s95 = sphi 0, %s94
    %s111 = sphi 0, %s95
    %s117 = sphi 0, %s119
    %s120 = sphi 0, %s117
    %s121 = sphi 0, %s120
    %s137 = sphi 0, %s121
    %s143 = sphi 0, %s145
    %s146 = sphi 0, %s143
    %s147 = sphi 0, %s146
    %s163 = sphi 0, %s147
    %s169 = sphi 0, %s171
    %s172 = sphi 0, %s169
    %s173 = sphi 0, %s172
    %s189 = sphi 0, %s173
    %s193 = sphi 0, %s193
    %s195 = sphi 0, %s193
    %s196 = sphi 0, %s195
    %s210 = sphi 0, %s196
    %s214 = sphi 0, %s214
    %s216 = sphi 0, %s214
    %s217 = sphi 0, %s216
    %s231 = sphi 0, %s217
    %s235 = sphi 0, %s235
    %s237 = sphi 0, %s235
    %s238 = sphi 0, %s237
    %s252 = sphi 0, %s238
    %s256 = sphi 0, %s256
    %s258 = sphi 0, %s256
    %s259 = sphi 0, %s258
    %s273 = sphi 0, %s259
    %s279 = sphi 0, %s281
    %s282 = sphi 0, %s279
    %s283 = sphi 0, %s282
    %s299 = sphi 0, %s283
    %s305 = sphi 0, %s307
    %s308 = sphi 0, %s305
    %s309 = sphi 0, %s308
    %s325 = sphi 0, %s309
    %s331 = sphi 0, %s333
    %s334 = sphi 0, %s331
    %s335 = sphi 0, %s334
    %s351 = sphi 0, %s335
    %s357 = sphi 0, %s359
    %s360 = sphi 0, %s357
    %s361 = sphi 0, %s360
    %s377 = sphi 0, %s361
    %s381 = sphi 0, %s381
    %s383 = sphi 0, %s381
    %s384 = sphi 0, %s383
    %s398 = sphi 0, %s384
    %s402 = sphi 0, %s402
    %s404 = sphi 0, %s402
    %s405 = sphi 0, %s404
    %s419 = sphi 0, %s405
    %s423 = sphi 0, %s423
    %s425 = sphi 0, %s423
    %s426 = sphi 0, %s425
    %s440 = sphi 0, %s426
    %s444 = sphi 0, %s444
    %s446 = sphi 0, %s444
    %s447 = sphi 0, %s446
    %s461 = sphi 0, %s447
    %s467 = sphi 0, %s469
    %s470 = sphi 0, %s467
    %s471 = sphi 0, %s470
    %s487 = sphi 0, %s471
    %s493 = sphi 0, %s495
    %s496 = sphi 0, %s493
    %s497 = sphi 0, %s496
    %s513 = sphi 0, %s497
    %s519 = sphi 0, %s521
    %s522 = sphi 0, %s519
    %s523 = sphi 0, %s522
    %s539 = sphi 0, %s523
    %s543 = sphi 0, %s543
    %s545 = sphi 0, %s543
    %s546 = sphi 0, %s545
    %s560 = sphi 0, %s546
    %s564 = sphi 0, %s564
    %s566 = sphi 0, %s564
    %s567 = sphi 0, %s566
    %s581 = sphi 0, %s567
    %s585 = sphi 0, %s585
    %s587 = sphi 0, %s585
    %s588 = sphi 0, %s587
    %s602 = sphi 0, %s588
    %s606 = sphi 0, %s606
    %s608 = sphi 0, %s606
    %s609 = sphi 0, %s608
    %s623 = sphi 0, %s609
    %s629 = sphi 0, %s631
    %s632 = sphi 0, %s629
    %s633 = sphi 0, %s632
    %s649 = sphi 0, %s633
    %s655 = sphi 0, %s657
    %s658 = sphi 0, %s655
    %s659 = sphi 0, %s658
    %s675 = sphi 0, %s659
  $region4: #{run.1} parent=0 // loop_header_branch
    %37 = sbr.rel (%p35) target = $region8
  $region5: #{run.1} parent=0 // loop_body
    %s39 = ssub.s32 %s34, 1
    %s40 = ssub.s32 %s34, 2
    %s41 = sadd.s32 %s34, 1
    %s43 = sadd.s32 %s42, 1
    %p46 = scmp.eq.s32.totalorder %s34, 1
    %p47 = scmp.ne.s32.totalorder %s42, %s44
    %p48 = scmp.eq.s32.totalorder %s34, 0
    %p49 = por %p47, %p48
    %p50 = scmp.ne.s32.totalorder %s42, %s44
    %p51 = scmp.eq.s32.totalorder %s39, 1
    %p52 = por %p50, %p51
    %p53 = scmp.ne.s32.totalorder %s44, %s45
    %p54 = scmp.eq.s32.totalorder %s39, 0
    %p55 = por %p53, %p54
    %p56 = scmp.ne.s32.totalorder %s44, %s45
    %p57 = scmp.eq.s32.totalorder %s40, 1
    %p58 = por %p56, %p57
    %p60 = scmp.ne.s32.totalorder %s45, %s59
    %p61 = scmp.eq.s32.totalorder %s40, 0
    %p62 = por %p60, %p61
    %s63 = ssub.s32 %s34, %s41
    %p64 = scmp.eq.s32.totalorder %s63, 0
    %s66 = sadd.s32 %s65, 1
    %s67 = scalar_select %p64, %s65, %s66
    %p70 = pneg %p64
    %p71 = scmp.eq.s32.totalorder %s34, 1
    %p72 = por %p70, %p71
    %p73 = scmp.ne.s32.totalorder %s65, %s68
    %p74 = scmp.eq.s32.totalorder %s34, 0
    %p75 = por %p73, %p74
    %p76 = scmp.ne.s32.totalorder %s65, %s68
    %p77 = scmp.eq.s32.totalorder %s39, 1
    %p78 = por %p76, %p77
    %p79 = scmp.ne.s32.totalorder %s68, %s69
    %p80 = scmp.eq.s32.totalorder %s39, 0
    %p81 = por %p79, %p80
    %p82 = scmp.ne.s32.totalorder %s68, %s69
    %p83 = scmp.eq.s32.totalorder %s40, 1
    %p84 = por %p82, %p83
    %p86 = scmp.ne.s32.totalorder %s69, %s85
    %p87 = scmp.eq.s32.totalorder %s40, 0
    %p88 = por %p86, %p87
    %s89 = ssub.s32 %s34, %s41
    %p90 = scmp.eq.s32.totalorder %s89, 0
    %s92 = sadd.s32 %s91, 1
    %s93 = scalar_select %p90, %s91, %s92
    %p96 = pneg %p90
    %p97 = scmp.eq.s32.totalorder %s34, 1
    %p98 = por %p96, %p97
    %p99 = scmp.ne.s32.totalorder %s91, %s94
    %p100 = scmp.eq.s32.totalorder %s34, 0
    %p101 = por %p99, %p100
    %p102 = scmp.ne.s32.totalorder %s91, %s94
    %p103 = scmp.eq.s32.totalorder %s39, 1
    %p104 = por %p102, %p103
    %p105 = scmp.ne.s32.totalorder %s94, %s95
    %p106 = scmp.eq.s32.totalorder %s39, 0
    %p107 = por %p105, %p106
    %p108 = scmp.ne.s32.totalorder %s94, %s95
    %p109 = scmp.eq.s32.totalorder %s40, 1
    %p110 = por %p108, %p109
    %p112 = scmp.ne.s32.totalorder %s95, %s111
    %p113 = scmp.eq.s32.totalorder %s40, 0
    %p114 = por %p112, %p113
    %s115 = ssub.s32 %s34, %s41
    %p116 = scmp.eq.s32.totalorder %s115, 0
    %s118 = sadd.s32 %s117, 1
    %s119 = scalar_select %p116, %s117, %s118
    %p122 = pneg %p116
    %p123 = scmp.eq.s32.totalorder %s34, 1
    %p124 = por %p122, %p123
    %p125 = scmp.ne.s32.totalorder %s117, %s120
    %p126 = scmp.eq.s32.totalorder %s34, 0
    %p127 = por %p125, %p126
    %p128 = scmp.ne.s32.totalorder %s117, %s120
    %p129 = scmp.eq.s32.totalorder %s39, 1
    %p130 = por %p128, %p129
    %p131 = scmp.ne.s32.totalorder %s120, %s121
    %p132 = scmp.eq.s32.totalorder %s39, 0
    %p133 = por %p131, %p132
    %p134 = scmp.ne.s32.totalorder %s120, %s121
    %p135 = scmp.eq.s32.totalorder %s40, 1
    %p136 = por %p134, %p135
    %p138 = scmp.ne.s32.totalorder %s121, %s137
    %p139 = scmp.eq.s32.totalorder %s40, 0
    %p140 = por %p138, %p139
    %s141 = ssub.s32 %s34, %s41
    %p142 = scmp.eq.s32.totalorder %s141, 0
    %s144 = sadd.s32 %s143, 1
    %s145 = scalar_select %p142, %s143, %s144
    %p148 = pneg %p142
    %p149 = scmp.eq.s32.totalorder %s34, 1
    %p150 = por %p148, %p149
    %p151 = scmp.ne.s32.totalorder %s143, %s146
    %p152 = scmp.eq.s32.totalorder %s34, 0
    %p153 = por %p151, %p152
    %p154 = scmp.ne.s32.totalorder %s143, %s146
    %p155 = scmp.eq.s32.totalorder %s39, 1
    %p156 = por %p154, %p155
    %p157 = scmp.ne.s32.totalorder %s146, %s147
    %p158 = scmp.eq.s32.totalorder %s39, 0
    %p159 = por %p157, %p158
    %p160 = scmp.ne.s32.totalorder %s146, %s147
    %p161 = scmp.eq.s32.totalorder %s40, 1
    %p162 = por %p160, %p161
    %p164 = scmp.ne.s32.totalorder %s147, %s163
    %p165 = scmp.eq.s32.totalorder %s40, 0
    %p166 = por %p164, %p165
    %s167 = ssub.s32 %s34, %s41
    %p168 = scmp.eq.s32.totalorder %s167, 0
    %s170 = sadd.s32 %s169, 1
    %s171 = scalar_select %p168, %s169, %s170
    %p174 = pneg %p168
    %p175 = scmp.eq.s32.totalorder %s34, 1
    %p176 = por %p174, %p175
    %p177 = scmp.ne.s32.totalorder %s169, %s172
    %p178 = scmp.eq.s32.totalorder %s34, 0
    %p179 = por %p177, %p178
    %p180 = scmp.ne.s32.totalorder %s169, %s172
    %p181 = scmp.eq.s32.totalorder %s39, 1
    %p182 = por %p180, %p181
    %p183 = scmp.ne.s32.totalorder %s172, %s173
    %p184 = scmp.eq.s32.totalorder %s39, 0
    %p185 = por %p183, %p184
    %p186 = scmp.ne.s32.totalorder %s172, %s173
    %p187 = scmp.eq.s32.totalorder %s40, 1
    %p188 = por %p186, %p187
    %p190 = scmp.ne.s32.totalorder %s173, %s189
    %p191 = scmp.eq.s32.totalorder %s40, 0
    %p192 = por %p190, %p191
    %s194 = sadd.s32 %s193, 1
    %p197 = scmp.eq.s32.totalorder %s34, 1
    %p198 = scmp.ne.s32.totalorder %s193, %s195
    %p199 = scmp.eq.s32.totalorder %s34, 0
    %p200 = por %p198, %p199
    %p201 = scmp.ne.s32.totalorder %s193, %s195
    %p202 = scmp.eq.s32.totalorder %s39, 1
    %p203 = por %p201, %p202
    %p204 = scmp.ne.s32.totalorder %s195, %s196
    %p205 = scmp.eq.s32.totalorder %s39, 0
    %p206 = por %p204, %p205
    %p207 = scmp.ne.s32.totalorder %s195, %s196
    %p208 = scmp.eq.s32.totalorder %s40, 1
    %p209 = por %p207, %p208
    %p211 = scmp.ne.s32.totalorder %s196, %s210
    %p212 = scmp.eq.s32.totalorder %s40, 0
    %p213 = por %p211, %p212
    %s215 = sadd.s32 %s214, 1
    %p218 = scmp.eq.s32.totalorder %s34, 1
    %p219 = scmp.ne.s32.totalorder %s214, %s216
    %p220 = scmp.eq.s32.totalorder %s34, 0
    %p221 = por %p219, %p220
    %p222 = scmp.ne.s32.totalorder %s214, %s216
    %p223 = scmp.eq.s32.totalorder %s39, 1
    %p224 = por %p222, %p223
    %p225 = scmp.ne.s32.totalorder %s216, %s217
    %p226 = scmp.eq.s32.totalorder %s39, 0
    %p227 = por %p225, %p226
    %p228 = scmp.ne.s32.totalorder %s216, %s217
    %p229 = scmp.eq.s32.totalorder %s40, 1
    %p230 = por %p228, %p229
    %p232 = scmp.ne.s32.totalorder %s217, %s231
    %p233 = scmp.eq.s32.totalorder %s40, 0
    %p234 = por %p232, %p233
    %s236 = sadd.s32 %s235, 1
    %p239 = scmp.eq.s32.totalorder %s34, 1
    %p240 = scmp.ne.s32.totalorder %s235, %s237
    %p241 = scmp.eq.s32.totalorder %s34, 0
    %p242 = por %p240, %p241
    %p243 = scmp.ne.s32.totalorder %s235, %s237
    %p244 = scmp.eq.s32.totalorder %s39, 1
    %p245 = por %p243, %p244
    %p246 = scmp.ne.s32.totalorder %s237, %s238
    %p247 = scmp.eq.s32.totalorder %s39, 0
    %p248 = por %p246, %p247
    %p249 = scmp.ne.s32.totalorder %s237, %s238
    %p250 = scmp.eq.s32.totalorder %s40, 1
    %p251 = por %p249, %p250
    %p253 = scmp.ne.s32.totalorder %s238, %s252
    %p254 = scmp.eq.s32.totalorder %s40, 0
    %p255 = por %p253, %p254
    %s257 = sadd.s32 %s256, 1
    %p260 = scmp.eq.s32.totalorder %s34, 1
    %p261 = scmp.ne.s32.totalorder %s256, %s258
    %p262 = scmp.eq.s32.totalorder %s34, 0
    %p263 = por %p261, %p262
    %p264 = scmp.ne.s32.totalorder %s256, %s258
    %p265 = scmp.eq.s32.totalorder %s39, 1
    %p266 = por %p264, %p265
    %p267 = scmp.ne.s32.totalorder %s258, %s259
    %p268 = scmp.eq.s32.totalorder %s39, 0
    %p269 = por %p267, %p268
    %p270 = scmp.ne.s32.totalorder %s258, %s259
    %p271 = scmp.eq.s32.totalorder %s40, 1
    %p272 = por %p270, %p271
    %p274 = scmp.ne.s32.totalorder %s259, %s273
    %p275 = scmp.eq.s32.totalorder %s40, 0
    %p276 = por %p274, %p275
    %s277 = ssub.s32 %s34, %s41
    %p278 = scmp.eq.s32.totalorder %s277, 0
    %s280 = sadd.s32 %s279, 1
    %s281 = scalar_select %p278, %s279, %s280
    %p284 = pneg %p278
    %p285 = scmp.eq.s32.totalorder %s34, 1
    %p286 = por %p284, %p285
    %p287 = scmp.ne.s32.totalorder %s279, %s282
    %p288 = scmp.eq.s32.totalorder %s34, 0
    %p289 = por %p287, %p288
    %p290 = scmp.ne.s32.totalorder %s279, %s282
    %p291 = scmp.eq.s32.totalorder %s39, 1
    %p292 = por %p290, %p291
    %p293 = scmp.ne.s32.totalorder %s282, %s283
    %p294 = scmp.eq.s32.totalorder %s39, 0
    %p295 = por %p293, %p294
    %p296 = scmp.ne.s32.totalorder %s282, %s283
    %p297 = scmp.eq.s32.totalorder %s40, 1
    %p298 = por %p296, %p297
    %p300 = scmp.ne.s32.totalorder %s283, %s299
    %p301 = scmp.eq.s32.totalorder %s40, 0
    %p302 = por %p300, %p301
    %s303 = ssub.s32 %s34, %s41
    %p304 = scmp.eq.s32.totalorder %s303, 0
    %s306 = sadd.s32 %s305, 1
    %s307 = scalar_select %p304, %s305, %s306
    %p310 = pneg %p304
    %p311 = scmp.eq.s32.totalorder %s34, 1
    %p312 = por %p310, %p311
    %p313 = scmp.ne.s32.totalorder %s305, %s308
    %p314 = scmp.eq.s32.totalorder %s34, 0
    %p315 = por %p313, %p314
    %p316 = scmp.ne.s32.totalorder %s305, %s308
    %p317 = scmp.eq.s32.totalorder %s39, 1
    %p318 = por %p316, %p317
    %p319 = scmp.ne.s32.totalorder %s308, %s309
    %p320 = scmp.eq.s32.totalorder %s39, 0
    %p321 = por %p319, %p320
    %p322 = scmp.ne.s32.totalorder %s308, %s309
    %p323 = scmp.eq.s32.totalorder %s40, 1
    %p324 = por %p322, %p323
    %p326 = scmp.ne.s32.totalorder %s309, %s325
    %p327 = scmp.eq.s32.totalorder %s40, 0
    %p328 = por %p326, %p327
    %s329 = ssub.s32 %s34, %s41
    %p330 = scmp.eq.s32.totalorder %s329, 0
    %s332 = sadd.s32 %s331, 1
    %s333 = scalar_select %p330, %s331, %s332
    %p336 = pneg %p330
    %p337 = scmp.eq.s32.totalorder %s34, 1
    %p338 = por %p336, %p337
    %p339 = scmp.ne.s32.totalorder %s331, %s334
    %p340 = scmp.eq.s32.totalorder %s34, 0
    %p341 = por %p339, %p340
    %p342 = scmp.ne.s32.totalorder %s331, %s334
    %p343 = scmp.eq.s32.totalorder %s39, 1
    %p344 = por %p342, %p343
    %p345 = scmp.ne.s32.totalorder %s334, %s335
    %p346 = scmp.eq.s32.totalorder %s39, 0
    %p347 = por %p345, %p346
    %p348 = scmp.ne.s32.totalorder %s334, %s335
    %p349 = scmp.eq.s32.totalorder %s40, 1
    %p350 = por %p348, %p349
    %p352 = scmp.ne.s32.totalorder %s335, %s351
    %p353 = scmp.eq.s32.totalorder %s40, 0
    %p354 = por %p352, %p353
    %s355 = ssub.s32 %s34, %s41
    %p356 = scmp.eq.s32.totalorder %s355, 0
    %s358 = sadd.s32 %s357, 1
    %s359 = scalar_select %p356, %s357, %s358
    %p362 = pneg %p356
    %p363 = scmp.eq.s32.totalorder %s34, 1
    %p364 = por %p362, %p363
    %p365 = scmp.ne.s32.totalorder %s357, %s360
    %p366 = scmp.eq.s32.totalorder %s34, 0
    %p367 = por %p365, %p366
    %p368 = scmp.ne.s32.totalorder %s357, %s360
    %p369 = scmp.eq.s32.totalorder %s39, 1
    %p370 = por %p368, %p369
    %p371 = scmp.ne.s32.totalorder %s360, %s361
    %p372 = scmp.eq.s32.totalorder %s39, 0
    %p373 = por %p371, %p372
    %p374 = scmp.ne.s32.totalorder %s360, %s361
    %p375 = scmp.eq.s32.totalorder %s40, 1
    %p376 = por %p374, %p375
    %p378 = scmp.ne.s32.totalorder %s361, %s377
    %p379 = scmp.eq.s32.totalorder %s40, 0
    %p380 = por %p378, %p379
    %s382 = sadd.s32 %s381, 1
    %p385 = scmp.eq.s32.totalorder %s34, 1
    %p386 = scmp.ne.s32.totalorder %s381, %s383
    %p387 = scmp.eq.s32.totalorder %s34, 0
    %p388 = por %p386, %p387
    %p389 = scmp.ne.s32.totalorder %s381, %s383
    %p390 = scmp.eq.s32.totalorder %s39, 1
    %p391 = por %p389, %p390
    %p392 = scmp.ne.s32.totalorder %s383, %s384
    %p393 = scmp.eq.s32.totalorder %s39, 0
    %p394 = por %p392, %p393
    %p395 = scmp.ne.s32.totalorder %s383, %s384
    %p396 = scmp.eq.s32.totalorder %s40, 1
    %p397 = por %p395, %p396
    %p399 = scmp.ne.s32.totalorder %s384, %s398
    %p400 = scmp.eq.s32.totalorder %s40, 0
    %p401 = por %p399, %p400
    %s403 = sadd.s32 %s402, 1
    %p406 = scmp.eq.s32.totalorder %s34, 1
    %p407 = scmp.ne.s32.totalorder %s402, %s404
    %p408 = scmp.eq.s32.totalorder %s34, 0
    %p409 = por %p407, %p408
    %p410 = scmp.ne.s32.totalorder %s402, %s404
    %p411 = scmp.eq.s32.totalorder %s39, 1
    %p412 = por %p410, %p411
    %p413 = scmp.ne.s32.totalorder %s404, %s405
    %p414 = scmp.eq.s32.totalorder %s39, 0
    %p415 = por %p413, %p414
    %p416 = scmp.ne.s32.totalorder %s404, %s405
    %p417 = scmp.eq.s32.totalorder %s40, 1
    %p418 = por %p416, %p417
    %p420 = scmp.ne.s32.totalorder %s405, %s419
    %p421 = scmp.eq.s32.totalorder %s40, 0
    %p422 = por %p420, %p421
    %s424 = sadd.s32 %s423, 1
    %p427 = scmp.eq.s32.totalorder %s34, 1
    %p428 = scmp.ne.s32.totalorder %s423, %s425
    %p429 = scmp.eq.s32.totalorder %s34, 0
    %p430 = por %p428, %p429
    %p431 = scmp.ne.s32.totalorder %s423, %s425
    %p432 = scmp.eq.s32.totalorder %s39, 1
    %p433 = por %p431, %p432
    %p434 = scmp.ne.s32.totalorder %s425, %s426
    %p435 = scmp.eq.s32.totalorder %s39, 0
    %p436 = por %p434, %p435
    %p437 = scmp.ne.s32.totalorder %s425, %s426
    %p438 = scmp.eq.s32.totalorder %s40, 1
    %p439 = por %p437, %p438
    %p441 = scmp.ne.s32.totalorder %s426, %s440
    %p442 = scmp.eq.s32.totalorder %s40, 0
    %p443 = por %p441, %p442
    %s445 = sadd.s32 %s444, 1
    %p448 = scmp.eq.s32.totalorder %s34, 1
    %p449 = scmp.ne.s32.totalorder %s444, %s446
    %p450 = scmp.eq.s32.totalorder %s34, 0
    %p451 = por %p449, %p450
    %p452 = scmp.ne.s32.totalorder %s444, %s446
    %p453 = scmp.eq.s32.totalorder %s39, 1
    %p454 = por %p452, %p453
    %p455 = scmp.ne.s32.totalorder %s446, %s447
    %p456 = scmp.eq.s32.totalorder %s39, 0
    %p457 = por %p455, %p456
    %p458 = scmp.ne.s32.totalorder %s446, %s447
    %p459 = scmp.eq.s32.totalorder %s40, 1
    %p460 = por %p458, %p459
    %p462 = scmp.ne.s32.totalorder %s447, %s461
    %p463 = scmp.eq.s32.totalorder %s40, 0
    %p464 = por %p462, %p463
    %s465 = ssub.s32 %s34, %s41
    %p466 = scmp.eq.s32.totalorder %s465, 0
    %s468 = sadd.s32 %s467, 1
    %s469 = scalar_select %p466, %s467, %s468
    %p472 = pneg %p466
    %p473 = scmp.eq.s32.totalorder %s34, 1
    %p474 = por %p472, %p473
    %p475 = scmp.ne.s32.totalorder %s467, %s470
    %p476 = scmp.eq.s32.totalorder %s34, 0
    %p477 = por %p475, %p476
    %p478 = scmp.ne.s32.totalorder %s467, %s470
    %p479 = scmp.eq.s32.totalorder %s39, 1
    %p480 = por %p478, %p479
    %p481 = scmp.ne.s32.totalorder %s470, %s471
    %p482 = scmp.eq.s32.totalorder %s39, 0
    %p483 = por %p481, %p482
    %p484 = scmp.ne.s32.totalorder %s470, %s471
    %p485 = scmp.eq.s32.totalorder %s40, 1
    %p486 = por %p484, %p485
    %p488 = scmp.ne.s32.totalorder %s471, %s487
    %p489 = scmp.eq.s32.totalorder %s40, 0
    %p490 = por %p488, %p489
    %s491 = ssub.s32 %s34, %s41
    %p492 = scmp.eq.s32.totalorder %s491, 0
    %s494 = sadd.s32 %s493, 1
    %s495 = scalar_select %p492, %s493, %s494
    %p498 = pneg %p492
    %p499 = scmp.eq.s32.totalorder %s34, 1
    %p500 = por %p498, %p499
    %p501 = scmp.ne.s32.totalorder %s493, %s496
    %p502 = scmp.eq.s32.totalorder %s34, 0
    %p503 = por %p501, %p502
    %p504 = scmp.ne.s32.totalorder %s493, %s496
    %p505 = scmp.eq.s32.totalorder %s39, 1
    %p506 = por %p504, %p505
    %p507 = scmp.ne.s32.totalorder %s496, %s497
    %p508 = scmp.eq.s32.totalorder %s39, 0
    %p509 = por %p507, %p508
    %p510 = scmp.ne.s32.totalorder %s496, %s497
    %p511 = scmp.eq.s32.totalorder %s40, 1
    %p512 = por %p510, %p511
    %p514 = scmp.ne.s32.totalorder %s497, %s513
    %p515 = scmp.eq.s32.totalorder %s40, 0
    %p516 = por %p514, %p515
    %s517 = ssub.s32 %s34, %s41
    %p518 = scmp.eq.s32.totalorder %s517, 0
    %s520 = sadd.s32 %s519, 1
    %s521 = scalar_select %p518, %s519, %s520
    %p524 = pneg %p518
    %p525 = scmp.eq.s32.totalorder %s34, 1
    %p526 = por %p524, %p525
    %p527 = scmp.ne.s32.totalorder %s519, %s522
    %p528 = scmp.eq.s32.totalorder %s34, 0
    %p529 = por %p527, %p528
    %p530 = scmp.ne.s32.totalorder %s519, %s522
    %p531 = scmp.eq.s32.totalorder %s39, 1
    %p532 = por %p530, %p531
    %p533 = scmp.ne.s32.totalorder %s522, %s523
    %p534 = scmp.eq.s32.totalorder %s39, 0
    %p535 = por %p533, %p534
    %p536 = scmp.ne.s32.totalorder %s522, %s523
    %p537 = scmp.eq.s32.totalorder %s40, 1
    %p538 = por %p536, %p537
    %p540 = scmp.ne.s32.totalorder %s523, %s539
    %p541 = scmp.eq.s32.totalorder %s40, 0
    %p542 = por %p540, %p541
    %s544 = sadd.s32 %s543, 1
    %p547 = scmp.eq.s32.totalorder %s34, 1
    %p548 = scmp.ne.s32.totalorder %s543, %s545
    %p549 = scmp.eq.s32.totalorder %s34, 0
    %p550 = por %p548, %p549
    %p551 = scmp.ne.s32.totalorder %s543, %s545
    %p552 = scmp.eq.s32.totalorder %s39, 1
    %p553 = por %p551, %p552
    %p554 = scmp.ne.s32.totalorder %s545, %s546
    %p555 = scmp.eq.s32.totalorder %s39, 0
    %p556 = por %p554, %p555
    %p557 = scmp.ne.s32.totalorder %s545, %s546
    %p558 = scmp.eq.s32.totalorder %s40, 1
    %p559 = por %p557, %p558
    %p561 = scmp.ne.s32.totalorder %s546, %s560
    %p562 = scmp.eq.s32.totalorder %s40, 0
    %p563 = por %p561, %p562
    %s565 = sadd.s32 %s564, 1
    %p568 = scmp.eq.s32.totalorder %s34, 1
    %p569 = scmp.ne.s32.totalorder %s564, %s566
    %p570 = scmp.eq.s32.totalorder %s34, 0
    %p571 = por %p569, %p570
    %p572 = scmp.ne.s32.totalorder %s564, %s566
    %p573 = scmp.eq.s32.totalorder %s39, 1
    %p574 = por %p572, %p573
    %p575 = scmp.ne.s32.totalorder %s566, %s567
    %p576 = scmp.eq.s32.totalorder %s39, 0
    %p577 = por %p575, %p576
    %p578 = scmp.ne.s32.totalorder %s566, %s567
    %p579 = scmp.eq.s32.totalorder %s40, 1
    %p580 = por %p578, %p579
    %p582 = scmp.ne.s32.totalorder %s567, %s581
    %p583 = scmp.eq.s32.totalorder %s40, 0
    %p584 = por %p582, %p583
    %s586 = sadd.s32 %s585, 1
    %p589 = scmp.eq.s32.totalorder %s34, 1
    %p590 = scmp.ne.s32.totalorder %s585, %s587
    %p591 = scmp.eq.s32.totalorder %s34, 0
    %p592 = por %p590, %p591
    %p593 = scmp.ne.s32.totalorder %s585, %s587
    %p594 = scmp.eq.s32.totalorder %s39, 1
    %p595 = por %p593, %p594
    %p596 = scmp.ne.s32.totalorder %s587, %s588
    %p597 = scmp.eq.s32.totalorder %s39, 0
    %p598 = por %p596, %p597
    %p599 = scmp.ne.s32.totalorder %s587, %s588
    %p600 = scmp.eq.s32.totalorder %s40, 1
    %p601 = por %p599, %p600
    %p603 = scmp.ne.s32.totalorder %s588, %s602
    %p604 = scmp.eq.s32.totalorder %s40, 0
    %p605 = por %p603, %p604
    %s607 = sadd.s32 %s606, 1
    %p610 = scmp.eq.s32.totalorder %s34, 1
    %p611 = scmp.ne.s32.totalorder %s606, %s608
    %p612 = scmp.eq.s32.totalorder %s34, 0
    %p613 = por %p611, %p612
    %p614 = scmp.ne.s32.totalorder %s606, %s608
    %p615 = scmp.eq.s32.totalorder %s39, 1
    %p616 = por %p614, %p615
    %p617 = scmp.ne.s32.totalorder %s608, %s609
    %p618 = scmp.eq.s32.totalorder %s39, 0
    %p619 = por %p617, %p618
    %p620 = scmp.ne.s32.totalorder %s608, %s609
    %p621 = scmp.eq.s32.totalorder %s40, 1
    %p622 = por %p620, %p621
    %p624 = scmp.ne.s32.totalorder %s609, %s623
    %p625 = scmp.eq.s32.totalorder %s40, 0
    %p626 = por %p624, %p625
    %s627 = ssub.s32 %s34, %s41
    %p628 = scmp.eq.s32.totalorder %s627, 0
    %s630 = sadd.s32 %s629, 1
    %s631 = scalar_select %p628, %s629, %s630
    %p634 = pneg %p628
    %p635 = scmp.eq.s32.totalorder %s34, 1
    %p636 = por %p634, %p635
    %p637 = scmp.ne.s32.totalorder %s629, %s632
    %p638 = scmp.eq.s32.totalorder %s34, 0
    %p639 = por %p637, %p638
    %p640 = scmp.ne.s32.totalorder %s629, %s632
    %p641 = scmp.eq.s32.totalorder %s39, 1
    %p642 = por %p640, %p641
    %p643 = scmp.ne.s32.totalorder %s632, %s633
    %p644 = scmp.eq.s32.totalorder %s39, 0
    %p645 = por %p643, %p644
    %p646 = scmp.ne.s32.totalorder %s632, %s633
    %p647 = scmp.eq.s32.totalorder %s40, 1
    %p648 = por %p646, %p647
    %p650 = scmp.ne.s32.totalorder %s633, %s649
    %p651 = scmp.eq.s32.totalorder %s40, 0
    %p652 = por %p650, %p651
    %s653 = ssub.s32 %s34, %s41
    %p654 = scmp.eq.s32.totalorder %s653, 0
    %s656 = sadd.s32 %s655, 1
    %s657 = scalar_select %p654, %s655, %s656
    %p660 = pneg %p654
    %p661 = scmp.eq.s32.totalorder %s34, 1
    %p662 = por %p660, %p661
    %p663 = scmp.ne.s32.totalorder %s655, %s658
    %p664 = scmp.eq.s32.totalorder %s34, 0
    %p665 = por %p663, %p664
    %p666 = scmp.ne.s32.totalorder %s655, %s658
    %p667 = scmp.eq.s32.totalorder %s39, 1
    %p668 = por %p666, %p667
    %p669 = scmp.ne.s32.totalorder %s658, %s659
    %p670 = scmp.eq.s32.totalorder %s39, 0
    %p671 = por %p669, %p670
    %p672 = scmp.ne.s32.totalorder %s658, %s659
    %p673 = scmp.eq.s32.totalorder %s40, 1
    %p674 = por %p672, %p673
    %p676 = scmp.ne.s32.totalorder %s659, %s675
    %p677 = scmp.eq.s32.totalorder %s40, 0
    %p678 = por %p676, %p677
    %p679 = scmp.le.s32.totalorder 1, %s34
    %p680 = scmp.lt.s32.totalorder %s34, 3
    %p681 = pnand %p679, %p680
    %p682 = pneg %p681
    // Predicated region
    $region9: #{run.1} parent=5 // pred_check
      _
    $region10: #{run.1} parent=5 // pred_check_branch
      %684 = sbr.rel (%p681) target = $region12
    $region11: #{run.1} parent=5 // pred_region
      %s685 = ssub.s32 %s34, 1
      // Predicated region
      $region13: #{run.1} parent=11 // pred_check
        %p686 = pneg %p55
      $region14: #{run.1} parent=11 // pred_check_branch
        %688 = sbr.rel (%p686) target = $region16
      $region15: #{run.1} parent=11 // pred_region
        _
      $region16: #{run.1} parent=11 // pred_fallthru
        _
      // Predicated region
      $region17: #{run.1} parent=11 // pred_check
        %p689 = pneg %p206
      $region18: #{run.1} parent=11 // pred_check_branch
        %691 = sbr.rel (%p689) target = $region20
      $region19: #{run.1} parent=11 // pred_region
        _
      $region20: #{run.1} parent=11 // pred_fallthru
        _
      // Predicated region
      $region21: #{run.1} parent=11 // pred_check
        %p692 = pneg %p227
      $region22: #{run.1} parent=11 // pred_check_branch
        %694 = sbr.rel (%p692) target = $region24
      $region23: #{run.1} parent=11 // pred_region
        _
      $region24: #{run.1} parent=11 // pred_fallthru
        _
      // Predicated region
      $region25: #{run.1} parent=11 // pred_check
        %p695 = pneg %p248
      $region26: #{run.1} parent=11 // pred_check_branch
        %697 = sbr.rel (%p695) target = $region28
      $region27: #{run.1} parent=11 // pred_region
        _
      $region28: #{run.1} parent=11 // pred_fallthru
        _
      // Predicated region
      $region29: #{run.1} parent=11 // pred_check
        %p698 = pneg %p269
      $region30: #{run.1} parent=11 // pred_check_branch
        %700 = sbr.rel (%p698) target = $region32
      $region31: #{run.1} parent=11 // pred_region
        _
      $region32: #{run.1} parent=11 // pred_fallthru
        _
      // Predicated region
      $region33: #{run.1} parent=11 // pred_check
        %p701 = pneg %p394
      $region34: #{run.1} parent=11 // pred_check_branch
        %703 = sbr.rel (%p701) target = $region36
      $region35: #{run.1} parent=11 // pred_region
        _
      $region36: #{run.1} parent=11 // pred_fallthru
        _
      // Predicated region
      $region37: #{run.1} parent=11 // pred_check
        %p704 = pneg %p415
      $region38: #{run.1} parent=11 // pred_check_branch
        %706 = sbr.rel (%p704) target = $region40
      $region39: #{run.1} parent=11 // pred_region
        _
      $region40: #{run.1} parent=11 // pred_fallthru
        _
      // Predicated region
      $region41: #{run.1} parent=11 // pred_check
        %p707 = pneg %p436
      $region42: #{run.1} parent=11 // pred_check_branch
        %709 = sbr.rel (%p707) target = $region44
      $region43: #{run.1} parent=11 // pred_region
        _
      $region44: #{run.1} parent=11 // pred_fallthru
        _
      // Predicated region
      $region45: #{run.1} parent=11 // pred_check
        %p710 = pneg %p457
      $region46: #{run.1} parent=11 // pred_check_branch
        %712 = sbr.rel (%p710) target = $region48
      $region47: #{run.1} parent=11 // pred_region
        _
      $region48: #{run.1} parent=11 // pred_fallthru
        _
      // Predicated region
      $region49: #{run.1} parent=11 // pred_check
        %p713 = pneg %p556
      $region50: #{run.1} parent=11 // pred_check_branch
        %715 = sbr.rel (%p713) target = $region52
      $region51: #{run.1} parent=11 // pred_region
        _
      $region52: #{run.1} parent=11 // pred_fallthru
        _
      // Predicated region
      $region53: #{run.1} parent=11 // pred_check
        %p716 = pneg %p577
      $region54: #{run.1} parent=11 // pred_check_branch
        %718 = sbr.rel (%p716) target = $region56
      $region55: #{run.1} parent=11 // pred_region
        _
      $region56: #{run.1} parent=11 // pred_fallthru
        _
      // Predicated region
      $region57: #{run.1} parent=11 // pred_check
        %p719 = pneg %p598
      $region58: #{run.1} parent=11 // pred_check_branch
        %721 = sbr.rel (%p719) target = $region60
      $region59: #{run.1} parent=11 // pred_region
        _
      $region60: #{run.1} parent=11 // pred_fallthru
        _
      // Predicated region
      $region61: #{run.1} parent=11 // pred_check
        %p722 = pneg %p619
      $region62: #{run.1} parent=11 // pred_check_branch
        %724 = sbr.rel (%p722) target = $region64
      $region63: #{run.1} parent=11 // pred_region
        _
      $region64: #{run.1} parent=11 // pred_fallthru
        _
    $region12: #{run.1} parent=5 // pred_fallthru
      _
    %p725 = scmp.lt.s32.totalorder %s34, 2
    // Predicated region
    $region65: #{run.1} parent=5 // pred_check
      %p726 = pneg %p725
    $region66: #{run.1} parent=5 // pred_check_branch
      %728 = sbr.rel (%p726) target = $region68
    $region67: #{run.1} parent=5 // pred_region
      // Predicated region
      $region69: #{run.1} parent=67 // pred_check
        %p729 = pneg %p75
      $region70: #{run.1} parent=67 // pred_check_branch
        %731 = sbr.rel (%p729) target = $region72
      $region71: #{run.1} parent=67 // pred_region
        %p732 = scmp.lt.s32.totalorder %s34, 1
        %s733 = scalar_select %p732, %s34, 1
        %s734 = smul.addr %s733, 8
        %s735 = smul.addr %s734, 8
        %s736 = scalar_lea.vmem %s1, %s735
      $region72: #{run.1} parent=67 // pred_fallthru
        _
      // Predicated region
      $region73: #{run.1} parent=67 // pred_check
        %p737 = pneg %p101
      $region74: #{run.1} parent=67 // pred_check_branch
        %739 = sbr.rel (%p737) target = $region76
      $region75: #{run.1} parent=67 // pred_region
        %p740 = scmp.lt.s32.totalorder %s34, 1
        %s741 = scalar_select %p740, %s34, 1
        %s742 = smul.addr %s741, 8
        %s743 = scalar_lea.vmem %s2, %s742
      $region76: #{run.1} parent=67 // pred_fallthru
        _
      // Predicated region
      $region77: #{run.1} parent=67 // pred_check
        %p744 = pneg %p127
      $region78: #{run.1} parent=67 // pred_check_branch
        %746 = sbr.rel (%p744) target = $region80
      $region79: #{run.1} parent=67 // pred_region
        %p747 = scmp.lt.s32.totalorder %s34, 1
        %s748 = scalar_select %p747, %s34, 1
        %s749 = smul.addr %s748, 4
        %s750 = smul.addr %s749, 8
        %s751 = scalar_lea.vmem %s3, %s750
      $region80: #{run.1} parent=67 // pred_fallthru
        _
      // Predicated region
      $region81: #{run.1} parent=67 // pred_check
        %p752 = pneg %p153
      $region82: #{run.1} parent=67 // pred_check_branch
        %754 = sbr.rel (%p752) target = $region84
      $region83: #{run.1} parent=67 // pred_region
        %p755 = scmp.lt.s32.totalorder %s34, 1
        %s756 = scalar_select %p755, %s34, 1
        %s757 = scalar_lea.vmem %s4, %s756
      $region84: #{run.1} parent=67 // pred_fallthru
        _
      // Predicated region
      $region85: #{run.1} parent=67 // pred_check
        %p758 = pneg %p179
      $region86: #{run.1} parent=67 // pred_check_branch
        %760 = sbr.rel (%p758) target = $region88
      $region87: #{run.1} parent=67 // pred_region
        %p761 = scmp.lt.s32.totalorder %s34, 1
        %s762 = scalar_select %p761, %s34, 1
        %s763 = scalar_lea.vmem %s5, %s762
      $region88: #{run.1} parent=67 // pred_fallthru
        _
      // Predicated region
      $region89: #{run.1} parent=67 // pred_check
        %p764 = pneg %p289
      $region90: #{run.1} parent=67 // pred_check_branch
        %766 = sbr.rel (%p764) target = $region92
      $region91: #{run.1} parent=67 // pred_region
        %p767 = scmp.lt.s32.totalorder %s34, 1
        %s768 = scalar_select %p767, %s34, 1
        %s769 = smul.addr %s768, 32
        %s770 = smul.addr %s769, 8
        %s771 = scalar_lea.vmem %s10, %s770
      $region92: #{run.1} parent=67 // pred_fallthru
        _
      // Predicated region
      $region93: #{run.1} parent=67 // pred_check
        %p772 = pneg %p315
      $region94: #{run.1} parent=67 // pred_check_branch
        %774 = sbr.rel (%p772) target = $region96
      $region95: #{run.1} parent=67 // pred_region
        %p775 = scmp.lt.s32.totalorder %s34, 1
        %s776 = scalar_select %p775, %s34, 1
        %s777 = smul.addr %s776, 2
        %s778 = smul.addr %s777, 4
        %s779 = scalar_lea.vmem %s11, %s778
      $region96: #{run.1} parent=67 // pred_fallthru
        _
      // Predicated region
      $region97: #{run.1} parent=67 // pred_check
        %p780 = pneg %p341
      $region98: #{run.1} parent=67 // pred_check_branch
        %782 = sbr.rel (%p780) target = $region100
      $region99: #{run.1} parent=67 // pred_region
        %p783 = scmp.lt.s32.totalorder %s34, 1
        %s784 = scalar_select %p783, %s34, 1
        %s785 = smul.addr %s784, 2
        %s786 = scalar_lea.vmem %s12, %s785
      $region100: #{run.1} parent=67 // pred_fallthru
        _
      // Predicated region
      $region101: #{run.1} parent=67 // pred_check
        %p787 = pneg %p367
      $region102: #{run.1} parent=67 // pred_check_branch
        %789 = sbr.rel (%p787) target = $region104
      $region103: #{run.1} parent=67 // pred_region
        %p790 = scmp.lt.s32.totalorder %s34, 1
        %s791 = scalar_select %p790, %s34, 1
        %s792 = scalar_lea.vmem %s13, %s791
      $region104: #{run.1} parent=67 // pred_fallthru
        _
      // Predicated region
      $region105: #{run.1} parent=67 // pred_check
        %p793 = pneg %p477
      $region106: #{run.1} parent=67 // pred_check_branch
        %795 = sbr.rel (%p793) target = $region108
      $region107: #{run.1} parent=67 // pred_region
        %p796 = scmp.lt.s32.totalorder %s34, 1
        %s797 = scalar_select %p796, %s34, 1
        %s798 = smul.addr %s797, 2
        %s799 = smul.addr %s798, 8
        %s800 = scalar_lea.vmem %s18, %s799
      $region108: #{run.1} parent=67 // pred_fallthru
        _
      // Predicated region
      $region109: #{run.1} parent=67 // pred_check
        %p801 = pneg %p503
      $region110: #{run.1} parent=67 // pred_check_branch
        %803 = sbr.rel (%p801) target = $region112
      $region111: #{run.1} parent=67 // pred_region
        %p804 = scmp.lt.s32.totalorder %s34, 1
        %s805 = scalar_select %p804, %s34, 1
        %s806 = smul.addr %s805, 12
        %s807 = smul.addr %s806, 8
        %s808 = scalar_lea.vmem %s19, %s807
      $region112: #{run.1} parent=67 // pred_fallthru
        _
      // Predicated region
      $region113: #{run.1} parent=67 // pred_check
        %p809 = pneg %p529
      $region114: #{run.1} parent=67 // pred_check_branch
        %811 = sbr.rel (%p809) target = $region116
      $region115: #{run.1} parent=67 // pred_region
        %p812 = scmp.lt.s32.totalorder %s34, 1
        %s813 = scalar_select %p812, %s34, 1
        %s814 = smul.addr %s813, 2
        %s815 = smul.addr %s814, 8
        %s816 = scalar_lea.vmem %s20, %s815
      $region116: #{run.1} parent=67 // pred_fallthru
        _
    $region68: #{run.1} parent=5 // pred_fallthru
      _
    %p817 = scmp.le.s32.totalorder 1, %s34
    %p818 = scmp.lt.s32.totalorder %s34, 3
    %p819 = pnand %p817, %p818
    %p820 = pneg %p819
    // Predicated region
    $region117: #{run.1} parent=5 // pred_check
      _
    $region118: #{run.1} parent=5 // pred_check_branch
      %822 = sbr.rel (%p819) target = $region120
    $region119: #{run.1} parent=5 // pred_region
      %s823 = ssub.s32 %s34, 1
      %p824 = pneg %p55
      %p825 = pneg %p52
      %p826 = scmp.lt.s32.totalorder %s39, 1
      %s827 = scalar_select %p826, %s39, 1
      %s828 = smul.addr %s827, 8
      %s829 = smul.addr %s828, 8
      %s830 = scalar_lea.vmem %s1, %s829
      %p831 = pneg %p81
      %p832 = pneg %p78
      %p833 = scmp.lt.s32.totalorder %s39, 1
      %s834 = scalar_select %p833, %s39, 1
      %s835 = smul.addr %s834, 8
      %s836 = scalar_lea.vmem %s2, %s835
      %p837 = pneg %p107
      %p838 = pneg %p104
      %p839 = scmp.lt.s32.totalorder %s39, 1
      %s840 = scalar_select %p839, %s39, 1
      %s841 = smul.addr %s840, 4
      %s842 = smul.addr %s841, 8
      %s843 = scalar_lea.vmem %s3, %s842
      %p844 = pneg %p133
      %p845 = pneg %p130
      %p846 = scmp.lt.s32.totalorder %s39, 1
      %s847 = scalar_select %p846, %s39, 1
      %s848 = scalar_lea.vmem %s4, %s847
      %p849 = pneg %p159
      %p850 = pneg %p156
      %p851 = scmp.lt.s32.totalorder %s39, 1
      %s852 = scalar_select %p851, %s39, 1
      %s853 = scalar_lea.vmem %s5, %s852
      %p854 = pneg %p185
      %p855 = pneg %p182
      %p856 = pneg %p206
      %p857 = pneg %p203
      %p858 = pneg %p227
      %p859 = pneg %p224
      %p860 = pneg %p248
      %p861 = pneg %p245
      %p862 = pneg %p269
      %p863 = pneg %p266
      %p864 = scmp.lt.s32.totalorder %s39, 1
      %s865 = scalar_select %p864, %s39, 1
      %s866 = smul.addr %s865, 32
      %s867 = smul.addr %s866, 8
      %s868 = scalar_lea.vmem %s10, %s867
      %p869 = pneg %p295
      %p870 = pneg %p292
      %p871 = scmp.lt.s32.totalorder %s39, 1
      %s872 = scalar_select %p871, %s39, 1
      %s873 = smul.addr %s872, 2
      %s874 = smul.addr %s873, 4
      %s875 = scalar_lea.vmem %s11, %s874
      %p876 = pneg %p321
      %p877 = pneg %p318
      %p878 = scmp.lt.s32.totalorder %s39, 1
      %s879 = scalar_select %p878, %s39, 1
      %s880 = smul.addr %s879, 2
      %s881 = scalar_lea.vmem %s12, %s880
      %p882 = pneg %p347
      %p883 = pneg %p344
      %p884 = scmp.lt.s32.totalorder %s39, 1
      %s885 = scalar_select %p884, %s39, 1
      %s886 = scalar_lea.vmem %s13, %s885
      %p887 = pneg %p373
      %p888 = pneg %p370
      %p889 = pneg %p394
      %p890 = pneg %p391
      %p891 = pneg %p415
      %p892 = pneg %p412
      %p893 = pneg %p436
      %p894 = pneg %p433
      %p895 = pneg %p457
      %p896 = pneg %p454
      %p897 = scmp.lt.s32.totalorder %s39, 1
      %s898 = scalar_select %p897, %s39, 1
      %s899 = smul.addr %s898, 2
      %s900 = smul.addr %s899, 8
      %s901 = scalar_lea.vmem %s18, %s900
      %p902 = pneg %p483
      %p903 = pneg %p480
      %p904 = scmp.lt.s32.totalorder %s39, 1
      %s905 = scalar_select %p904, %s39, 1
      %s906 = smul.addr %s905, 12
      %s907 = smul.addr %s906, 8
      %s908 = scalar_lea.vmem %s19, %s907
      %p909 = pneg %p509
      %p910 = pneg %p506
      %p911 = scmp.lt.s32.totalorder %s39, 1
      %s912 = scalar_select %p911, %s39, 1
      %s913 = smul.addr %s912, 2
      %s914 = smul.addr %s913, 8
      %s915 = scalar_lea.vmem %s20, %s914
      %p916 = pneg %p535
      %p917 = pneg %p532
      %p918 = pneg %p556
      %p919 = pneg %p553
      %p920 = pneg %p577
      %p921 = pneg %p574
      %p922 = pneg %p598
      %p923 = pneg %p595
      %p924 = pneg %p619
      %p925 = pneg %p616
      %p926 = pneg %p645
      %p927 = pneg %p642
      %p928 = scmp.lt.s32.totalorder %s39, 1
      %s929 = scalar_select %p928, %s39, 1
      %s930 = smul.addr %s929, 2
      %s931 = smul.addr %s930, 8
      %s932 = scalar_lea.vmem %s25, %s931
      %p933 = pneg %p671
      %p934 = pneg %p668
      %p935 = scmp.lt.s32.totalorder %s39, 1
      %s936 = scalar_select %p935, %s39, 1
      %s937 = smul.addr %s936, 2
      %s938 = scalar_lea.vmem %s26, %s937
      %p939 = scmp.lt.s32.totalorder %s39, 1
      %s940 = scalar_select %p939, %s39, 1
      %s941 = smul.addr %s940, 8
      %s942 = smul.addr %s941, 8
      %s943 = scalar_lea.vmem %s1, %s942
      %p944 = scmp.lt.s32.totalorder %s39, 1
      %s945 = scalar_select %p944, %s39, 1
      %s946 = smul.addr %s945, 8
      %s947 = scalar_lea.vmem %s2, %s946
      %p948 = scmp.lt.s32.totalorder %s39, 1
      %s949 = scalar_select %p948, %s39, 1
      %s950 = smul.addr %s949, 4
      %s951 = smul.addr %s950, 8
      %s952 = scalar_lea.vmem %s3, %s951
      %p953 = scmp.lt.s32.totalorder %s39, 1
      %s954 = scalar_select %p953, %s39, 1
      %s955 = scalar_lea.vmem %s4, %s954
      %p956 = scmp.lt.s32.totalorder %s39, 1
      %s957 = scalar_select %p956, %s39, 1
      %s958 = scalar_lea.vmem %s5, %s957
      %p959 = scmp.lt.s32.totalorder %s39, 1
      %s960 = scalar_select %p959, %s39, 1
      %s961 = smul.addr %s960, 32
      %s962 = smul.addr %s961, 8
      %s963 = scalar_lea.vmem %s10, %s962
      %p964 = scmp.lt.s32.totalorder %s39, 1
      %s965 = scalar_select %p964, %s39, 1
      %s966 = smul.addr %s965, 2
      %s967 = smul.addr %s966, 4
      %s968 = scalar_lea.vmem %s11, %s967
      %p969 = scmp.lt.s32.totalorder %s39, 1
      %s970 = scalar_select %p969, %s39, 1
      %s971 = smul.addr %s970, 2
      %s972 = scalar_lea.vmem %s12, %s971
      %p973 = scmp.lt.s32.totalorder %s39, 1
      %s974 = scalar_select %p973, %s39, 1
      %s975 = scalar_lea.vmem %s13, %s974
      %p976 = scmp.lt.s32.totalorder %s39, 1
      %s977 = scalar_select %p976, %s39, 1
      %s978 = smul.addr %s977, 2
      %s979 = smul.addr %s978, 8
      %s980 = scalar_lea.vmem %s18, %s979
      %p981 = scmp.lt.s32.totalorder %s39, 1
      %s982 = scalar_select %p981, %s39, 1
      %s983 = smul.addr %s982, 12
      %s984 = smul.addr %s983, 8
      %s985 = scalar_lea.vmem %s19, %s984
      %p986 = scmp.lt.s32.totalorder %s39, 1
      %s987 = scalar_select %p986, %s39, 1
      %s988 = smul.addr %s987, 2
      %s989 = smul.addr %s988, 8
      %s990 = scalar_lea.vmem %s20, %s989
      %p991 = scmp.lt.s32.totalorder %s39, 1
      %s992 = scalar_select %p991, %s39, 1
      %s993 = smul.addr %s992, 2
      %s994 = smul.addr %s993, 8
      %s995 = scalar_lea.vmem %s25, %s994
      %p996 = scmp.lt.s32.totalorder %s39, 1
      %s997 = scalar_select %p996, %s39, 1
      %s998 = smul.addr %s997, 2
      %s999 = scalar_lea.vmem %s26, %s998
      %v1000 = vld [vmem:[%s943] sm:$0xff]
      %v1001 = vld [vmem:[%s943 + $0x8] sm:$0xff]
      %v1002 = vld [vmem:[%s943 + $0x10] sm:$0xff]
      %v1003 = vld [vmem:[%s943 + $0x18] sm:$0xff]
      %v1004 = vld [vmem:[%s943 + $0x20] sm:$0xff]
      %v1005 = vld [vmem:[%s943 + $0x28] sm:$0xff]
      %v1006 = vld [vmem:[%s943 + $0x30] sm:$0xff]
      %v1007 = vld [vmem:[%s943 + $0x38] sm:$0xff]
      %v1008 = vld [vmem:[%s980] sm:$0xff]
      %v1009 = vld [vmem:[%s980 + $0x8] sm:$0xff]
      %v1010 = vld [vmem:[%s985] sm:$0xff]
      %v1011 = vld [vmem:[%s985 + $0x8] sm:$0xff]
      %v1012 = vld [vmem:[%s985 + $0x10] sm:$0xff]
      %v1013 = vld [vmem:[%s985 + $0x18] sm:$0xff]
      %v1014 = vld [vmem:[%s985 + $0x20] sm:$0xff]
      %v1015 = vld [vmem:[%s985 + $0x28] sm:$0xff]
      %v1016 = vld [vmem:[%s985 + $0x30] sm:$0xff]
      %v1017 = vld [vmem:[%s985 + $0x38] sm:$0xff]
      %v1018 = vld [vmem:[%s985 + $0x40] sm:$0xff]
      %v1019 = vld [vmem:[%s985 + $0x48] sm:$0xff]
      %v1020 = vld [vmem:[%s985 + $0x50] sm:$0xff]
      %v1021 = vld [vmem:[%s985 + $0x58] sm:$0xff]
      %v1022 = vld [vmem:[%s990] sm:$0xff]
      %v1023 = vld [vmem:[%s990 + $0x8] sm:$0xff]
      %s1024 = sld [smem:[#allocation2]]
      %v1025 = vld [vmem:[%s947] sm:$0xff]
      %v1026 = vld [vmem:[%s952] sm:$0xff]
      %v1027 = vld [vmem:[%s952 + $0x8] sm:$0xff]
      %v1028 = vld [vmem:[%s952 + $0x10] sm:$0xff]
      %v1029 = vld [vmem:[%s952 + $0x18] sm:$0xff]
      %v1030 = vld [vmem:[%s955] sm:$0x1]
      %v1031 = vld [vmem:[%s958] sm:$0x1]
      %v1033 = vlaneseq
      %v1034 = vshrl.u32 %v1033, 7
      %v1035 = vsub.s32 0, %v1034
      %v1036 = vrot.slane %v1030, %v1035
      %vm1038 = vcmask 64512
      %v1040 = vsel %vm1038, %v1000, 0
      %v1043 = vsel %vm1038, %v1001, 0
      %v1046 = vsel %vm1038, %v1002, 0
      %v1049 = vsel %vm1038, %v1003, 0
      %v1052 = vsel %vm1038, %v1004, 0
      %v1055 = vsel %vm1038, %v1005, 0
      %v1058 = vsel %vm1038, %v1006, 0
      %v1061 = vsel %vm1038, %v1007, 0
      %1063 = vmatprep.subr.mxu0 0.0
      %1064 = vmatpush1.msra.mxu0 0.0
      %1065 = vmatprep.subr.mxu0 0.0
      %1066 = vmatpush1.msra.mxu0 0.0
      %1067 = vmatprep.subr.mxu0 0.0
      %1068 = vmatpush1.msra.mxu0 0.0
      %1069 = vmatprep.subr.mxu0 0.0
      %1070 = vmatpush1.msra.mxu0 0.0
      %1071 = vmatprep.subr.mxu0 0.0
      %1072 = vmatpush1.msra.mxu0 0.0
      %1073 = vmatprep.subr.mxu0 0.0
      %1074 = vmatpush1.msra.mxu0 0.0
      %1075 = vmatprep.subr.mxu0 0.0
      %1076 = vmatpush1.msra.mxu0 0.0
      %1077 = vmatprep.subr.mxu0 0.0
      %1078 = vmatpush1.msra.mxu0 0.0
      %1079 = vmatprep.subr.mxu0 0.0
      %1080 = vmatpush1.msra.mxu0 0.0
      %1081 = vmatprep.subr.mxu0 0.0
      %1082 = vmatpush1.msra.mxu0 0.0
      %1083 = vmatprep.subr.mxu0 0.0
      %1084 = vmatpush1.msra.mxu0 0.0
      %1085 = vmatprep.subr.mxu0 0.0
      %1086 = vmatpush1.msra.mxu0 0.0
      %1087 = vmatprep.subr.mxu0 0.0
      %1088 = vmatpush1.msra.mxu0 0.0
      %1089 = vmatprep.subr.mxu0 0.0
      %1090 = vmatpush1.msra.mxu0 0.0
      %1091 = vmatprep.subr.mxu0 0.0
      %1092 = vmatpush1.msra.mxu0 0.0
      %1093 = vmatprep.subr.mxu0 0.0
      %1094 = vmatpush1.msra.mxu0 %v1025
      %1095 = vmatprep.subr.mxu0 0.0
      %1096 = vmatpush2.msra.mxu0 0.0
      %1097 = vmatprep.subr.mxu0 0.0
      %1098 = vmatpush2.msra.mxu0 0.0
      %1099 = vmatprep.subr.mxu0 0.0
      %1100 = vmatpush2.msra.mxu0 0.0
      %1101 = vmatprep.subr.mxu0 0.0
      %1102 = vmatpush2.msra.mxu0 0.0
      %1103 = vmatprep.subr.mxu0 0.0
      %1104 = vmatpush2.msra.mxu0 0.0
      %1105 = vmatprep.subr.mxu0 0.0
      %1106 = vmatpush2.msra.mxu0 0.0
      %1107 = vmatprep.subr.mxu0 0.0
      %1108 = vmatpush2.msra.mxu0 0.0
      %1109 = vmatprep.subr.mxu0 0.0
      %1110 = vmatpush2.msra.mxu0 0.0
      %1111 = vmatprep.subr.mxu0 0.0
      %1112 = vmatpush2.msra.mxu0 0.0
      %1113 = vmatprep.subr.mxu0 0.0
      %1114 = vmatpush2.msra.mxu0 0.0
      %1115 = vmatprep.subr.mxu0 0.0
      %1116 = vmatpush2.msra.mxu0 0.0
      %1117 = vmatprep.subr.mxu0 0.0
      %1118 = vmatpush2.msra.mxu0 0.0
      %1119 = vmatprep.subr.mxu0 0.0
      %1120 = vmatpush2.msra.mxu0 0.0
      %1121 = vmatprep.subr.mxu0 0.0
      %1122 = vmatpush2.msra.mxu0 0.0
      %1123 = vmatprep.subr.mxu0 0.0
      %1124 = vmatpush2.msra.mxu0 0.0
      %1125 = vmatprep.subr.mxu0 0.0
      %1126 = vmatpush2.msra.mxu0 0.0
      %1127 = vmatprep.mubr.f32.mxu0 0.0
      %1128 = vmatmul.mubr.f32.gmra.mxu0 %v1040
      %v1129 = vpop.f32.mrf.mxu0
      %v1130 = vadd.f32 %v1036, %v1129
      %v1131 = vpop.f32.mrf.mxu0
      %1132 = vmatprep.mubr.f32.mxu0 0.0
      %1133 = vmatmul.mubr.f32.gmra.mxu0 %v1043
      %v1134 = vpop.f32.mrf.mxu0
      %v1135 = vadd.f32 %v1036, %v1134
      %v1136 = vpop.f32.mrf.mxu0
      %1137 = vmatprep.mubr.f32.mxu0 0.0
      %1138 = vmatmul.mubr.f32.gmra.mxu0 %v1046
      %v1139 = vpop.f32.mrf.mxu0
      %v1140 = vadd.f32 %v1036, %v1139
      %v1141 = vpop.f32.mrf.mxu0
      %1142 = vmatprep.mubr.f32.mxu0 0.0
      %1143 = vmatmul.mubr.f32.gmra.mxu0 %v1049
      %v1144 = vpop.f32.mrf.mxu0
      %v1145 = vadd.f32 %v1036, %v1144
      %v1146 = vpop.f32.mrf.mxu0
      %1147 = vmatprep.mubr.f32.mxu0 0.0
      %1148 = vmatmul.mubr.f32.gmra.mxu0 %v1052
      %v1149 = vpop.f32.mrf.mxu0
      %v1150 = vadd.f32 %v1036, %v1149
      %v1151 = vpop.f32.mrf.mxu0
      %1152 = vmatprep.mubr.f32.mxu0 0.0
      %1153 = vmatmul.mubr.f32.gmra.mxu0 %v1055
      %v1154 = vpop.f32.mrf.mxu0
      %v1155 = vadd.f32 %v1036, %v1154
      %v1156 = vpop.f32.mrf.mxu0
      %1157 = vmatprep.mubr.f32.mxu0 0.0
      %1158 = vmatmul.mubr.f32.gmra.mxu0 %v1058
      %v1159 = vpop.f32.mrf.mxu0
      %v1160 = vadd.f32 %v1036, %v1159
      %v1161 = vpop.f32.mrf.mxu0
      %1162 = vmatprep.mubr.f32.mxu0 0.0
      %1163 = vmatmul.mubr.f32.gmra.mxu0 %v1061
      %v1164 = vpop.f32.mrf.mxu0
      %v1165 = vadd.f32 %v1036, %v1164
      %v1166 = vpop.f32.mrf.mxu0
      %1167 = vdwg.mxu0
      %v1169 = vlaneseq
      %v1170 = vshrl.u32 %v1169, 7
      %v1171 = vsub.s32 0, %v1170
      %v1172 = vrot.slane %v1031, %v1171
      %vm1174 = vcmask 261120
      %v1176 = vsel %vm1174, 0.0, 0
      %1178 = vmatprep.subr.mxu0 0.0
      %1179 = vmatpush1.msra.mxu0 0.0
      %1180 = vmatprep.subr.mxu0 0.0
      %1181 = vmatpush1.msra.mxu0 0.0
      %1182 = vmatprep.subr.mxu0 0.0
      %1183 = vmatpush1.msra.mxu0 0.0
      %1184 = vmatprep.subr.mxu0 0.0
      %1185 = vmatpush1.msra.mxu0 0.0
      %1186 = vmatprep.subr.mxu0 0.0
      %1187 = vmatpush1.msra.mxu0 0.0
      %1188 = vmatprep.subr.mxu0 0.0
      %1189 = vmatpush1.msra.mxu0 0.0
      %1190 = vmatprep.subr.mxu0 0.0
      %1191 = vmatpush1.msra.mxu0 0.0
      %1192 = vmatprep.subr.mxu0 0.0
      %1193 = vmatpush1.msra.mxu0 0.0
      %1194 = vmatprep.subr.mxu0 0.0
      %1195 = vmatpush1.msra.mxu0 0.0
      %1196 = vmatprep.subr.mxu0 0.0
      %1197 = vmatpush1.msra.mxu0 0.0
      %1198 = vmatprep.subr.mxu0 0.0
      %1199 = vmatpush1.msra.mxu0 0.0
      %1200 = vmatprep.subr.mxu0 0.0
      %1201 = vmatpush1.msra.mxu0 0.0
      %1202 = vmatprep.subr.mxu0 0.0
      %1203 = vmatpush1.msra.mxu0 %v1029
      %1204 = vmatprep.subr.mxu0 0.0
      %1205 = vmatpush1.msra.mxu0 %v1028
      %1206 = vmatprep.subr.mxu0 0.0
      %1207 = vmatpush1.msra.mxu0 %v1027
      %1208 = vmatprep.subr.mxu0 0.0
      %1209 = vmatpush1.msra.mxu0 %v1026
      %1210 = vmatprep.subr.mxu0 0.0
      %1211 = vmatpush2.msra.mxu0 0.0
      %1212 = vmatprep.subr.mxu0 0.0
      %1213 = vmatpush2.msra.mxu0 0.0
      %1214 = vmatprep.subr.mxu0 0.0
      %1215 = vmatpush2.msra.mxu0 0.0
      %1216 = vmatprep.subr.mxu0 0.0
      %1217 = vmatpush2.msra.mxu0 0.0
      %1218 = vmatprep.subr.mxu0 0.0
      %1219 = vmatpush2.msra.mxu0 0.0
      %1220 = vmatprep.subr.mxu0 0.0
      %1221 = vmatpush2.msra.mxu0 0.0
      %1222 = vmatprep.subr.mxu0 0.0
      %1223 = vmatpush2.msra.mxu0 0.0
      %1224 = vmatprep.subr.mxu0 0.0
      %1225 = vmatpush2.msra.mxu0 0.0
      %1226 = vmatprep.subr.mxu0 0.0
      %1227 = vmatpush2.msra.mxu0 0.0
      %1228 = vmatprep.subr.mxu0 0.0
      %1229 = vmatpush2.msra.mxu0 0.0
      %1230 = vmatprep.subr.mxu0 0.0
      %1231 = vmatpush2.msra.mxu0 0.0
      %1232 = vmatprep.subr.mxu0 0.0
      %1233 = vmatpush2.msra.mxu0 0.0
      %1234 = vmatprep.subr.mxu0 0.0
      %1235 = vmatpush2.msra.mxu0 0.0
      %1236 = vmatprep.subr.mxu0 0.0
      %1237 = vmatpush2.msra.mxu0 0.0
      %1238 = vmatprep.subr.mxu0 0.0
      %1239 = vmatpush2.msra.mxu0 0.0
      %1240 = vmatprep.subr.mxu0 0.0
      %1241 = vmatpush2.msra.mxu0 0.0
      %1242 = vmatprep.mubr.f32.mxu0 0.0
      %1243 = vmatmul.mubr.f32.gmra.mxu0 %v1176
      %v1244 = vpop.f32.mrf.mxu0
      %v1245 = vadd.f32 %v1172, %v1244
      %v1246 = vpop.f32.mrf.mxu0
      %1247 = vmatprep.mubr.f32.mxu0 0.0
      %1248 = vmatmul.mubr.f32.gmra.mxu0 %v1176
      %v1249 = vpop.f32.mrf.mxu0
      %v1250 = vadd.f32 %v1172, %v1249
      %v1251 = vpop.f32.mrf.mxu0
      %1252 = vdwg.mxu0
      %v1253 = vadd.f32 %v1130, %v1245
      %v1254 = vadd.f32 %v1135, %v1250
      %v1255 = vxor.u32 %v1253, 2147483648
      %v1256 = vxor.u32 %v1254, 2147483648
      %v1257 = vmul.f32 %v1255, 1.442695
      %v1258 = vpow.pop %v1257
      %v1259 = vmul.f32 %v1256, 1.442695
      %v1260 = vpow.pop %v1259
      %v1261 = vadd.f32 %v1258, 1.0
      %v1262 = vadd.f32 %v1260, 1.0
      %v1263 = vrcp.pop %v1261
      %v1264 = vmul.f32 1.0, %v1263
      %v1265 = vrcp.pop %v1262
      %v1266 = vmul.f32 1.0, %v1265
      %1269 = vrot.lane.b32.xlu0 %v1245, 64
      %v1270 = vpop.permute.xlu0 %1269
      %1271 = vrot.lane.b32.xlu0 %v1250, 64
      %v1272 = vpop.permute.xlu0 %1271
      %v1275 = vmul.f32 %v1264, %v1270
      %v1276 = vmul.f32 %v1266, %v1272
      %1279 = vrot.lane.b32.xlu0 %v1275, 64
      %v1280 = vpop.permute.xlu0 %1279
      %1281 = vrot.lane.b32.xlu0 %v1276, 64
      %v1282 = vpop.permute.xlu0 %1281
      %v1285 = vadd.f32 %v1130, %v1280
      %v1286 = vadd.f32 %v1135, %v1282
      %v1287 = vtanh.pop %v1285
      %v1288 = vtanh.pop %v1286
      %v1289 = vsub.f32 1.0, %v1264
      %v1290 = vsub.f32 1.0, %v1266
      %1293 = vrot.lane.b32.xlu0 %v1287, 96
      %v1294 = vpop.permute.xlu0 %1293
      %1295 = vrot.lane.b32.xlu0 %v1288, 96
      %v1296 = vpop.permute.xlu0 %1295
      %v1299 = vmul.f32 %v1289, %v1294
      %v1300 = vmul.f32 %v1290, %v1296
      %v1301 = vmul.f32 %v1264, 0.0
      %v1302 = vmul.f32 %v1266, 0.0
      %v1303 = vadd.f32 %v1299, %v1301
      %v1304 = vadd.f32 %v1300, %v1302
      %1307 = vrot.lane.b32.xlu0 %v1303, 96
      %v1308 = vpop.permute.xlu0 %1307
      %1309 = vrot.lane.b32.xlu0 %v1304, 96
      %v1310 = vpop.permute.xlu0 %1309
      %v1311 = vsel %vm1174, %v1308, 0
      %v1313 = vsel %vm1174, %v1310, 0
      %1315 = vmatprep.subr.mxu0 0.0
      %1316 = vmatpush1.msra.mxu0 0.0
      %1317 = vmatprep.subr.mxu0 0.0
      %1318 = vmatpush1.msra.mxu0 0.0
      %1319 = vmatprep.subr.mxu0 0.0
      %1320 = vmatpush1.msra.mxu0 0.0
      %1321 = vmatprep.subr.mxu0 0.0
      %1322 = vmatpush1.msra.mxu0 0.0
      %1323 = vmatprep.subr.mxu0 0.0
      %1324 = vmatpush1.msra.mxu0 0.0
      %1325 = vmatprep.subr.mxu0 0.0
      %1326 = vmatpush1.msra.mxu0 0.0
      %1327 = vmatprep.subr.mxu0 0.0
      %1328 = vmatpush1.msra.mxu0 0.0
      %1329 = vmatprep.subr.mxu0 0.0
      %1330 = vmatpush1.msra.mxu0 0.0
      %1331 = vmatprep.subr.mxu0 0.0
      %1332 = vmatpush1.msra.mxu0 0.0
      %1333 = vmatprep.subr.mxu0 0.0
      %1334 = vmatpush1.msra.mxu0 0.0
      %1335 = vmatprep.subr.mxu0 0.0
      %1336 = vmatpush1.msra.mxu0 0.0
      %1337 = vmatprep.subr.mxu0 0.0
      %1338 = vmatpush1.msra.mxu0 0.0
      %1339 = vmatprep.subr.mxu0 0.0
      %1340 = vmatpush1.msra.mxu0 %v1029
      %1341 = vmatprep.subr.mxu0 0.0
      %1342 = vmatpush1.msra.mxu0 %v1028
      %1343 = vmatprep.subr.mxu0 0.0
      %1344 = vmatpush1.msra.mxu0 %v1027
      %1345 = vmatprep.subr.mxu0 0.0
      %1346 = vmatpush1.msra.mxu0 %v1026
      %1347 = vmatprep.subr.mxu0 0.0
      %1348 = vmatpush2.msra.mxu0 0.0
      %1349 = vmatprep.subr.mxu0 0.0
      %1350 = vmatpush2.msra.mxu0 0.0
      %1351 = vmatprep.subr.mxu0 0.0
      %1352 = vmatpush2.msra.mxu0 0.0
      %1353 = vmatprep.subr.mxu0 0.0
      %1354 = vmatpush2.msra.mxu0 0.0
      %1355 = vmatprep.subr.mxu0 0.0
      %1356 = vmatpush2.msra.mxu0 0.0
      %1357 = vmatprep.subr.mxu0 0.0
      %1358 = vmatpush2.msra.mxu0 0.0
      %1359 = vmatprep.subr.mxu0 0.0
      %1360 = vmatpush2.msra.mxu0 0.0
      %1361 = vmatprep.subr.mxu0 0.0
      %1362 = vmatpush2.msra.mxu0 0.0
      %1363 = vmatprep.subr.mxu0 0.0
      %1364 = vmatpush2.msra.mxu0 0.0
      %1365 = vmatprep.subr.mxu0 0.0
      %1366 = vmatpush2.msra.mxu0 0.0
      %1367 = vmatprep.subr.mxu0 0.0
      %1368 = vmatpush2.msra.mxu0 0.0
      %1369 = vmatprep.subr.mxu0 0.0
      %1370 = vmatpush2.msra.mxu0 0.0
      %1371 = vmatprep.subr.mxu0 0.0
      %1372 = vmatpush2.msra.mxu0 0.0
      %1373 = vmatprep.subr.mxu0 0.0
      %1374 = vmatpush2.msra.mxu0 0.0
      %1375 = vmatprep.subr.mxu0 0.0
      %1376 = vmatpush2.msra.mxu0 0.0
      %1377 = vmatprep.subr.mxu0 0.0
      %1378 = vmatpush2.msra.mxu0 0.0
      %1379 = vmatprep.mubr.f32.mxu0 0.0
      %1380 = vmatmul.mubr.f32.gmra.mxu0 %v1311
      %v1381 = vpop.f32.mrf.mxu0
      %v1382 = vadd.f32 %v1172, %v1381
      %v1383 = vpop.f32.mrf.mxu0
      %1384 = vmatprep.mubr.f32.mxu0 0.0
      %1385 = vmatmul.mubr.f32.gmra.mxu0 %v1313
      %v1386 = vpop.f32.mrf.mxu0
      %v1387 = vadd.f32 %v1172, %v1386
      %v1388 = vpop.f32.mrf.mxu0
      %1389 = vdwg.mxu0
      %v1390 = vadd.f32 %v1140, %v1382
      %v1391 = vadd.f32 %v1145, %v1387
      %v1392 = vxor.u32 %v1390, 2147483648
      %v1393 = vxor.u32 %v1391, 2147483648
      %v1394 = vmul.f32 %v1392, 1.442695
      %v1395 = vpow.pop %v1394
      %v1396 = vmul.f32 %v1393, 1.442695
      %v1397 = vpow.pop %v1396
      %v1398 = vadd.f32 %v1395, 1.0
      %v1399 = vadd.f32 %v1397, 1.0
      %v1400 = vrcp.pop %v1398
      %v1401 = vmul.f32 1.0, %v1400
      %v1402 = vrcp.pop %v1399
      %v1403 = vmul.f32 1.0, %v1402
      %1406 = vrot.lane.b32.xlu0 %v1382, 64
      %v1407 = vpop.permute.xlu0 %1406
      %1408 = vrot.lane.b32.xlu0 %v1387, 64
      %v1409 = vpop.permute.xlu0 %1408
      %v1412 = vmul.f32 %v1401, %v1407
      %v1413 = vmul.f32 %v1403, %v1409
      %1416 = vrot.lane.b32.xlu0 %v1412, 64
      %v1417 = vpop.permute.xlu0 %1416
      %1418 = vrot.lane.b32.xlu0 %v1413, 64
      %v1419 = vpop.permute.xlu0 %1418
      %v1422 = vadd.f32 %v1140, %v1417
      %v1423 = vadd.f32 %v1145, %v1419
      %v1424 = vtanh.pop %v1422
      %v1425 = vtanh.pop %v1423
      %v1426 = vsub.f32 1.0, %v1401
      %v1427 = vsub.f32 1.0, %v1403
      %1430 = vrot.lane.b32.xlu0 %v1424, 96
      %v1431 = vpop.permute.xlu0 %1430
      %1432 = vrot.lane.b32.xlu0 %v1425, 96
      %v1433 = vpop.permute.xlu0 %1432
      %v1436 = vmul.f32 %v1426, %v1431
      %v1437 = vmul.f32 %v1427, %v1433
      %v1438 = vmul.f32 %v1401, %v1303
      %v1439 = vmul.f32 %v1403, %v1304
      %v1440 = vadd.f32 %v1436, %v1438
      %v1441 = vadd.f32 %v1437, %v1439
      %1444 = vrot.lane.b32.xlu0 %v1440, 96
      %v1445 = vpop.permute.xlu0 %1444
      %1446 = vrot.lane.b32.xlu0 %v1441, 96
      %v1447 = vpop.permute.xlu0 %1446
      %v1448 = vsel %vm1174, %v1445, 0
      %v1450 = vsel %vm1174, %v1447, 0
      %1452 = vmatprep.subr.mxu0 0.0
      %1453 = vmatpush1.msra.mxu0 0.0
      %1454 = vmatprep.subr.mxu0 0.0
      %1455 = vmatpush1.msra.mxu0 0.0
      %1456 = vmatprep.subr.mxu0 0.0
      %1457 = vmatpush1.msra.mxu0 0.0
      %1458 = vmatprep.subr.mxu0 0.0
      %1459 = vmatpush1.msra.mxu0 0.0
      %1460 = vmatprep.subr.mxu0 0.0
      %1461 = vmatpush1.msra.mxu0 0.0
      %1462 = vmatprep.subr.mxu0 0.0
      %1463 = vmatpush1.msra.mxu0 0.0
      %1464 = vmatprep.subr.mxu0 0.0
      %1465 = vmatpush1.msra.mxu0 0.0
      %1466 = vmatprep.subr.mxu0 0.0
      %1467 = vmatpush1.msra.mxu0 0.0
      %1468 = vmatprep.subr.mxu0 0.0
      %1469 = vmatpush1.msra.mxu0 0.0
      %1470 = vmatprep.subr.mxu0 0.0
      %1471 = vmatpush1.msra.mxu0 0.0
      %1472 = vmatprep.subr.mxu0 0.0
      %1473 = vmatpush1.msra.mxu0 0.0
      %1474 = vmatprep.subr.mxu0 0.0
      %1475 = vmatpush1.msra.mxu0 0.0
      %1476 = vmatprep.subr.mxu0 0.0
      %1477 = vmatpush1.msra.mxu0 %v1029
      %1478 = vmatprep.subr.mxu0 0.0
      %1479 = vmatpush1.msra.mxu0 %v1028
      %1480 = vmatprep.subr.mxu0 0.0
      %1481 = vmatpush1.msra.mxu0 %v1027
      %1482 = vmatprep.subr.mxu0 0.0
      %1483 = vmatpush1.msra.mxu0 %v1026
      %1484 = vmatprep.subr.mxu0 0.0
      %1485 = vmatpush2.msra.mxu0 0.0
      %1486 = vmatprep.subr.mxu0 0.0
      %1487 = vmatpush2.msra.mxu0 0.0
      %1488 = vmatprep.subr.mxu0 0.0
      %1489 = vmatpush2.msra.mxu0 0.0
      %1490 = vmatprep.subr.mxu0 0.0
      %1491 = vmatpush2.msra.mxu0 0.0
      %1492 = vmatprep.subr.mxu0 0.0
      %1493 = vmatpush2.msra.mxu0 0.0
      %1494 = vmatprep.subr.mxu0 0.0
      %1495 = vmatpush2.msra.mxu0 0.0
      %1496 = vmatprep.subr.mxu0 0.0
      %1497 = vmatpush2.msra.mxu0 0.0
      %1498 = vmatprep.subr.mxu0 0.0
      %1499 = vmatpush2.msra.mxu0 0.0
      %1500 = vmatprep.subr.mxu0 0.0
      %1501 = vmatpush2.msra.mxu0 0.0
      %1502 = vmatprep.subr.mxu0 0.0
      %1503 = vmatpush2.msra.mxu0 0.0
      %1504 = vmatprep.subr.mxu0 0.0
      %1505 = vmatpush2.msra.mxu0 0.0
      %1506 = vmatprep.subr.mxu0 0.0
      %1507 = vmatpush2.msra.mxu0 0.0
      %1508 = vmatprep.subr.mxu0 0.0
      %1509 = vmatpush2.msra.mxu0 0.0
      %1510 = vmatprep.subr.mxu0 0.0
      %1511 = vmatpush2.msra.mxu0 0.0
      %1512 = vmatprep.subr.mxu0 0.0
      %1513 = vmatpush2.msra.mxu0 0.0
      %1514 = vmatprep.subr.mxu0 0.0
      %1515 = vmatpush2.msra.mxu0 0.0
      %1516 = vmatprep.mubr.f32.mxu0 0.0
      %1517 = vmatmul.mubr.f32.gmra.mxu0 %v1448
      %v1518 = vpop.f32.mrf.mxu0
      %v1519 = vadd.f32 %v1172, %v1518
      %v1520 = vpop.f32.mrf.mxu0
      %1521 = vmatprep.mubr.f32.mxu0 0.0
      %1522 = vmatmul.mubr.f32.gmra.mxu0 %v1450
      %v1523 = vpop.f32.mrf.mxu0
      %v1524 = vadd.f32 %v1172, %v1523
      %v1525 = vpop.f32.mrf.mxu0
      %1526 = vdwg.mxu0
      %v1527 = vadd.f32 %v1150, %v1519
      %v1528 = vadd.f32 %v1155, %v1524
      %v1529 = vxor.u32 %v1527, 2147483648
      %v1530 = vxor.u32 %v1528, 2147483648
      %v1531 = vmul.f32 %v1529, 1.442695
      %v1532 = vpow.pop %v1531
      %v1533 = vmul.f32 %v1530, 1.442695
      %v1534 = vpow.pop %v1533
      %v1535 = vadd.f32 %v1532, 1.0
      %v1536 = vadd.f32 %v1534, 1.0
      %v1537 = vrcp.pop %v1535
      %v1538 = vmul.f32 1.0, %v1537
      %v1539 = vrcp.pop %v1536
      %v1540 = vmul.f32 1.0, %v1539
      %1543 = vrot.lane.b32.xlu0 %v1519, 64
      %v1544 = vpop.permute.xlu0 %1543
      %1545 = vrot.lane.b32.xlu0 %v1524, 64
      %v1546 = vpop.permute.xlu0 %1545
      %v1549 = vmul.f32 %v1538, %v1544
      %v1550 = vmul.f32 %v1540, %v1546
      %1553 = vrot.lane.b32.xlu0 %v1549, 64
      %v1554 = vpop.permute.xlu0 %1553
      %1555 = vrot.lane.b32.xlu0 %v1550, 64
      %v1556 = vpop.permute.xlu0 %1555
      %v1559 = vadd.f32 %v1150, %v1554
      %v1560 = vadd.f32 %v1155, %v1556
      %v1561 = vtanh.pop %v1559
      %v1562 = vtanh.pop %v1560
      %v1563 = vsub.f32 1.0, %v1538
      %v1564 = vsub.f32 1.0, %v1540
      %1567 = vrot.lane.b32.xlu0 %v1561, 96
      %v1568 = vpop.permute.xlu0 %1567
      %1569 = vrot.lane.b32.xlu0 %v1562, 96
      %v1570 = vpop.permute.xlu0 %1569
      %v1573 = vmul.f32 %v1563, %v1568
      %v1574 = vmul.f32 %v1564, %v1570
      %v1575 = vmul.f32 %v1538, %v1440
      %v1576 = vmul.f32 %v1540, %v1441
      %v1577 = vadd.f32 %v1573, %v1575
      %v1578 = vadd.f32 %v1574, %v1576
      %1581 = vrot.lane.b32.xlu0 %v1577, 96
      %v1582 = vpop.permute.xlu0 %1581
      %1583 = vrot.lane.b32.xlu0 %v1578, 96
      %v1584 = vpop.permute.xlu0 %1583
      %v1585 = vsel %vm1174, %v1582, 0
      %v1587 = vsel %vm1174, %v1584, 0
      %1589 = vmatprep.subr.mxu0 0.0
      %1590 = vmatpush1.msra.mxu0 0.0
      %1591 = vmatprep.subr.mxu0 0.0
      %1592 = vmatpush1.msra.mxu0 0.0
      %1593 = vmatprep.subr.mxu0 0.0
      %1594 = vmatpush1.msra.mxu0 0.0
      %1595 = vmatprep.subr.mxu0 0.0
      %1596 = vmatpush1.msra.mxu0 0.0
      %1597 = vmatprep.subr.mxu0 0.0
      %1598 = vmatpush1.msra.mxu0 0.0
      %1599 = vmatprep.subr.mxu0 0.0
      %1600 = vmatpush1.msra.mxu0 0.0
      %1601 = vmatprep.subr.mxu0 0.0
      %1602 = vmatpush1.msra.mxu0 0.0
      %1603 = vmatprep.subr.mxu0 0.0
      %1604 = vmatpush1.msra.mxu0 0.0
      %1605 = vmatprep.subr.mxu0 0.0
      %1606 = vmatpush1.msra.mxu0 0.0
      %1607 = vmatprep.subr.mxu0 0.0
      %1608 = vmatpush1.msra.mxu0 0.0
      %1609 = vmatprep.subr.mxu0 0.0
      %1610 = vmatpush1.msra.mxu0 0.0
      %1611 = vmatprep.subr.mxu0 0.0
      %1612 = vmatpush1.msra.mxu0 0.0
      %1613 = vmatprep.subr.mxu0 0.0
      %1614 = vmatpush1.msra.mxu0 %v1029
      %1615 = vmatprep.subr.mxu0 0.0
      %1616 = vmatpush1.msra.mxu0 %v1028
      %1617 = vmatprep.subr.mxu0 0.0
      %1618 = vmatpush1.msra.mxu0 %v1027
      %1619 = vmatprep.subr.mxu0 0.0
      %1620 = vmatpush1.msra.mxu0 %v1026
      %1621 = vmatprep.subr.mxu0 0.0
      %1622 = vmatpush2.msra.mxu0 0.0
      %1623 = vmatprep.subr.mxu0 0.0
      %1624 = vmatpush2.msra.mxu0 0.0
      %1625 = vmatprep.subr.mxu0 0.0
      %1626 = vmatpush2.msra.mxu0 0.0
      %1627 = vmatprep.subr.mxu0 0.0
      %1628 = vmatpush2.msra.mxu0 0.0
      %1629 = vmatprep.subr.mxu0 0.0
      %1630 = vmatpush2.msra.mxu0 0.0
      %1631 = vmatprep.subr.mxu0 0.0
      %1632 = vmatpush2.msra.mxu0 0.0
      %1633 = vmatprep.subr.mxu0 0.0
      %1634 = vmatpush2.msra.mxu0 0.0
      %1635 = vmatprep.subr.mxu0 0.0
      %1636 = vmatpush2.msra.mxu0 0.0
      %1637 = vmatprep.subr.mxu0 0.0
      %1638 = vmatpush2.msra.mxu0 0.0
      %1639 = vmatprep.subr.mxu0 0.0
      %1640 = vmatpush2.msra.mxu0 0.0
      %1641 = vmatprep.subr.mxu0 0.0
      %1642 = vmatpush2.msra.mxu0 0.0
      %1643 = vmatprep.subr.mxu0 0.0
      %1644 = vmatpush2.msra.mxu0 0.0
      %1645 = vmatprep.subr.mxu0 0.0
      %1646 = vmatpush2.msra.mxu0 0.0
      %1647 = vmatprep.subr.mxu0 0.0
      %1648 = vmatpush2.msra.mxu0 0.0
      %1649 = vmatprep.subr.mxu0 0.0
      %1650 = vmatpush2.msra.mxu0 0.0
      %1651 = vmatprep.subr.mxu0 0.0
      %1652 = vmatpush2.msra.mxu0 0.0
      %1653 = vmatprep.mubr.f32.mxu0 0.0
      %1654 = vmatmul.mubr.f32.gmra.mxu0 %v1585
      %v1655 = vpop.f32.mrf.mxu0
      %v1656 = vadd.f32 %v1172, %v1655
      %v1657 = vpop.f32.mrf.mxu0
      %1658 = vmatprep.mubr.f32.mxu0 0.0
      %1659 = vmatmul.mubr.f32.gmra.mxu0 %v1587
      %v1660 = vpop.f32.mrf.mxu0
      %v1661 = vadd.f32 %v1172, %v1660
      %v1662 = vpop.f32.mrf.mxu0
      %1663 = vdwg.mxu0
      %v1664 = vadd.f32 %v1160, %v1656
      %v1665 = vadd.f32 %v1165, %v1661
      %v1666 = vxor.u32 %v1664, 2147483648
      %v1667 = vxor.u32 %v1665, 2147483648
      %v1668 = vmul.f32 %v1666, 1.442695
      %v1669 = vpow.pop %v1668
      %v1670 = vmul.f32 %v1667, 1.442695
      %v1671 = vpow.pop %v1670
      %v1672 = vadd.f32 %v1669, 1.0
      %v1673 = vadd.f32 %v1671, 1.0
      %v1674 = vrcp.pop %v1672
      %v1675 = vmul.f32 1.0, %v1674
      %v1676 = vrcp.pop %v1673
      %v1677 = vmul.f32 1.0, %v1676
      %1680 = vrot.lane.b32.xlu0 %v1656, 64
      %v1681 = vpop.permute.xlu0 %1680
      %1682 = vrot.lane.b32.xlu0 %v1661, 64
      %v1683 = vpop.permute.xlu0 %1682
      %v1686 = vmul.f32 %v1675, %v1681
      %v1687 = vmul.f32 %v1677, %v1683
      %1690 = vrot.lane.b32.xlu0 %v1686, 64
      %v1691 = vpop.permute.xlu0 %1690
      %1692 = vrot.lane.b32.xlu0 %v1687, 64
      %v1693 = vpop.permute.xlu0 %1692
      %v1696 = vadd.f32 %v1160, %v1691
      %v1697 = vadd.f32 %v1165, %v1693
      %v1698 = vtanh.pop %v1696
      %v1699 = vtanh.pop %v1697
      %v1700 = vsub.f32 1.0, %v1675
      %v1701 = vsub.f32 1.0, %v1677
      %1704 = vrot.lane.b32.xlu0 %v1698, 96
      %v1705 = vpop.permute.xlu0 %1704
      %1706 = vrot.lane.b32.xlu0 %v1699, 96
      %v1707 = vpop.permute.xlu0 %1706
      %v1710 = vmul.f32 %v1700, %v1705
      %v1711 = vmul.f32 %v1701, %v1707
      %v1712 = vmul.f32 %v1675, %v1577
      %v1713 = vmul.f32 %v1677, %v1578
      %v1714 = vadd.f32 %v1710, %v1712
      %v1715 = vadd.f32 %v1711, %v1713
      %1718 = vrot.lane.b32.xlu0 %v1577, 32
      %v1719 = vpop.permute.xlu0 %1718
      %1720 = vrot.lane.b32.xlu0 %v1578, 32
      %v1721 = vpop.permute.xlu0 %1720
      %1726 = vrot.lane.b32.xlu0 %v1714, 64
      %v1727 = vpop.permute.xlu0 %1726
      %1728 = vrot.lane.b32.xlu0 %v1715, 64
      %v1729 = vpop.permute.xlu0 %1728
      %v1732 = vsel %vm1174, %v1308, %v1440
      %v1733 = vsel %vm1174, %v1310, %v1441
      %vm1734 = vcmask 523264
      %v1735 = vsel %vm1734, %v1732, %v1719
      %v1736 = vsel %vm1734, %v1733, %v1721
      %vm1737 = vcmask 785408
      %v1738 = vsel %vm1737, %v1735, %v1727
      %v1739 = vsel %vm1737, %v1736, %v1729
      %v1740 = vld [vmem:[%s6] sm:$0xff]
      %v1741 = vld [vmem:[%s7] sm:$0xff]
      %v1742 = vld [vmem:[%s7 + $0x8] sm:$0xff]
      %v1743 = vld [vmem:[%s7 + $0x10] sm:$0xff]
      %v1744 = vld [vmem:[%s7 + $0x18] sm:$0xff]
      %v1745 = vld [vmem:[%s8] sm:$0x1]
      %v1746 = vld [vmem:[%s9] sm:$0x1]
      %v1748 = vlaneseq
      %v1749 = vshrl.u32 %v1748, 7
      %v1750 = vsub.s32 0, %v1749
      %v1751 = vrot.slane %v1745, %v1750
      %1753 = vmatprep.subr.mxu0 0.0
      %1754 = vmatpush1.msra.mxu0 0.0
      %1755 = vmatprep.subr.mxu0 0.0
      %1756 = vmatpush1.msra.mxu0 0.0
      %1757 = vmatprep.subr.mxu0 0.0
      %1758 = vmatpush1.msra.mxu0 0.0
      %1759 = vmatprep.subr.mxu0 0.0
      %1760 = vmatpush1.msra.mxu0 0.0
      %1761 = vmatprep.subr.mxu0 0.0
      %1762 = vmatpush1.msra.mxu0 0.0
      %1763 = vmatprep.subr.mxu0 0.0
      %1764 = vmatpush1.msra.mxu0 0.0
      %1765 = vmatprep.subr.mxu0 0.0
      %1766 = vmatpush1.msra.mxu0 0.0
      %1767 = vmatprep.subr.mxu0 0.0
      %1768 = vmatpush1.msra.mxu0 0.0
      %1769 = vmatprep.subr.mxu0 0.0
      %1770 = vmatpush1.msra.mxu0 0.0
      %1771 = vmatprep.subr.mxu0 0.0
      %1772 = vmatpush1.msra.mxu0 0.0
      %1773 = vmatprep.subr.mxu0 0.0
      %1774 = vmatpush1.msra.mxu0 0.0
      %1775 = vmatprep.subr.mxu0 0.0
      %1776 = vmatpush1.msra.mxu0 0.0
      %1777 = vmatprep.subr.mxu0 0.0
      %1778 = vmatpush1.msra.mxu0 0.0
      %1779 = vmatprep.subr.mxu0 0.0
      %1780 = vmatpush1.msra.mxu0 0.0
      %1781 = vmatprep.subr.mxu0 0.0
      %1782 = vmatpush1.msra.mxu0 0.0
      %1783 = vmatprep.subr.mxu0 0.0
      %1784 = vmatpush1.msra.mxu0 %v1740
      %1785 = vmatprep.subr.mxu0 0.0
      %1786 = vmatpush2.msra.mxu0 0.0
      %1787 = vmatprep.subr.mxu0 0.0
      %1788 = vmatpush2.msra.mxu0 0.0
      %1789 = vmatprep.subr.mxu0 0.0
      %1790 = vmatpush2.msra.mxu0 0.0
      %1791 = vmatprep.subr.mxu0 0.0
      %1792 = vmatpush2.msra.mxu0 0.0
      %1793 = vmatprep.subr.mxu0 0.0
      %1794 = vmatpush2.msra.mxu0 0.0
      %1795 = vmatprep.subr.mxu0 0.0
      %1796 = vmatpush2.msra.mxu0 0.0
      %1797 = vmatprep.subr.mxu0 0.0
      %1798 = vmatpush2.msra.mxu0 0.0
      %1799 = vmatprep.subr.mxu0 0.0
      %1800 = vmatpush2.msra.mxu0 0.0
      %1801 = vmatprep.subr.mxu0 0.0
      %1802 = vmatpush2.msra.mxu0 0.0
      %1803 = vmatprep.subr.mxu0 0.0
      %1804 = vmatpush2.msra.mxu0 0.0
      %1805 = vmatprep.subr.mxu0 0.0
      %1806 = vmatpush2.msra.mxu0 0.0
      %1807 = vmatprep.subr.mxu0 0.0
      %1808 = vmatpush2.msra.mxu0 0.0
      %1809 = vmatprep.subr.mxu0 0.0
      %1810 = vmatpush2.msra.mxu0 0.0
      %1811 = vmatprep.subr.mxu0 0.0
      %1812 = vmatpush2.msra.mxu0 0.0
      %1813 = vmatprep.subr.mxu0 0.0
      %1814 = vmatpush2.msra.mxu0 0.0
      %1815 = vmatprep.subr.mxu0 0.0
      %1816 = vmatpush2.msra.mxu0 0.0
      %1817 = vmatprep.mubr.f32.mxu0 0.0
      %1818 = vmatmul.mubr.f32.gmra.mxu0 %v1040
      %v1819 = vpop.f32.mrf.mxu0
      %v1820 = vadd.f32 %v1751, %v1819
      %v1821 = vpop.f32.mrf.mxu0
      %1822 = vmatprep.mubr.f32.mxu0 0.0
      %1823 = vmatmul.mubr.f32.gmra.mxu0 %v1043
      %v1824 = vpop.f32.mrf.mxu0
      %v1825 = vadd.f32 %v1751, %v1824
      %v1826 = vpop.f32.mrf.mxu0
      %1827 = vmatprep.mubr.f32.mxu0 0.0
      %1828 = vmatmul.mubr.f32.gmra.mxu0 %v1046
      %v1829 = vpop.f32.mrf.mxu0
      %v1830 = vadd.f32 %v1751, %v1829
      %v1831 = vpop.f32.mrf.mxu0
      %1832 = vmatprep.mubr.f32.mxu0 0.0
      %1833 = vmatmul.mubr.f32.gmra.mxu0 %v1049
      %v1834 = vpop.f32.mrf.mxu0
      %v1835 = vadd.f32 %v1751, %v1834
      %v1836 = vpop.f32.mrf.mxu0
      %1837 = vmatprep.mubr.f32.mxu0 0.0
      %1838 = vmatmul.mubr.f32.gmra.mxu0 %v1052
      %v1839 = vpop.f32.mrf.mxu0
      %v1840 = vadd.f32 %v1751, %v1839
      %v1841 = vpop.f32.mrf.mxu0
      %1842 = vmatprep.mubr.f32.mxu0 0.0
      %1843 = vmatmul.mubr.f32.gmra.mxu0 %v1055
      %v1844 = vpop.f32.mrf.mxu0
      %v1845 = vadd.f32 %v1751, %v1844
      %v1846 = vpop.f32.mrf.mxu0
      %1847 = vmatprep.mubr.f32.mxu0 0.0
      %1848 = vmatmul.mubr.f32.gmra.mxu0 %v1058
      %v1849 = vpop.f32.mrf.mxu0
      %v1850 = vadd.f32 %v1751, %v1849
      %v1851 = vpop.f32.mrf.mxu0
      %1852 = vmatprep.mubr.f32.mxu0 0.0
      %1853 = vmatmul.mubr.f32.gmra.mxu0 %v1061
      %v1854 = vpop.f32.mrf.mxu0
      %v1855 = vadd.f32 %v1751, %v1854
      %v1856 = vpop.f32.mrf.mxu0
      %1857 = vdwg.mxu0
      %v1859 = vlaneseq
      %v1860 = vshrl.u32 %v1859, 7
      %v1861 = vsub.s32 0, %v1860
      %v1862 = vrot.slane %v1746, %v1861
      %1864 = vmatprep.subr.mxu0 0.0
      %1865 = vmatpush1.msra.mxu0 0.0
      %1866 = vmatprep.subr.mxu0 0.0
      %1867 = vmatpush1.msra.mxu0 0.0
      %1868 = vmatprep.subr.mxu0 0.0
      %1869 = vmatpush1.msra.mxu0 0.0
      %1870 = vmatprep.subr.mxu0 0.0
      %1871 = vmatpush1.msra.mxu0 0.0
      %1872 = vmatprep.subr.mxu0 0.0
      %1873 = vmatpush1.msra.mxu0 0.0
      %1874 = vmatprep.subr.mxu0 0.0
      %1875 = vmatpush1.msra.mxu0 0.0
      %1876 = vmatprep.subr.mxu0 0.0
      %1877 = vmatpush1.msra.mxu0 0.0
      %1878 = vmatprep.subr.mxu0 0.0
      %1879 = vmatpush1.msra.mxu0 0.0
      %1880 = vmatprep.subr.mxu0 0.0
      %1881 = vmatpush1.msra.mxu0 0.0
      %1882 = vmatprep.subr.mxu0 0.0
      %1883 = vmatpush1.msra.mxu0 0.0
      %1884 = vmatprep.subr.mxu0 0.0
      %1885 = vmatpush1.msra.mxu0 0.0
      %1886 = vmatprep.subr.mxu0 0.0
      %1887 = vmatpush1.msra.mxu0 0.0
      %1888 = vmatprep.subr.mxu0 0.0
      %1889 = vmatpush1.msra.mxu0 %v1744
      %1890 = vmatprep.subr.mxu0 0.0
      %1891 = vmatpush1.msra.mxu0 %v1743
      %1892 = vmatprep.subr.mxu0 0.0
      %1893 = vmatpush1.msra.mxu0 %v1742
      %1894 = vmatprep.subr.mxu0 0.0
      %1895 = vmatpush1.msra.mxu0 %v1741
      %1896 = vmatprep.subr.mxu0 0.0
      %1897 = vmatpush2.msra.mxu0 0.0
      %1898 = vmatprep.subr.mxu0 0.0
      %1899 = vmatpush2.msra.mxu0 0.0
      %1900 = vmatprep.subr.mxu0 0.0
      %1901 = vmatpush2.msra.mxu0 0.0
      %1902 = vmatprep.subr.mxu0 0.0
      %1903 = vmatpush2.msra.mxu0 0.0
      %1904 = vmatprep.subr.mxu0 0.0
      %1905 = vmatpush2.msra.mxu0 0.0
      %1906 = vmatprep.subr.mxu0 0.0
      %1907 = vmatpush2.msra.mxu0 0.0
      %1908 = vmatprep.subr.mxu0 0.0
      %1909 = vmatpush2.msra.mxu0 0.0
      %1910 = vmatprep.subr.mxu0 0.0
      %1911 = vmatpush2.msra.mxu0 0.0
      %1912 = vmatprep.subr.mxu0 0.0
      %1913 = vmatpush2.msra.mxu0 0.0
      %1914 = vmatprep.subr.mxu0 0.0
      %1915 = vmatpush2.msra.mxu0 0.0
      %1916 = vmatprep.subr.mxu0 0.0
      %1917 = vmatpush2.msra.mxu0 0.0
      %1918 = vmatprep.subr.mxu0 0.0
      %1919 = vmatpush2.msra.mxu0 0.0
      %1920 = vmatprep.subr.mxu0 0.0
      %1921 = vmatpush2.msra.mxu0 0.0
      %1922 = vmatprep.subr.mxu0 0.0
      %1923 = vmatpush2.msra.mxu0 0.0
      %1924 = vmatprep.subr.mxu0 0.0
      %1925 = vmatpush2.msra.mxu0 0.0
      %1926 = vmatprep.subr.mxu0 0.0
      %1927 = vmatpush2.msra.mxu0 0.0
      %1928 = vmatprep.mubr.f32.mxu0 0.0
      %1929 = vmatmul.mubr.f32.gmra.mxu0 %v1176
      %v1930 = vpop.f32.mrf.mxu0
      %v1931 = vadd.f32 %v1862, %v1930
      %v1932 = vpop.f32.mrf.mxu0
      %1933 = vmatprep.mubr.f32.mxu0 0.0
      %1934 = vmatmul.mubr.f32.gmra.mxu0 %v1176
      %v1935 = vpop.f32.mrf.mxu0
      %v1936 = vadd.f32 %v1862, %v1935
      %v1937 = vpop.f32.mrf.mxu0
      %1938 = vdwg.mxu0
      %v1939 = vadd.f32 %v1820, %v1931
      %v1940 = vadd.f32 %v1825, %v1936
      %v1941 = vxor.u32 %v1939, 2147483648
      %v1942 = vxor.u32 %v1940, 2147483648
      %v1943 = vmul.f32 %v1941, 1.442695
      %v1944 = vpow.pop %v1943
      %v1945 = vmul.f32 %v1942, 1.442695
      %v1946 = vpow.pop %v1945
      %v1947 = vadd.f32 %v1944, 1.0
      %v1948 = vadd.f32 %v1946, 1.0
      %v1949 = vrcp.pop %v1947
      %v1950 = vmul.f32 1.0, %v1949
      %v1951 = vrcp.pop %v1948
      %v1952 = vmul.f32 1.0, %v1951
      %1955 = vrot.lane.b32.xlu0 %v1931, 64
      %v1956 = vpop.permute.xlu0 %1955
      %1957 = vrot.lane.b32.xlu0 %v1936, 64
      %v1958 = vpop.permute.xlu0 %1957
      %v1961 = vmul.f32 %v1950, %v1956
      %v1962 = vmul.f32 %v1952, %v1958
      %1965 = vrot.lane.b32.xlu0 %v1961, 64
      %v1966 = vpop.permute.xlu0 %1965
      %1967 = vrot.lane.b32.xlu0 %v1962, 64
      %v1968 = vpop.permute.xlu0 %1967
      %v1971 = vadd.f32 %v1820, %v1966
      %v1972 = vadd.f32 %v1825, %v1968
      %v1973 = vtanh.pop %v1971
      %v1974 = vtanh.pop %v1972
      %v1975 = vsub.f32 1.0, %v1950
      %v1976 = vsub.f32 1.0, %v1952
      %1979 = vrot.lane.b32.xlu0 %v1973, 96
      %v1980 = vpop.permute.xlu0 %1979
      %1981 = vrot.lane.b32.xlu0 %v1974, 96
      %v1982 = vpop.permute.xlu0 %1981
      %v1985 = vmul.f32 %v1975, %v1980
      %v1986 = vmul.f32 %v1976, %v1982
      %v1987 = vmul.f32 %v1950, 0.0
      %v1988 = vmul.f32 %v1952, 0.0
      %v1989 = vadd.f32 %v1985, %v1987
      %v1990 = vadd.f32 %v1986, %v1988
      %1993 = vrot.lane.b32.xlu0 %v1989, 96
      %v1994 = vpop.permute.xlu0 %1993
      %1995 = vrot.lane.b32.xlu0 %v1990, 96
      %v1996 = vpop.permute.xlu0 %1995
      %v1997 = vsel %vm1174, %v1994, 0
      %v1999 = vsel %vm1174, %v1996, 0
      %2001 = vmatprep.subr.mxu0 0.0
      %2002 = vmatpush1.msra.mxu0 0.0
      %2003 = vmatprep.subr.mxu0 0.0
      %2004 = vmatpush1.msra.mxu0 0.0
      %2005 = vmatprep.subr.mxu0 0.0
      %2006 = vmatpush1.msra.mxu0 0.0
      %2007 = vmatprep.subr.mxu0 0.0
      %2008 = vmatpush1.msra.mxu0 0.0
      %2009 = vmatprep.subr.mxu0 0.0
      %2010 = vmatpush1.msra.mxu0 0.0
      %2011 = vmatprep.subr.mxu0 0.0
      %2012 = vmatpush1.msra.mxu0 0.0
      %2013 = vmatprep.subr.mxu0 0.0
      %2014 = vmatpush1.msra.mxu0 0.0
      %2015 = vmatprep.subr.mxu0 0.0
      %2016 = vmatpush1.msra.mxu0 0.0
      %2017 = vmatprep.subr.mxu0 0.0
      %2018 = vmatpush1.msra.mxu0 0.0
      %2019 = vmatprep.subr.mxu0 0.0
      %2020 = vmatpush1.msra.mxu0 0.0
      %2021 = vmatprep.subr.mxu0 0.0
      %2022 = vmatpush1.msra.mxu0 0.0
      %2023 = vmatprep.subr.mxu0 0.0
      %2024 = vmatpush1.msra.mxu0 0.0
      %2025 = vmatprep.subr.mxu0 0.0
      %2026 = vmatpush1.msra.mxu0 %v1744
      %2027 = vmatprep.subr.mxu0 0.0
      %2028 = vmatpush1.msra.mxu0 %v1743
      %2029 = vmatprep.subr.mxu0 0.0
      %2030 = vmatpush1.msra.mxu0 %v1742
      %2031 = vmatprep.subr.mxu0 0.0
      %2032 = vmatpush1.msra.mxu0 %v1741
      %2033 = vmatprep.subr.mxu0 0.0
      %2034 = vmatpush2.msra.mxu0 0.0
      %2035 = vmatprep.subr.mxu0 0.0
      %2036 = vmatpush2.msra.mxu0 0.0
      %2037 = vmatprep.subr.mxu0 0.0
      %2038 = vmatpush2.msra.mxu0 0.0
      %2039 = vmatprep.subr.mxu0 0.0
      %2040 = vmatpush2.msra.mxu0 0.0
      %2041 = vmatprep.subr.mxu0 0.0
      %2042 = vmatpush2.msra.mxu0 0.0
      %2043 = vmatprep.subr.mxu0 0.0
      %2044 = vmatpush2.msra.mxu0 0.0
      %2045 = vmatprep.subr.mxu0 0.0
      %2046 = vmatpush2.msra.mxu0 0.0
      %2047 = vmatprep.subr.mxu0 0.0
      %2048 = vmatpush2.msra.mxu0 0.0
      %2049 = vmatprep.subr.mxu0 0.0
      %2050 = vmatpush2.msra.mxu0 0.0
      %2051 = vmatprep.subr.mxu0 0.0
      %2052 = vmatpush2.msra.mxu0 0.0
      %2053 = vmatprep.subr.mxu0 0.0
      %2054 = vmatpush2.msra.mxu0 0.0
      %2055 = vmatprep.subr.mxu0 0.0
      %2056 = vmatpush2.msra.mxu0 0.0
      %2057 = vmatprep.subr.mxu0 0.0
      %2058 = vmatpush2.msra.mxu0 0.0
      %2059 = vmatprep.subr.mxu0 0.0
      %2060 = vmatpush2.msra.mxu0 0.0
      %2061 = vmatprep.subr.mxu0 0.0
      %2062 = vmatpush2.msra.mxu0 0.0
      %2063 = vmatprep.subr.mxu0 0.0
      %2064 = vmatpush2.msra.mxu0 0.0
      %2065 = vmatprep.mubr.f32.mxu0 0.0
      %2066 = vmatmul.mubr.f32.gmra.mxu0 %v1997
      %v2067 = vpop.f32.mrf.mxu0
      %v2068 = vadd.f32 %v1862, %v2067
      %v2069 = vpop.f32.mrf.mxu0
      %2070 = vmatprep.mubr.f32.mxu0 0.0
      %2071 = vmatmul.mubr.f32.gmra.mxu0 %v1999
      %v2072 = vpop.f32.mrf.mxu0
      %v2073 = vadd.f32 %v1862, %v2072
      %v2074 = vpop.f32.mrf.mxu0
      %2075 = vdwg.mxu0
      %v2076 = vadd.f32 %v1830, %v2068
      %v2077 = vadd.f32 %v1835, %v2073
      %v2078 = vxor.u32 %v2076, 2147483648
      %v2079 = vxor.u32 %v2077, 2147483648
      %v2080 = vmul.f32 %v2078, 1.442695
      %v2081 = vpow.pop %v2080
      %v2082 = vmul.f32 %v2079, 1.442695
      %v2083 = vpow.pop %v2082
      %v2084 = vadd.f32 %v2081, 1.0
      %v2085 = vadd.f32 %v2083, 1.0
      %v2086 = vrcp.pop %v2084
      %v2087 = vmul.f32 1.0, %v2086
      %v2088 = vrcp.pop %v2085
      %v2089 = vmul.f32 1.0, %v2088
      %2092 = vrot.lane.b32.xlu0 %v2068, 64
      %v2093 = vpop.permute.xlu0 %2092
      %2094 = vrot.lane.b32.xlu0 %v2073, 64
      %v2095 = vpop.permute.xlu0 %2094
      %v2098 = vmul.f32 %v2087, %v2093
      %v2099 = vmul.f32 %v2089, %v2095
      %2102 = vrot.lane.b32.xlu0 %v2098, 64
      %v2103 = vpop.permute.xlu0 %2102
      %2104 = vrot.lane.b32.xlu0 %v2099, 64
      %v2105 = vpop.permute.xlu0 %2104
      %v2108 = vadd.f32 %v1830, %v2103
      %v2109 = vadd.f32 %v1835, %v2105
      %v2110 = vtanh.pop %v2108
      %v2111 = vtanh.pop %v2109
      %v2112 = vsub.f32 1.0, %v2087
      %v2113 = vsub.f32 1.0, %v2089
      %2116 = vrot.lane.b32.xlu0 %v2110, 96
      %v2117 = vpop.permute.xlu0 %2116
      %2118 = vrot.lane.b32.xlu0 %v2111, 96
      %v2119 = vpop.permute.xlu0 %2118
      %v2122 = vmul.f32 %v2112, %v2117
      %v2123 = vmul.f32 %v2113, %v2119
      %v2124 = vmul.f32 %v2087, %v1989
      %v2125 = vmul.f32 %v2089, %v1990
      %v2126 = vadd.f32 %v2122, %v2124
      %v2127 = vadd.f32 %v2123, %v2125
      %2130 = vrot.lane.b32.xlu0 %v2126, 96
      %v2131 = vpop.permute.xlu0 %2130
      %2132 = vrot.lane.b32.xlu0 %v2127, 96
      %v2133 = vpop.permute.xlu0 %2132
      %v2134 = vsel %vm1174, %v2131, 0
      %v2136 = vsel %vm1174, %v2133, 0
      %2138 = vmatprep.subr.mxu0 0.0
      %2139 = vmatpush1.msra.mxu0 0.0
      %2140 = vmatprep.subr.mxu0 0.0
      %2141 = vmatpush1.msra.mxu0 0.0
      %2142 = vmatprep.subr.mxu0 0.0
      %2143 = vmatpush1.msra.mxu0 0.0
      %2144 = vmatprep.subr.mxu0 0.0
      %2145 = vmatpush1.msra.mxu0 0.0
      %2146 = vmatprep.subr.mxu0 0.0
      %2147 = vmatpush1.msra.mxu0 0.0
      %2148 = vmatprep.subr.mxu0 0.0
      %2149 = vmatpush1.msra.mxu0 0.0
      %2150 = vmatprep.subr.mxu0 0.0
      %2151 = vmatpush1.msra.mxu0 0.0
      %2152 = vmatprep.subr.mxu0 0.0
      %2153 = vmatpush1.msra.mxu0 0.0
      %2154 = vmatprep.subr.mxu0 0.0
      %2155 = vmatpush1.msra.mxu0 0.0
      %2156 = vmatprep.subr.mxu0 0.0
      %2157 = vmatpush1.msra.mxu0 0.0
      %2158 = vmatprep.subr.mxu0 0.0
      %2159 = vmatpush1.msra.mxu0 0.0
      %2160 = vmatprep.subr.mxu0 0.0
      %2161 = vmatpush1.msra.mxu0 0.0
      %2162 = vmatprep.subr.mxu0 0.0
      %2163 = vmatpush1.msra.mxu0 %v1744
      %2164 = vmatprep.subr.mxu0 0.0
      %2165 = vmatpush1.msra.mxu0 %v1743
      %2166 = vmatprep.subr.mxu0 0.0
      %2167 = vmatpush1.msra.mxu0 %v1742
      %2168 = vmatprep.subr.mxu0 0.0
      %2169 = vmatpush1.msra.mxu0 %v1741
      %2170 = vmatprep.subr.mxu0 0.0
      %2171 = vmatpush2.msra.mxu0 0.0
      %2172 = vmatprep.subr.mxu0 0.0
      %2173 = vmatpush2.msra.mxu0 0.0
      %2174 = vmatprep.subr.mxu0 0.0
      %2175 = vmatpush2.msra.mxu0 0.0
      %2176 = vmatprep.subr.mxu0 0.0
      %2177 = vmatpush2.msra.mxu0 0.0
      %2178 = vmatprep.subr.mxu0 0.0
      %2179 = vmatpush2.msra.mxu0 0.0
      %2180 = vmatprep.subr.mxu0 0.0
      %2181 = vmatpush2.msra.mxu0 0.0
      %2182 = vmatprep.subr.mxu0 0.0
      %2183 = vmatpush2.msra.mxu0 0.0
      %2184 = vmatprep.subr.mxu0 0.0
      %2185 = vmatpush2.msra.mxu0 0.0
      %2186 = vmatprep.subr.mxu0 0.0
      %2187 = vmatpush2.msra.mxu0 0.0
      %2188 = vmatprep.subr.mxu0 0.0
      %2189 = vmatpush2.msra.mxu0 0.0
      %2190 = vmatprep.subr.mxu0 0.0
      %2191 = vmatpush2.msra.mxu0 0.0
      %2192 = vmatprep.subr.mxu0 0.0
      %2193 = vmatpush2.msra.mxu0 0.0
      %2194 = vmatprep.subr.mxu0 0.0
      %2195 = vmatpush2.msra.mxu0 0.0
      %2196 = vmatprep.subr.mxu0 0.0
      %2197 = vmatpush2.msra.mxu0 0.0
      %2198 = vmatprep.subr.mxu0 0.0
      %2199 = vmatpush2.msra.mxu0 0.0
      %2200 = vmatprep.subr.mxu0 0.0
      %2201 = vmatpush2.msra.mxu0 0.0
      %2202 = vmatprep.mubr.f32.mxu0 0.0
      %2203 = vmatmul.mubr.f32.gmra.mxu0 %v2134
      %v2204 = vpop.f32.mrf.mxu0
      %v2205 = vadd.f32 %v1862, %v2204
      %v2206 = vpop.f32.mrf.mxu0
      %2207 = vmatprep.mubr.f32.mxu0 0.0
      %2208 = vmatmul.mubr.f32.gmra.mxu0 %v2136
      %v2209 = vpop.f32.mrf.mxu0
      %v2210 = vadd.f32 %v1862, %v2209
      %v2211 = vpop.f32.mrf.mxu0
      %2212 = vdwg.mxu0
      %v2213 = vadd.f32 %v1840, %v2205
      %v2214 = vadd.f32 %v1845, %v2210
      %v2215 = vxor.u32 %v2213, 2147483648
      %v2216 = vxor.u32 %v2214, 2147483648
      %v2217 = vmul.f32 %v2215, 1.442695
      %v2218 = vpow.pop %v2217
      %v2219 = vmul.f32 %v2216, 1.442695
      %v2220 = vpow.pop %v2219
      %v2221 = vadd.f32 %v2218, 1.0
      %v2222 = vadd.f32 %v2220, 1.0
      %v2223 = vrcp.pop %v2221
      %v2224 = vmul.f32 1.0, %v2223
      %v2225 = vrcp.pop %v2222
      %v2226 = vmul.f32 1.0, %v2225
      %2229 = vrot.lane.b32.xlu0 %v2205, 64
      %v2230 = vpop.permute.xlu0 %2229
      %2231 = vrot.lane.b32.xlu0 %v2210, 64
      %v2232 = vpop.permute.xlu0 %2231
      %v2235 = vmul.f32 %v2224, %v2230
      %v2236 = vmul.f32 %v2226, %v2232
      %2239 = vrot.lane.b32.xlu0 %v2235, 64
      %v2240 = vpop.permute.xlu0 %2239
      %2241 = vrot.lane.b32.xlu0 %v2236, 64
      %v2242 = vpop.permute.xlu0 %2241
      %v2245 = vadd.f32 %v1840, %v2240
      %v2246 = vadd.f32 %v1845, %v2242
      %v2247 = vtanh.pop %v2245
      %v2248 = vtanh.pop %v2246
      %v2249 = vsub.f32 1.0, %v2224
      %v2250 = vsub.f32 1.0, %v2226
      %2253 = vrot.lane.b32.xlu0 %v2247, 96
      %v2254 = vpop.permute.xlu0 %2253
      %2255 = vrot.lane.b32.xlu0 %v2248, 96
      %v2256 = vpop.permute.xlu0 %2255
      %v2259 = vmul.f32 %v2249, %v2254
      %v2260 = vmul.f32 %v2250, %v2256
      %v2261 = vmul.f32 %v2224, %v2126
      %v2262 = vmul.f32 %v2226, %v2127
      %v2263 = vadd.f32 %v2259, %v2261
      %v2264 = vadd.f32 %v2260, %v2262
      %2267 = vrot.lane.b32.xlu0 %v2263, 96
      %v2268 = vpop.permute.xlu0 %2267
      %2269 = vrot.lane.b32.xlu0 %v2264, 96
      %v2270 = vpop.permute.xlu0 %2269
      %v2271 = vsel %vm1174, %v2268, 0
      %v2273 = vsel %vm1174, %v2270, 0
      %2275 = vmatprep.subr.mxu0 0.0
      %2276 = vmatpush1.msra.mxu0 0.0
      %2277 = vmatprep.subr.mxu0 0.0
      %2278 = vmatpush1.msra.mxu0 0.0
      %2279 = vmatprep.subr.mxu0 0.0
      %2280 = vmatpush1.msra.mxu0 0.0
      %2281 = vmatprep.subr.mxu0 0.0
      %2282 = vmatpush1.msra.mxu0 0.0
      %2283 = vmatprep.subr.mxu0 0.0
      %2284 = vmatpush1.msra.mxu0 0.0
      %2285 = vmatprep.subr.mxu0 0.0
      %2286 = vmatpush1.msra.mxu0 0.0
      %2287 = vmatprep.subr.mxu0 0.0
      %2288 = vmatpush1.msra.mxu0 0.0
      %2289 = vmatprep.subr.mxu0 0.0
      %2290 = vmatpush1.msra.mxu0 0.0
      %2291 = vmatprep.subr.mxu0 0.0
      %2292 = vmatpush1.msra.mxu0 0.0
      %2293 = vmatprep.subr.mxu0 0.0
      %2294 = vmatpush1.msra.mxu0 0.0
      %2295 = vmatprep.subr.mxu0 0.0
      %2296 = vmatpush1.msra.mxu0 0.0
      %2297 = vmatprep.subr.mxu0 0.0
      %2298 = vmatpush1.msra.mxu0 0.0
      %2299 = vmatprep.subr.mxu0 0.0
      %2300 = vmatpush1.msra.mxu0 %v1744
      %2301 = vmatprep.subr.mxu0 0.0
      %2302 = vmatpush1.msra.mxu0 %v1743
      %2303 = vmatprep.subr.mxu0 0.0
      %2304 = vmatpush1.msra.mxu0 %v1742
      %2305 = vmatprep.subr.mxu0 0.0
      %2306 = vmatpush1.msra.mxu0 %v1741
      %2307 = vmatprep.subr.mxu0 0.0
      %2308 = vmatpush2.msra.mxu0 0.0
      %2309 = vmatprep.subr.mxu0 0.0
      %2310 = vmatpush2.msra.mxu0 0.0
      %2311 = vmatprep.subr.mxu0 0.0
      %2312 = vmatpush2.msra.mxu0 0.0
      %2313 = vmatprep.subr.mxu0 0.0
      %2314 = vmatpush2.msra.mxu0 0.0
      %2315 = vmatprep.subr.mxu0 0.0
      %2316 = vmatpush2.msra.mxu0 0.0
      %2317 = vmatprep.subr.mxu0 0.0
      %2318 = vmatpush2.msra.mxu0 0.0
      %2319 = vmatprep.subr.mxu0 0.0
      %2320 = vmatpush2.msra.mxu0 0.0
      %2321 = vmatprep.subr.mxu0 0.0
      %2322 = vmatpush2.msra.mxu0 0.0
      %2323 = vmatprep.subr.mxu0 0.0
      %2324 = vmatpush2.msra.mxu0 0.0
      %2325 = vmatprep.subr.mxu0 0.0
      %2326 = vmatpush2.msra.mxu0 0.0
      %2327 = vmatprep.subr.mxu0 0.0
      %2328 = vmatpush2.msra.mxu0 0.0
      %2329 = vmatprep.subr.mxu0 0.0
      %2330 = vmatpush2.msra.mxu0 0.0
      %2331 = vmatprep.subr.mxu0 0.0
      %2332 = vmatpush2.msra.mxu0 0.0
      %2333 = vmatprep.subr.mxu0 0.0
      %2334 = vmatpush2.msra.mxu0 0.0
      %2335 = vmatprep.subr.mxu0 0.0
      %2336 = vmatpush2.msra.mxu0 0.0
      %2337 = vmatprep.subr.mxu0 0.0
      %2338 = vmatpush2.msra.mxu0 0.0
      %2339 = vmatprep.mubr.f32.mxu0 0.0
      %2340 = vmatmul.mubr.f32.gmra.mxu0 %v2271
      %v2341 = vpop.f32.mrf.mxu0
      %v2342 = vadd.f32 %v1862, %v2341
      %v2343 = vpop.f32.mrf.mxu0
      %2344 = vmatprep.mubr.f32.mxu0 0.0
      %2345 = vmatmul.mubr.f32.gmra.mxu0 %v2273
      %v2346 = vpop.f32.mrf.mxu0
      %v2347 = vadd.f32 %v1862, %v2346
      %v2348 = vpop.f32.mrf.mxu0
      %2349 = vdwg.mxu0
      %v2350 = vadd.f32 %v1850, %v2342
      %v2351 = vadd.f32 %v1855, %v2347
      %v2352 = vxor.u32 %v2350, 2147483648
      %v2353 = vxor.u32 %v2351, 2147483648
      %v2354 = vmul.f32 %v2352, 1.442695
      %v2355 = vpow.pop %v2354
      %v2356 = vmul.f32 %v2353, 1.442695
      %v2357 = vpow.pop %v2356
      %v2358 = vadd.f32 %v2355, 1.0
      %v2359 = vadd.f32 %v2357, 1.0
      %v2360 = vrcp.pop %v2358
      %v2361 = vmul.f32 1.0, %v2360
      %v2362 = vrcp.pop %v2359
      %v2363 = vmul.f32 1.0, %v2362
      %2366 = vrot.lane.b32.xlu0 %v2342, 64
      %v2367 = vpop.permute.xlu0 %2366
      %2368 = vrot.lane.b32.xlu0 %v2347, 64
      %v2369 = vpop.permute.xlu0 %2368
      %v2372 = vmul.f32 %v2361, %v2367
      %v2373 = vmul.f32 %v2363, %v2369
      %2376 = vrot.lane.b32.xlu0 %v2372, 64
      %v2377 = vpop.permute.xlu0 %2376
      %2378 = vrot.lane.b32.xlu0 %v2373, 64
      %v2379 = vpop.permute.xlu0 %2378
      %v2382 = vadd.f32 %v1850, %v2377
      %v2383 = vadd.f32 %v1855, %v2379
      %v2384 = vtanh.pop %v2382
      %v2385 = vtanh.pop %v2383
      %v2386 = vsub.f32 1.0, %v2361
      %v2387 = vsub.f32 1.0, %v2363
      %2390 = vrot.lane.b32.xlu0 %v2384, 96
      %v2391 = vpop.permute.xlu0 %2390
      %2392 = vrot.lane.b32.xlu0 %v2385, 96
      %v2393 = vpop.permute.xlu0 %2392
      %v2396 = vmul.f32 %v2386, %v2391
      %v2397 = vmul.f32 %v2387, %v2393
      %v2398 = vmul.f32 %v2361, %v2263
      %v2399 = vmul.f32 %v2363, %v2264
      %v2400 = vadd.f32 %v2396, %v2398
      %v2401 = vadd.f32 %v2397, %v2399
      %2404 = vrot.lane.b32.xlu0 %v2263, 32
      %v2405 = vpop.permute.xlu0 %2404
      %2406 = vrot.lane.b32.xlu0 %v2264, 32
      %v2407 = vpop.permute.xlu0 %2406
      %2412 = vrot.lane.b32.xlu0 %v2400, 64
      %v2413 = vpop.permute.xlu0 %2412
      %2414 = vrot.lane.b32.xlu0 %v2401, 64
      %v2415 = vpop.permute.xlu0 %2414
      %v2418 = vsel %vm1174, %v1994, %v2126
      %v2419 = vsel %vm1174, %v1996, %v2127
      %v2420 = vsel %vm1734, %v2418, %v2405
      %v2421 = vsel %vm1734, %v2419, %v2407
      %v2422 = vsel %vm1737, %v2420, %v2413
      %v2423 = vsel %vm1737, %v2421, %v2415
      %v2424 = vld [vmem:[%s963] sm:$0xff]
      %v2425 = vld [vmem:[%s963 + $0x8] sm:$0xff]
      %v2426 = vld [vmem:[%s963 + $0x10] sm:$0xff]
      %v2427 = vld [vmem:[%s963 + $0x18] sm:$0xff]
      %v2428 = vld [vmem:[%s963 + $0x20] sm:$0xff]
      %v2429 = vld [vmem:[%s963 + $0x28] sm:$0xff]
      %v2430 = vld [vmem:[%s963 + $0x30] sm:$0xff]
      %v2431 = vld [vmem:[%s963 + $0x38] sm:$0xff]
      %v2432 = vld [vmem:[%s963 + $0x40] sm:$0xff]
      %v2433 = vld [vmem:[%s963 + $0x48] sm:$0xff]
      %v2434 = vld [vmem:[%s963 + $0x50] sm:$0xff]
      %v2435 = vld [vmem:[%s963 + $0x58] sm:$0xff]
      %v2436 = vld [vmem:[%s963 + $0x60] sm:$0xff]
      %v2437 = vld [vmem:[%s963 + $0x68] sm:$0xff]
      %v2438 = vld [vmem:[%s963 + $0x70] sm:$0xff]
      %v2439 = vld [vmem:[%s963 + $0x78] sm:$0xff]
      %v2440 = vld [vmem:[%s963 + $0x80] sm:$0xff]
      %v2441 = vld [vmem:[%s963 + $0x88] sm:$0xff]
      %v2442 = vld [vmem:[%s963 + $0x90] sm:$0xff]
      %v2443 = vld [vmem:[%s963 + $0x98] sm:$0xff]
      %v2444 = vld [vmem:[%s963 + $0xa0] sm:$0xff]
      %v2445 = vld [vmem:[%s963 + $0xa8] sm:$0xff]
      %v2446 = vld [vmem:[%s963 + $0xb0] sm:$0xff]
      %v2447 = vld [vmem:[%s963 + $0xb8] sm:$0xff]
      %v2448 = vld [vmem:[%s963 + $0xc0] sm:$0xff]
      %v2449 = vld [vmem:[%s963 + $0xc8] sm:$0xff]
      %v2450 = vld [vmem:[%s963 + $0xd0] sm:$0xff]
      %v2451 = vld [vmem:[%s963 + $0xd8] sm:$0xff]
      %v2452 = vld [vmem:[%s963 + $0xe0] sm:$0xff]
      %v2453 = vld [vmem:[%s963 + $0xe8] sm:$0xff]
      %v2454 = vld [vmem:[%s963 + $0xf0] sm:$0xff]
      %v2455 = vld [vmem:[%s963 + $0xf8] sm:$0xff]
      %v2456 = vld [vmem:[%s968] sm:$0x77]
      %v2457 = vld [vmem:[%s972] sm:$0x3]
      %v2458 = vld [vmem:[%s975] sm:$0x1]
      %2459 = vmatprep.subr.mxu0 %v2455
      %2460 = vmatpush1.msra.mxu0 %v2454
      %2461 = vmatprep.subr.mxu0 %v2453
      %2462 = vmatpush1.msra.mxu0 %v2452
      %2463 = vmatprep.subr.mxu0 %v2451
      %2464 = vmatpush1.msra.mxu0 %v2450
      %2465 = vmatprep.subr.mxu0 %v2449
      %2466 = vmatpush1.msra.mxu0 %v2448
      %2467 = vmatprep.subr.mxu0 %v2447
      %2468 = vmatpush1.msra.mxu0 %v2446
      %2469 = vmatprep.subr.mxu0 %v2445
      %2470 = vmatpush1.msra.mxu0 %v2444
      %2471 = vmatprep.subr.mxu0 %v2443
      %2472 = vmatpush1.msra.mxu0 %v2442
      %2473 = vmatprep.subr.mxu0 %v2441
      %2474 = vmatpush1.msra.mxu0 %v2440
      %2475 = vmatprep.subr.mxu0 %v2439
      %2476 = vmatpush1.msra.mxu0 %v2438
      %2477 = vmatprep.subr.mxu0 %v2437
      %2478 = vmatpush1.msra.mxu0 %v2436
      %2479 = vmatprep.subr.mxu0 %v2435
      %2480 = vmatpush1.msra.mxu0 %v2434
      %2481 = vmatprep.subr.mxu0 %v2433
      %2482 = vmatpush1.msra.mxu0 %v2432
      %2483 = vmatprep.subr.mxu0 %v2431
      %2484 = vmatpush1.msra.mxu0 %v2430
      %2485 = vmatprep.subr.mxu0 %v2429
      %2486 = vmatpush1.msra.mxu0 %v2428
      %2487 = vmatprep.subr.mxu0 %v2427
      %2488 = vmatpush1.msra.mxu0 %v2426
      %2489 = vmatprep.subr.mxu0 %v2425
      %2490 = vmatpush1.msra.mxu0 %v2424
      %2491 = vmatprep.subr.mxu0 0.0
      %2492 = vmatpush2.msra.mxu0 0.0
      %2493 = vmatprep.subr.mxu0 0.0
      %2494 = vmatpush2.msra.mxu0 0.0
      %2495 = vmatprep.subr.mxu0 0.0
      %2496 = vmatpush2.msra.mxu0 0.0
      %2497 = vmatprep.subr.mxu0 0.0
      %2498 = vmatpush2.msra.mxu0 0.0
      %2499 = vmatprep.subr.mxu0 0.0
      %2500 = vmatpush2.msra.mxu0 0.0
      %2501 = vmatprep.subr.mxu0 0.0
      %2502 = vmatpush2.msra.mxu0 0.0
      %2503 = vmatprep.subr.mxu0 0.0
      %2504 = vmatpush2.msra.mxu0 0.0
      %2505 = vmatprep.subr.mxu0 0.0
      %2506 = vmatpush2.msra.mxu0 0.0
      %2507 = vmatprep.subr.mxu0 0.0
      %2508 = vmatpush2.msra.mxu0 0.0
      %2509 = vmatprep.subr.mxu0 0.0
      %2510 = vmatpush2.msra.mxu0 0.0
      %2511 = vmatprep.subr.mxu0 0.0
      %2512 = vmatpush2.msra.mxu0 0.0
      %2513 = vmatprep.subr.mxu0 0.0
      %2514 = vmatpush2.msra.mxu0 0.0
      %2515 = vmatprep.subr.mxu0 0.0
      %2516 = vmatpush2.msra.mxu0 0.0
      %2517 = vmatprep.subr.mxu0 0.0
      %2518 = vmatpush2.msra.mxu0 0.0
      %2519 = vmatprep.subr.mxu0 0.0
      %2520 = vmatpush2.msra.mxu0 0.0
      %2521 = vmatprep.subr.mxu0 0.0
      %2522 = vmatpush2.msra.mxu0 0.0
      %2523 = vmatprep.mubr.f32.mxu0 0.0
      %2524 = vmatmul.mubr.f32.gmra.mxu0 %v1738
      %v2525 = vpop.f32.mrf.mxu0
      %v2526 = vadd.f32 0.0, %v2525
      %v2527 = vpop.f32.mrf.mxu0
      %v2528 = vadd.f32 0.0, %v2527
      %2529 = vmatprep.mubr.f32.mxu0 0.0
      %2530 = vmatmul.mubr.f32.gmra.mxu0 %v1739
      %v2531 = vpop.f32.mrf.mxu0
      %v2532 = vadd.f32 0.0, %v2531
      %v2533 = vpop.f32.mrf.mxu0
      %v2534 = vadd.f32 0.0, %v2533
      %2535 = vdwg.mxu0
      %v2537 = vlaneseq
      %v2538 = vshrl.u32 %v2537, 7
      %v2539 = vsub.s32 0, %v2538
      %v2540 = vrot.slane %v2457, %v2539
      %v2541 = vlaneseq
      %v2542 = vshrl.u32 %v2541, 7
      %v2543 = vsub.s32 1, %v2542
      %v2544 = vrot.slane %v2457, %v2543
      %v2547 = vmul.f32 %v2526, %v2540
      %v2548 = vmul.f32 %v2528, %v2544
      %v2549 = vmul.f32 %v2532, %v2540
      %v2550 = vmul.f32 %v2534, %v2544
      %v2552 = vcombine.high %v2456, %v2456
      %v2553 = vsel %vm1734, %v2552, 0
      %v2556 = vsel %vm1734, %v2528, 0
      %v2559 = vsel %vm1734, %v2534, 0
      %2561 = vmatprep.subr.mxu0 0.0
      %2562 = vmatpush1.xpose.msra.mxu0 0.0
      %2563 = vmatprep.subr.mxu0 0.0
      %2564 = vmatpush1.xpose.msra.mxu0 0.0
      %2565 = vmatprep.subr.mxu0 0.0
      %2566 = vmatpush1.xpose.msra.mxu0 0.0
      %2567 = vmatprep.subr.mxu0 0.0
      %2568 = vmatpush1.xpose.msra.mxu0 0.0
      %2569 = vmatprep.subr.mxu0 0.0
      %2570 = vmatpush1.xpose.msra.mxu0 0.0
      %2571 = vmatprep.subr.mxu0 0.0
      %2572 = vmatpush1.xpose.msra.mxu0 0.0
      %2573 = vmatprep.subr.mxu0 0.0
      %2574 = vmatpush1.xpose.msra.mxu0 0.0
      %2575 = vmatprep.subr.mxu0 0.0
      %2576 = vmatpush1.xpose.msra.mxu0 0.0
      %2577 = vmatprep.subr.mxu0 0.0
      %2578 = vmatpush1.xpose.msra.mxu0 0.0
      %2579 = vmatprep.subr.mxu0 0.0
      %2580 = vmatpush1.xpose.msra.mxu0 0.0
      %2581 = vmatprep.subr.mxu0 0.0
      %2582 = vmatpush1.xpose.msra.mxu0 0.0
      %2583 = vmatprep.subr.mxu0 0.0
      %2584 = vmatpush1.xpose.msra.mxu0 0.0
      %2585 = vmatprep.subr.mxu0 0.0
      %2586 = vmatpush1.xpose.msra.mxu0 0.0
      %2587 = vmatprep.subr.mxu0 0.0
      %2588 = vmatpush1.xpose.msra.mxu0 0.0
      %2589 = vmatprep.subr.mxu0 %v2559
      %2590 = vmatpush1.xpose.msra.mxu0 %v2532
      %2591 = vmatprep.subr.mxu0 %v2556
      %2592 = vmatpush1.xpose.msra.mxu0 %v2526
      %2593 = vmatprep.subr.mxu0 0.0
      %2594 = vmatpush2.xpose.msra.mxu0 0.0
      %2595 = vmatprep.subr.mxu0 0.0
      %2596 = vmatpush2.xpose.msra.mxu0 0.0
      %2597 = vmatprep.subr.mxu0 0.0
      %2598 = vmatpush2.xpose.msra.mxu0 0.0
      %2599 = vmatprep.subr.mxu0 0.0
      %2600 = vmatpush2.xpose.msra.mxu0 0.0
      %2601 = vmatprep.subr.mxu0 0.0
      %2602 = vmatpush2.xpose.msra.mxu0 0.0
      %2603 = vmatprep.subr.mxu0 0.0
      %2604 = vmatpush2.xpose.msra.mxu0 0.0
      %2605 = vmatprep.subr.mxu0 0.0
      %2606 = vmatpush2.xpose.msra.mxu0 0.0
      %2607 = vmatprep.subr.mxu0 0.0
      %2608 = vmatpush2.xpose.msra.mxu0 0.0
      %2609 = vmatprep.subr.mxu0 0.0
      %2610 = vmatpush2.xpose.msra.mxu0 0.0
      %2611 = vmatprep.subr.mxu0 0.0
      %2612 = vmatpush2.xpose.msra.mxu0 0.0
      %2613 = vmatprep.subr.mxu0 0.0
      %2614 = vmatpush2.xpose.msra.mxu0 0.0
      %2615 = vmatprep.subr.mxu0 0.0
      %2616 = vmatpush2.xpose.msra.mxu0 0.0
      %2617 = vmatprep.subr.mxu0 0.0
      %2618 = vmatpush2.xpose.msra.mxu0 0.0
      %2619 = vmatprep.subr.mxu0 0.0
      %2620 = vmatpush2.xpose.msra.mxu0 0.0
      %2621 = vmatprep.subr.mxu0 0.0
      %2622 = vmatpush2.xpose.msra.mxu0 0.0
      %2623 = vmatprep.subr.mxu0 0.0
      %2624 = vmatpush2.xpose.msra.mxu0 0.0
      %2625 = vmatprep.mubr.f32.mxu0 %v2553
      %2626 = vmatmul.mubr.f32.gmra.mxu0 %v2456
      %v2627 = vpop.f32.mrf.mxu0
      %v2628 = vadd.f32 0.0, %v2627
      %v2629 = vpop.f32.mrf.mxu0
      %2630 = vdwg.mxu0
      %v2631 = vsel %vm1734, %v2547, 0.0
      %2632 = vadd.xlane.f32.xlu0 %v2631
      %v2633 = vpop.xlane.xlu0 %2632
      %v2634 = vsel %vm1734, %v2549, 0.0
      %2635 = vadd.xlane.f32.xlu0 %v2634
      %v2636 = vpop.xlane.xlu0 %2635
      %v2637 = vlaneseq
      %v2638 = vshrl.u32 %v2637, 7
      %v2639 = vsub.s32 0, %v2638
      %v2640 = vrot.slane %v2628, %v2639
      %v2641 = vadd.f32 %v2633, %v2640
      %v2642 = vadd.f32 %v2636, %v2640
      %v2643 = vadd.f32 %v2641, %v1010
      %v2644 = vadd.f32 %v2642, %v1011
      %vm2645 = vcmp.gt.f32.partialorder %v2643, 0.0
      %vm2646 = vcmp.gt.f32.partialorder %v2644, 0.0
      %v2647 = vmul.f32 %v2643, 0.2
      %v2648 = vmul.f32 %v2644, 0.2
      %v2649 = vsel %vm2645, %v2643, %v2647
      %v2650 = vsel %vm2646, %v2644, %v2648
      %vm2651 = vcmp.gt.f32.partialorder %v1008, 0.0
      %vm2652 = vcmp.gt.f32.partialorder %v1009, 0.0
      %v2653 = vsel %vm2651, %v2649, -1e+30
      %v2654 = vsel %vm2652, %v2650, -1e+30
      %vm2655 = vcmask 130048
      %v2656 = vsel %vm2655, %v2653, -inf
      %2657 = vmax.xlane.f32.xlu0 %v2656
      %v2658 = vpop.xlane.xlu0 %2657
      %v2659 = vsel %vm2655, %v2654, -inf
      %2660 = vmax.xlane.f32.xlu0 %v2659
      %v2661 = vpop.xlane.xlu0 %2660
      %v2662 = vsub.f32 %v2653, %v2658
      %v2663 = vsub.f32 %v2654, %v2661
      %v2664 = vmul.f32 %v2662, 1.442695
      %v2665 = vpow.pop %v2664
      %v2666 = vmul.f32 %v2663, 1.442695
      %v2667 = vpow.pop %v2666
      %v2668 = vmul.f32 %v2665, %v1008
      %v2669 = vmul.f32 %v2667, %v1009
      %v2670 = vsel %vm2655, %v2668, 0.0
      %2671 = vadd.xlane.f32.xlu0 %v2670
      %v2672 = vpop.xlane.xlu0 %2671
      %v2673 = vsel %vm2655, %v2669, 0.0
      %2674 = vadd.xlane.f32.xlu0 %v2673
      %v2675 = vpop.xlane.xlu0 %2674
      %v2676 = vmax.f32 %v2672, 1e-16
      %v2677 = vmax.f32 %v2675, 1e-16
      %v2678 = vrcp.pop %v2676
      %v2679 = vrcp.pop %v2677
      %v2680 = vmul.f32 %v2668, %v2678
      %v2681 = vmul.f32 %v2669, %v2679
      %2684 = vrot.lane.b32.xlu0 %v2547, 64
      %v2685 = vpop.permute.xlu0 %2684
      %2686 = vrot.lane.b32.xlu0 %v2549, 64
      %v2687 = vpop.permute.xlu0 %2686
      %v2690 = vsel %vm1734, %v2685, 0.0
      %2691 = vadd.xlane.f32.xlu0 %v2690
      %v2692 = vpop.xlane.xlu0 %2691
      %v2693 = vsel %vm1734, %v2687, 0.0
      %2694 = vadd.xlane.f32.xlu0 %v2693
      %v2695 = vpop.xlane.xlu0 %2694
      %v2696 = vlaneseq
      %v2697 = vshrl.u32 %v2696, 7
      %v2698 = vsub.s32 1, %v2697
      %v2699 = vrot.slane %v2628, %v2698
      %v2700 = vadd.f32 %v2692, %v2699
      %v2701 = vadd.f32 %v2695, %v2699
      %v2702 = vadd.f32 %v2700, %v1012
      %v2703 = vadd.f32 %v2701, %v1013
      %vm2704 = vcmp.gt.f32.partialorder %v2702, 0.0
      %vm2705 = vcmp.gt.f32.partialorder %v2703, 0.0
      %v2706 = vmul.f32 %v2702, 0.2
      %v2707 = vmul.f32 %v2703, 0.2
      %v2708 = vsel %vm2704, %v2702, %v2706
      %v2709 = vsel %vm2705, %v2703, %v2707
      %v2710 = vsel %vm2651, %v2708, -1e+30
      %v2711 = vsel %vm2652, %v2709, -1e+30
      %v2712 = vsel %vm2655, %v2710, -inf
      %2713 = vmax.xlane.f32.xlu0 %v2712
      %v2714 = vpop.xlane.xlu0 %2713
      %v2715 = vsel %vm2655, %v2711, -inf
      %2716 = vmax.xlane.f32.xlu0 %v2715
      %v2717 = vpop.xlane.xlu0 %2716
      %v2718 = vsub.f32 %v2710, %v2714
      %v2719 = vsub.f32 %v2711, %v2717
      %v2720 = vmul.f32 %v2718, 1.442695
      %v2721 = vpow.pop %v2720
      %v2722 = vmul.f32 %v2719, 1.442695
      %v2723 = vpow.pop %v2722
      %v2724 = vmul.f32 %v2721, %v1008
      %v2725 = vmul.f32 %v2723, %v1009
      %v2726 = vsel %vm2655, %v2724, 0.0
      %2727 = vadd.xlane.f32.xlu0 %v2726
      %v2728 = vpop.xlane.xlu0 %2727
      %v2729 = vsel %vm2655, %v2725, 0.0
      %2730 = vadd.xlane.f32.xlu0 %v2729
      %v2731 = vpop.xlane.xlu0 %2730
      %v2732 = vmax.f32 %v2728, 1e-16
      %v2733 = vmax.f32 %v2731, 1e-16
      %v2734 = vrcp.pop %v2732
      %v2735 = vrcp.pop %v2733
      %v2736 = vmul.f32 %v2724, %v2734
      %v2737 = vmul.f32 %v2725, %v2735
      %v2738 = vsel %vm1734, %v2548, 0.0
      %2739 = vadd.xlane.f32.xlu0 %v2738
      %v2740 = vpop.xlane.xlu0 %2739
      %v2741 = vsel %vm1734, %v2550, 0.0
      %2742 = vadd.xlane.f32.xlu0 %v2741
      %v2743 = vpop.xlane.xlu0 %2742
      %v2744 = vlaneseq
      %v2745 = vshrl.u32 %v2744, 7
      %v2746 = vsub.s32 2, %v2745
      %v2747 = vrot.slane %v2628, %v2746
      %v2748 = vadd.f32 %v2740, %v2747
      %v2749 = vadd.f32 %v2743, %v2747
      %v2750 = vadd.f32 %v2748, %v1014
      %v2751 = vadd.f32 %v2749, %v1015
      %vm2752 = vcmp.gt.f32.partialorder %v2750, 0.0
      %vm2753 = vcmp.gt.f32.partialorder %v2751, 0.0
      %v2754 = vmul.f32 %v2750, 0.2
      %v2755 = vmul.f32 %v2751, 0.2
      %v2756 = vsel %vm2752, %v2750, %v2754
      %v2757 = vsel %vm2753, %v2751, %v2755
      %v2758 = vsel %vm2651, %v2756, -1e+30
      %v2759 = vsel %vm2652, %v2757, -1e+30
      %v2760 = vsel %vm2655, %v2758, -inf
      %2761 = vmax.xlane.f32.xlu0 %v2760
      %v2762 = vpop.xlane.xlu0 %2761
      %v2763 = vsel %vm2655, %v2759, -inf
      %2764 = vmax.xlane.f32.xlu0 %v2763
      %v2765 = vpop.xlane.xlu0 %2764
      %v2766 = vsub.f32 %v2758, %v2762
      %v2767 = vsub.f32 %v2759, %v2765
      %v2768 = vmul.f32 %v2766, 1.442695
      %v2769 = vpow.pop %v2768
      %v2770 = vmul.f32 %v2767, 1.442695
      %v2771 = vpow.pop %v2770
      %v2772 = vmul.f32 %v2769, %v1008
      %v2773 = vmul.f32 %v2771, %v1009
      %v2774 = vsel %vm2655, %v2772, 0.0
      %2775 = vadd.xlane.f32.xlu0 %v2774
      %v2776 = vpop.xlane.xlu0 %2775
      %v2777 = vsel %vm2655, %v2773, 0.0
      %2778 = vadd.xlane.f32.xlu0 %v2777
      %v2779 = vpop.xlane.xlu0 %2778
      %v2780 = vmax.f32 %v2776, 1e-16
      %v2781 = vmax.f32 %v2779, 1e-16
      %v2782 = vrcp.pop %v2780
      %v2783 = vrcp.pop %v2781
      %v2784 = vmul.f32 %v2772, %v2782
      %v2785 = vmul.f32 %v2773, %v2783
      %2788 = vrot.lane.b32.xlu0 %v2736, 16
      %v2789 = vpop.permute.xlu0 %2788
      %2790 = vrot.lane.b32.xlu0 %v2737, 16
      %v2791 = vpop.permute.xlu0 %2790
      %2796 = vrot.lane.b32.xlu0 %v2784, 32
      %v2797 = vpop.permute.xlu0 %2796
      %2798 = vrot.lane.b32.xlu0 %v2785, 32
      %v2799 = vpop.permute.xlu0 %2798
      %v2802 = vsel %vm2655, %v2680, %v2789
      %v2803 = vsel %vm2655, %v2681, %v2791
      %v2804 = vsel %vm1174, %v2802, %v2797
      %v2805 = vsel %vm1174, %v2803, %v2799
      %2808 = vrot.lane.b32.xlu0 %v2526, 64
      %v2809 = vpop.permute.xlu0 %2808
      %2810 = vrot.lane.b32.xlu0 %v2532, 64
      %v2811 = vpop.permute.xlu0 %2810
      %vm2814 = vcmask 392192
      %v2816 = vsel %vm2814, %v2804, 0
      %v2819 = vsel %vm2814, %v2805, 0
      %2821 = vmatprep.subr.mxu0 0.0
      %2822 = vmatpush1.msra.mxu0 0.0
      %2823 = vmatprep.subr.mxu0 0.0
      %2824 = vmatpush1.msra.mxu0 0.0
      %2825 = vmatprep.subr.mxu0 0.0
      %2826 = vmatpush1.msra.mxu0 0.0
      %2827 = vmatprep.subr.mxu0 0.0
      %2828 = vmatpush1.msra.mxu0 0.0
      %2829 = vmatprep.subr.mxu0 0.0
      %2830 = vmatpush1.msra.mxu0 0.0
      %2831 = vmatprep.subr.mxu0 0.0
      %2832 = vmatpush1.msra.mxu0 0.0
      %2833 = vmatprep.subr.mxu0 0.0
      %2834 = vmatpush1.msra.mxu0 0.0
      %2835 = vmatprep.subr.mxu0 0.0
      %2836 = vmatpush1.msra.mxu0 0.0
      %2837 = vmatprep.subr.mxu0 0.0
      %2838 = vmatpush1.msra.mxu0 0.0
      %2839 = vmatprep.subr.mxu0 0.0
      %2840 = vmatpush1.msra.mxu0 0.0
      %2841 = vmatprep.subr.mxu0 0.0
      %2842 = vmatpush1.msra.mxu0 %v2534
      %2843 = vmatprep.subr.mxu0 0.0
      %2844 = vmatpush1.msra.mxu0 %v2528
      %2845 = vmatprep.subr.mxu0 0.0
      %2846 = vmatpush1.msra.mxu0 %v2811
      %2847 = vmatprep.subr.mxu0 0.0
      %2848 = vmatpush1.msra.mxu0 %v2809
      %2849 = vmatprep.subr.mxu0 0.0
      %2850 = vmatpush1.msra.mxu0 %v2532
      %2851 = vmatprep.subr.mxu0 0.0
      %2852 = vmatpush1.msra.mxu0 %v2526
      %2853 = vmatprep.subr.mxu0 0.0
      %2854 = vmatpush2.msra.mxu0 0.0
      %2855 = vmatprep.subr.mxu0 0.0
      %2856 = vmatpush2.msra.mxu0 0.0
      %2857 = vmatprep.subr.mxu0 0.0
      %2858 = vmatpush2.msra.mxu0 0.0
      %2859 = vmatprep.subr.mxu0 0.0
      %2860 = vmatpush2.msra.mxu0 0.0
      %2861 = vmatprep.subr.mxu0 0.0
      %2862 = vmatpush2.msra.mxu0 0.0
      %2863 = vmatprep.subr.mxu0 0.0
      %2864 = vmatpush2.msra.mxu0 0.0
      %2865 = vmatprep.subr.mxu0 0.0
      %2866 = vmatpush2.msra.mxu0 0.0
      %2867 = vmatprep.subr.mxu0 0.0
      %2868 = vmatpush2.msra.mxu0 0.0
      %2869 = vmatprep.subr.mxu0 0.0
      %2870 = vmatpush2.msra.mxu0 0.0
      %2871 = vmatprep.subr.mxu0 0.0
      %2872 = vmatpush2.msra.mxu0 0.0
      %2873 = vmatprep.subr.mxu0 0.0
      %2874 = vmatpush2.msra.mxu0 0.0
      %2875 = vmatprep.subr.mxu0 0.0
      %2876 = vmatpush2.msra.mxu0 0.0
      %2877 = vmatprep.subr.mxu0 0.0
      %2878 = vmatpush2.msra.mxu0 0.0
      %2879 = vmatprep.subr.mxu0 0.0
      %2880 = vmatpush2.msra.mxu0 0.0
      %2881 = vmatprep.subr.mxu0 0.0
      %2882 = vmatpush2.msra.mxu0 0.0
      %2883 = vmatprep.subr.mxu0 0.0
      %2884 = vmatpush2.msra.mxu0 0.0
      %2885 = vmatprep.mubr.f32.mxu0 0.0
      %2886 = vmatmul.mubr.f32.gmra.mxu0 %v2816
      %v2887 = vpop.f32.mrf.mxu0
      %v2888 = vadd.f32 0.0, %v2887
      %v2889 = vpop.f32.mrf.mxu0
      %2890 = vmatprep.mubr.f32.mxu0 0.0
      %2891 = vmatmul.mubr.f32.gmra.mxu0 %v2819
      %v2892 = vpop.f32.mrf.mxu0
      %v2893 = vadd.f32 0.0, %v2892
      %v2894 = vpop.f32.mrf.mxu0
      %2895 = vdwg.mxu0
      %v2896 = vmul.f32 %v2888, 0.33333334
      %v2897 = vmul.f32 %v2893, 0.33333334
      %v2899 = vlaneseq
      %v2900 = vshrl.u32 %v2899, 7
      %v2901 = vsub.s32 0, %v2900
      %v2902 = vrot.slane %v2458, %v2901
      %v2904 = vadd.f32 %v2896, %v2902
      %v2905 = vadd.f32 %v2897, %v2902
      %v2906 = vld [vmem:[%s14] sm:$0xff]
      %v2907 = vld [vmem:[%s14 + $0x8] sm:$0xff]
      %v2908 = vld [vmem:[%s14 + $0x10] sm:$0xff]
      %v2909 = vld [vmem:[%s14 + $0x18] sm:$0xff]
      %v2910 = vld [vmem:[%s14 + $0x20] sm:$0xff]
      %v2911 = vld [vmem:[%s14 + $0x28] sm:$0xff]
      %v2912 = vld [vmem:[%s14 + $0x30] sm:$0xff]
      %v2913 = vld [vmem:[%s14 + $0x38] sm:$0xff]
      %v2914 = vld [vmem:[%s14 + $0x40] sm:$0xff]
      %v2915 = vld [vmem:[%s14 + $0x48] sm:$0xff]
      %v2916 = vld [vmem:[%s14 + $0x50] sm:$0xff]
      %v2917 = vld [vmem:[%s14 + $0x58] sm:$0xff]
      %v2918 = vld [vmem:[%s14 + $0x60] sm:$0xff]
      %v2919 = vld [vmem:[%s14 + $0x68] sm:$0xff]
      %v2920 = vld [vmem:[%s14 + $0x70] sm:$0xff]
      %v2921 = vld [vmem:[%s14 + $0x78] sm:$0xff]
      %v2922 = vld [vmem:[%s14 + $0x80] sm:$0xff]
      %v2923 = vld [vmem:[%s14 + $0x88] sm:$0xff]
      %v2924 = vld [vmem:[%s14 + $0x90] sm:$0xff]
      %v2925 = vld [vmem:[%s14 + $0x98] sm:$0xff]
      %v2926 = vld [vmem:[%s14 + $0xa0] sm:$0xff]
      %v2927 = vld [vmem:[%s14 + $0xa8] sm:$0xff]
      %v2928 = vld [vmem:[%s14 + $0xb0] sm:$0xff]
      %v2929 = vld [vmem:[%s14 + $0xb8] sm:$0xff]
      %v2930 = vld [vmem:[%s14 + $0xc0] sm:$0xff]
      %v2931 = vld [vmem:[%s14 + $0xc8] sm:$0xff]
      %v2932 = vld [vmem:[%s14 + $0xd0] sm:$0xff]
      %v2933 = vld [vmem:[%s14 + $0xd8] sm:$0xff]
      %v2934 = vld [vmem:[%s14 + $0xe0] sm:$0xff]
      %v2935 = vld [vmem:[%s14 + $0xe8] sm:$0xff]
      %v2936 = vld [vmem:[%s14 + $0xf0] sm:$0xff]
      %v2937 = vld [vmem:[%s14 + $0xf8] sm:$0xff]
      %v2938 = vld [vmem:[%s15] sm:$0x77]
      %v2939 = vld [vmem:[%s16] sm:$0x3]
      %v2940 = vld [vmem:[%s17] sm:$0x1]
      %2941 = vmatprep.subr.mxu0 %v2937
      %2942 = vmatpush1.msra.mxu0 %v2936
      %2943 = vmatprep.subr.mxu0 %v2935
      %2944 = vmatpush1.msra.mxu0 %v2934
      %2945 = vmatprep.subr.mxu0 %v2933
      %2946 = vmatpush1.msra.mxu0 %v2932
      %2947 = vmatprep.subr.mxu0 %v2931
      %2948 = vmatpush1.msra.mxu0 %v2930
      %2949 = vmatprep.subr.mxu0 %v2929
      %2950 = vmatpush1.msra.mxu0 %v2928
      %2951 = vmatprep.subr.mxu0 %v2927
      %2952 = vmatpush1.msra.mxu0 %v2926
      %2953 = vmatprep.subr.mxu0 %v2925
      %2954 = vmatpush1.msra.mxu0 %v2924
      %2955 = vmatprep.subr.mxu0 %v2923
      %2956 = vmatpush1.msra.mxu0 %v2922
      %2957 = vmatprep.subr.mxu0 %v2921
      %2958 = vmatpush1.msra.mxu0 %v2920
      %2959 = vmatprep.subr.mxu0 %v2919
      %2960 = vmatpush1.msra.mxu0 %v2918
      %2961 = vmatprep.subr.mxu0 %v2917
      %2962 = vmatpush1.msra.mxu0 %v2916
      %2963 = vmatprep.subr.mxu0 %v2915
      %2964 = vmatpush1.msra.mxu0 %v2914
      %2965 = vmatprep.subr.mxu0 %v2913
      %2966 = vmatpush1.msra.mxu0 %v2912
      %2967 = vmatprep.subr.mxu0 %v2911
      %2968 = vmatpush1.msra.mxu0 %v2910
      %2969 = vmatprep.subr.mxu0 %v2909
      %2970 = vmatpush1.msra.mxu0 %v2908
      %2971 = vmatprep.subr.mxu0 %v2907
      %2972 = vmatpush1.msra.mxu0 %v2906
      %2973 = vmatprep.subr.mxu0 0.0
      %2974 = vmatpush2.msra.mxu0 0.0
      %2975 = vmatprep.subr.mxu0 0.0
      %2976 = vmatpush2.msra.mxu0 0.0
      %2977 = vmatprep.subr.mxu0 0.0
      %2978 = vmatpush2.msra.mxu0 0.0
      %2979 = vmatprep.subr.mxu0 0.0
      %2980 = vmatpush2.msra.mxu0 0.0
      %2981 = vmatprep.subr.mxu0 0.0
      %2982 = vmatpush2.msra.mxu0 0.0
      %2983 = vmatprep.subr.mxu0 0.0
      %2984 = vmatpush2.msra.mxu0 0.0
      %2985 = vmatprep.subr.mxu0 0.0
      %2986 = vmatpush2.msra.mxu0 0.0
      %2987 = vmatprep.subr.mxu0 0.0
      %2988 = vmatpush2.msra.mxu0 0.0
      %2989 = vmatprep.subr.mxu0 0.0
      %2990 = vmatpush2.msra.mxu0 0.0
      %2991 = vmatprep.subr.mxu0 0.0
      %2992 = vmatpush2.msra.mxu0 0.0
      %2993 = vmatprep.subr.mxu0 0.0
      %2994 = vmatpush2.msra.mxu0 0.0
      %2995 = vmatprep.subr.mxu0 0.0
      %2996 = vmatpush2.msra.mxu0 0.0
      %2997 = vmatprep.subr.mxu0 0.0
      %2998 = vmatpush2.msra.mxu0 0.0
      %2999 = vmatprep.subr.mxu0 0.0
      %3000 = vmatpush2.msra.mxu0 0.0
      %3001 = vmatprep.subr.mxu0 0.0
      %3002 = vmatpush2.msra.mxu0 0.0
      %3003 = vmatprep.subr.mxu0 0.0
      %3004 = vmatpush2.msra.mxu0 0.0
      %3005 = vmatprep.mubr.f32.mxu0 0.0
      %3006 = vmatmul.mubr.f32.gmra.mxu0 %v2422
      %v3007 = vpop.f32.mrf.mxu0
      %v3008 = vadd.f32 0.0, %v3007
      %v3009 = vpop.f32.mrf.mxu0
      %v3010 = vadd.f32 0.0, %v3009
      %3011 = vmatprep.mubr.f32.mxu0 0.0
      %3012 = vmatmul.mubr.f32.gmra.mxu0 %v2423
      %v3013 = vpop.f32.mrf.mxu0
      %v3014 = vadd.f32 0.0, %v3013
      %v3015 = vpop.f32.mrf.mxu0
      %v3016 = vadd.f32 0.0, %v3015
      %3017 = vdwg.mxu0
      %v3019 = vlaneseq
      %v3020 = vshrl.u32 %v3019, 7
      %v3021 = vsub.s32 0, %v3020
      %v3022 = vrot.slane %v2939, %v3021
      %v3023 = vlaneseq
      %v3024 = vshrl.u32 %v3023, 7
      %v3025 = vsub.s32 1, %v3024
      %v3026 = vrot.slane %v2939, %v3025
      %v3029 = vmul.f32 %v3008, %v3022
      %v3030 = vmul.f32 %v3010, %v3026
      %v3031 = vmul.f32 %v3014, %v3022
      %v3032 = vmul.f32 %v3016, %v3026
      %v3034 = vcombine.high %v2938, %v2938
      %v3035 = vsel %vm1734, %v3034, 0
      %v3038 = vsel %vm1734, %v3010, 0
      %v3041 = vsel %vm1734, %v3016, 0
      %3043 = vmatprep.subr.mxu0 0.0
      %3044 = vmatpush1.xpose.msra.mxu0 0.0
      %3045 = vmatprep.subr.mxu0 0.0
      %3046 = vmatpush1.xpose.msra.mxu0 0.0
      %3047 = vmatprep.subr.mxu0 0.0
      %3048 = vmatpush1.xpose.msra.mxu0 0.0
      %3049 = vmatprep.subr.mxu0 0.0
      %3050 = vmatpush1.xpose.msra.mxu0 0.0
      %3051 = vmatprep.subr.mxu0 0.0
      %3052 = vmatpush1.xpose.msra.mxu0 0.0
      %3053 = vmatprep.subr.mxu0 0.0
      %3054 = vmatpush1.xpose.msra.mxu0 0.0
      %3055 = vmatprep.subr.mxu0 0.0
      %3056 = vmatpush1.xpose.msra.mxu0 0.0
      %3057 = vmatprep.subr.mxu0 0.0
      %3058 = vmatpush1.xpose.msra.mxu0 0.0
      %3059 = vmatprep.subr.mxu0 0.0
      %3060 = vmatpush1.xpose.msra.mxu0 0.0
      %3061 = vmatprep.subr.mxu0 0.0
      %3062 = vmatpush1.xpose.msra.mxu0 0.0
      %3063 = vmatprep.subr.mxu0 0.0
      %3064 = vmatpush1.xpose.msra.mxu0 0.0
      %3065 = vmatprep.subr.mxu0 0.0
      %3066 = vmatpush1.xpose.msra.mxu0 0.0
      %3067 = vmatprep.subr.mxu0 0.0
      %3068 = vmatpush1.xpose.msra.mxu0 0.0
      %3069 = vmatprep.subr.mxu0 0.0
      %3070 = vmatpush1.xpose.msra.mxu0 0.0
      %3071 = vmatprep.subr.mxu0 %v3041
      %3072 = vmatpush1.xpose.msra.mxu0 %v3014
      %3073 = vmatprep.subr.mxu0 %v3038
      %3074 = vmatpush1.xpose.msra.mxu0 %v3008
      %3075 = vmatprep.subr.mxu0 0.0
      %3076 = vmatpush2.xpose.msra.mxu0 0.0
      %3077 = vmatprep.subr.mxu0 0.0
      %3078 = vmatpush2.xpose.msra.mxu0 0.0
      %3079 = vmatprep.subr.mxu0 0.0
      %3080 = vmatpush2.xpose.msra.mxu0 0.0
      %3081 = vmatprep.subr.mxu0 0.0
      %3082 = vmatpush2.xpose.msra.mxu0 0.0
      %3083 = vmatprep.subr.mxu0 0.0
      %3084 = vmatpush2.xpose.msra.mxu0 0.0
      %3085 = vmatprep.subr.mxu0 0.0
      %3086 = vmatpush2.xpose.msra.mxu0 0.0
      %3087 = vmatprep.subr.mxu0 0.0
      %3088 = vmatpush2.xpose.msra.mxu0 0.0
      %3089 = vmatprep.subr.mxu0 0.0
      %3090 = vmatpush2.xpose.msra.mxu0 0.0
      %3091 = vmatprep.subr.mxu0 0.0
      %3092 = vmatpush2.xpose.msra.mxu0 0.0
      %3093 = vmatprep.subr.mxu0 0.0
      %3094 = vmatpush2.xpose.msra.mxu0 0.0
      %3095 = vmatprep.subr.mxu0 0.0
      %3096 = vmatpush2.xpose.msra.mxu0 0.0
      %3097 = vmatprep.subr.mxu0 0.0
      %3098 = vmatpush2.xpose.msra.mxu0 0.0
      %3099 = vmatprep.subr.mxu0 0.0
      %3100 = vmatpush2.xpose.msra.mxu0 0.0
      %3101 = vmatprep.subr.mxu0 0.0
      %3102 = vmatpush2.xpose.msra.mxu0 0.0
      %3103 = vmatprep.subr.mxu0 0.0
      %3104 = vmatpush2.xpose.msra.mxu0 0.0
      %3105 = vmatprep.subr.mxu0 0.0
      %3106 = vmatpush2.xpose.msra.mxu0 0.0
      %3107 = vmatprep.mubr.f32.mxu0 %v3035
      %3108 = vmatmul.mubr.f32.gmra.mxu0 %v2938
      %v3109 = vpop.f32.mrf.mxu0
      %v3110 = vadd.f32 0.0, %v3109
      %v3111 = vpop.f32.mrf.mxu0
      %3112 = vdwg.mxu0
      %v3113 = vsel %vm1734, %v3029, 0.0
      %3114 = vadd.xlane.f32.xlu0 %v3113
      %v3115 = vpop.xlane.xlu0 %3114
      %v3116 = vsel %vm1734, %v3031, 0.0
      %3117 = vadd.xlane.f32.xlu0 %v3116
      %v3118 = vpop.xlane.xlu0 %3117
      %v3119 = vlaneseq
      %v3120 = vshrl.u32 %v3119, 7
      %v3121 = vsub.s32 0, %v3120
      %v3122 = vrot.slane %v3110, %v3121
      %v3123 = vadd.f32 %v3115, %v3122
      %v3124 = vadd.f32 %v3118, %v3122
      %v3125 = vadd.f32 %v3123, %v1016
      %v3126 = vadd.f32 %v3124, %v1017
      %vm3127 = vcmp.gt.f32.partialorder %v3125, 0.0
      %vm3128 = vcmp.gt.f32.partialorder %v3126, 0.0
      %v3129 = vmul.f32 %v3125, 0.2
      %v3130 = vmul.f32 %v3126, 0.2
      %v3131 = vsel %vm3127, %v3125, %v3129
      %v3132 = vsel %vm3128, %v3126, %v3130
      %v3133 = vsel %vm2651, %v3131, -1e+30
      %v3134 = vsel %vm2652, %v3132, -1e+30
      %v3135 = vsel %vm2655, %v3133, -inf
      %3136 = vmax.xlane.f32.xlu0 %v3135
      %v3137 = vpop.xlane.xlu0 %3136
      %v3138 = vsel %vm2655, %v3134, -inf
      %3139 = vmax.xlane.f32.xlu0 %v3138
      %v3140 = vpop.xlane.xlu0 %3139
      %v3141 = vsub.f32 %v3133, %v3137
      %v3142 = vsub.f32 %v3134, %v3140
      %v3143 = vmul.f32 %v3141, 1.442695
      %v3144 = vpow.pop %v3143
      %v3145 = vmul.f32 %v3142, 1.442695
      %v3146 = vpow.pop %v3145
      %v3147 = vmul.f32 %v3144, %v1008
      %v3148 = vmul.f32 %v3146, %v1009
      %v3149 = vsel %vm2655, %v3147, 0.0
      %3150 = vadd.xlane.f32.xlu0 %v3149
      %v3151 = vpop.xlane.xlu0 %3150
      %v3152 = vsel %vm2655, %v3148, 0.0
      %3153 = vadd.xlane.f32.xlu0 %v3152
      %v3154 = vpop.xlane.xlu0 %3153
      %v3155 = vmax.f32 %v3151, 1e-16
      %v3156 = vmax.f32 %v3154, 1e-16
      %v3157 = vrcp.pop %v3155
      %v3158 = vrcp.pop %v3156
      %v3159 = vmul.f32 %v3147, %v3157
      %v3160 = vmul.f32 %v3148, %v3158
      %3163 = vrot.lane.b32.xlu0 %v3029, 64
      %v3164 = vpop.permute.xlu0 %3163
      %3165 = vrot.lane.b32.xlu0 %v3031, 64
      %v3166 = vpop.permute.xlu0 %3165
      %v3169 = vsel %vm1734, %v3164, 0.0
      %3170 = vadd.xlane.f32.xlu0 %v3169
      %v3171 = vpop.xlane.xlu0 %3170
      %v3172 = vsel %vm1734, %v3166, 0.0
      %3173 = vadd.xlane.f32.xlu0 %v3172
      %v3174 = vpop.xlane.xlu0 %3173
      %v3175 = vlaneseq
      %v3176 = vshrl.u32 %v3175, 7
      %v3177 = vsub.s32 1, %v3176
      %v3178 = vrot.slane %v3110, %v3177
      %v3179 = vadd.f32 %v3171, %v3178
      %v3180 = vadd.f32 %v3174, %v3178
      %v3181 = vadd.f32 %v3179, %v1018
      %v3182 = vadd.f32 %v3180, %v1019
      %vm3183 = vcmp.gt.f32.partialorder %v3181, 0.0
      %vm3184 = vcmp.gt.f32.partialorder %v3182, 0.0
      %v3185 = vmul.f32 %v3181, 0.2
      %v3186 = vmul.f32 %v3182, 0.2
      %v3187 = vsel %vm3183, %v3181, %v3185
      %v3188 = vsel %vm3184, %v3182, %v3186
      %v3189 = vsel %vm2651, %v3187, -1e+30
      %v3190 = vsel %vm2652, %v3188, -1e+30
      %v3191 = vsel %vm2655, %v3189, -inf
      %3192 = vmax.xlane.f32.xlu0 %v3191
      %v3193 = vpop.xlane.xlu0 %3192
      %v3194 = vsel %vm2655, %v3190, -inf
      %3195 = vmax.xlane.f32.xlu0 %v3194
      %v3196 = vpop.xlane.xlu0 %3195
      %v3197 = vsub.f32 %v3189, %v3193
      %v3198 = vsub.f32 %v3190, %v3196
      %v3199 = vmul.f32 %v3197, 1.442695
      %v3200 = vpow.pop %v3199
      %v3201 = vmul.f32 %v3198, 1.442695
      %v3202 = vpow.pop %v3201
      %v3203 = vmul.f32 %v3200, %v1008
      %v3204 = vmul.f32 %v3202, %v1009
      %v3205 = vsel %vm2655, %v3203, 0.0
      %3206 = vadd.xlane.f32.xlu0 %v3205
      %v3207 = vpop.xlane.xlu0 %3206
      %v3208 = vsel %vm2655, %v3204, 0.0
      %3209 = vadd.xlane.f32.xlu0 %v3208
      %v3210 = vpop.xlane.xlu0 %3209
      %v3211 = vmax.f32 %v3207, 1e-16
      %v3212 = vmax.f32 %v3210, 1e-16
      %v3213 = vrcp.pop %v3211
      %v3214 = vrcp.pop %v3212
      %v3215 = vmul.f32 %v3203, %v3213
      %v3216 = vmul.f32 %v3204, %v3214
      %v3217 = vsel %vm1734, %v3030, 0.0
      %3218 = vadd.xlane.f32.xlu0 %v3217
      %v3219 = vpop.xlane.xlu0 %3218
      %v3220 = vsel %vm1734, %v3032, 0.0
      %3221 = vadd.xlane.f32.xlu0 %v3220
      %v3222 = vpop.xlane.xlu0 %3221
      %v3223 = vlaneseq
      %v3224 = vshrl.u32 %v3223, 7
      %v3225 = vsub.s32 2, %v3224
      %v3226 = vrot.slane %v3110, %v3225
      %v3227 = vadd.f32 %v3219, %v3226
      %v3228 = vadd.f32 %v3222, %v3226
      %v3229 = vadd.f32 %v3227, %v1020
      %v3230 = vadd.f32 %v3228, %v1021
      %vm3231 = vcmp.gt.f32.partialorder %v3229, 0.0
      %vm3232 = vcmp.gt.f32.partialorder %v3230, 0.0
      %v3233 = vmul.f32 %v3229, 0.2
      %v3234 = vmul.f32 %v3230, 0.2
      %v3235 = vsel %vm3231, %v3229, %v3233
      %v3236 = vsel %vm3232, %v3230, %v3234
      %v3237 = vsel %vm2651, %v3235, -1e+30
      %v3238 = vsel %vm2652, %v3236, -1e+30
      %v3239 = vsel %vm2655, %v3237, -inf
      %3240 = vmax.xlane.f32.xlu0 %v3239
      %v3241 = vpop.xlane.xlu0 %3240
      %v3242 = vsel %vm2655, %v3238, -inf
      %3243 = vmax.xlane.f32.xlu0 %v3242
      %v3244 = vpop.xlane.xlu0 %3243
      %v3245 = vsub.f32 %v3237, %v3241
      %v3246 = vsub.f32 %v3238, %v3244
      %v3247 = vmul.f32 %v3245, 1.442695
      %v3248 = vpow.pop %v3247
      %v3249 = vmul.f32 %v3246, 1.442695
      %v3250 = vpow.pop %v3249
      %v3251 = vmul.f32 %v3248, %v1008
      %v3252 = vmul.f32 %v3250, %v1009
      %v3253 = vsel %vm2655, %v3251, 0.0
      %3254 = vadd.xlane.f32.xlu0 %v3253
      %v3255 = vpop.xlane.xlu0 %3254
      %v3256 = vsel %vm2655, %v3252, 0.0
      %3257 = vadd.xlane.f32.xlu0 %v3256
      %v3258 = vpop.xlane.xlu0 %3257
      %v3259 = vmax.f32 %v3255, 1e-16
      %v3260 = vmax.f32 %v3258, 1e-16
      %v3261 = vrcp.pop %v3259
      %v3262 = vrcp.pop %v3260
      %v3263 = vmul.f32 %v3251, %v3261
      %v3264 = vmul.f32 %v3252, %v3262
      %3267 = vrot.lane.b32.xlu0 %v3215, 16
      %v3268 = vpop.permute.xlu0 %3267
      %3269 = vrot.lane.b32.xlu0 %v3216, 16
      %v3270 = vpop.permute.xlu0 %3269
      %3275 = vrot.lane.b32.xlu0 %v3263, 32
      %v3276 = vpop.permute.xlu0 %3275
      %3277 = vrot.lane.b32.xlu0 %v3264, 32
      %v3278 = vpop.permute.xlu0 %3277
      %v3281 = vsel %vm2655, %v3159, %v3268
      %v3282 = vsel %vm2655, %v3160, %v3270
      %v3283 = vsel %vm1174, %v3281, %v3276
      %v3284 = vsel %vm1174, %v3282, %v3278
      %3287 = vrot.lane.b32.xlu0 %v3008, 64
      %v3288 = vpop.permute.xlu0 %3287
      %3289 = vrot.lane.b32.xlu0 %v3014, 64
      %v3290 = vpop.permute.xlu0 %3289
      %v3294 = vsel %vm2814, %v3283, 0
      %v3297 = vsel %vm2814, %v3284, 0
      %3299 = vmatprep.subr.mxu0 0.0
      %3300 = vmatpush1.msra.mxu0 0.0
      %3301 = vmatprep.subr.mxu0 0.0
      %3302 = vmatpush1.msra.mxu0 0.0
      %3303 = vmatprep.subr.mxu0 0.0
      %3304 = vmatpush1.msra.mxu0 0.0
      %3305 = vmatprep.subr.mxu0 0.0
      %3306 = vmatpush1.msra.mxu0 0.0
      %3307 = vmatprep.subr.mxu0 0.0
      %3308 = vmatpush1.msra.mxu0 0.0
      %3309 = vmatprep.subr.mxu0 0.0
      %3310 = vmatpush1.msra.mxu0 0.0
      %3311 = vmatprep.subr.mxu0 0.0
      %3312 = vmatpush1.msra.mxu0 0.0
      %3313 = vmatprep.subr.mxu0 0.0
      %3314 = vmatpush1.msra.mxu0 0.0
      %3315 = vmatprep.subr.mxu0 0.0
      %3316 = vmatpush1.msra.mxu0 0.0
      %3317 = vmatprep.subr.mxu0 0.0
      %3318 = vmatpush1.msra.mxu0 0.0
      %3319 = vmatprep.subr.mxu0 0.0
      %3320 = vmatpush1.msra.mxu0 %v3016
      %3321 = vmatprep.subr.mxu0 0.0
      %3322 = vmatpush1.msra.mxu0 %v3010
      %3323 = vmatprep.subr.mxu0 0.0
      %3324 = vmatpush1.msra.mxu0 %v3290
      %3325 = vmatprep.subr.mxu0 0.0
      %3326 = vmatpush1.msra.mxu0 %v3288
      %3327 = vmatprep.subr.mxu0 0.0
      %3328 = vmatpush1.msra.mxu0 %v3014
      %3329 = vmatprep.subr.mxu0 0.0
      %3330 = vmatpush1.msra.mxu0 %v3008
      %3331 = vmatprep.subr.mxu0 0.0
      %3332 = vmatpush2.msra.mxu0 0.0
      %3333 = vmatprep.subr.mxu0 0.0
      %3334 = vmatpush2.msra.mxu0 0.0
      %3335 = vmatprep.subr.mxu0 0.0
      %3336 = vmatpush2.msra.mxu0 0.0
      %3337 = vmatprep.subr.mxu0 0.0
      %3338 = vmatpush2.msra.mxu0 0.0
      %3339 = vmatprep.subr.mxu0 0.0
      %3340 = vmatpush2.msra.mxu0 0.0
      %3341 = vmatprep.subr.mxu0 0.0
      %3342 = vmatpush2.msra.mxu0 0.0
      %3343 = vmatprep.subr.mxu0 0.0
      %3344 = vmatpush2.msra.mxu0 0.0
      %3345 = vmatprep.subr.mxu0 0.0
      %3346 = vmatpush2.msra.mxu0 0.0
      %3347 = vmatprep.subr.mxu0 0.0
      %3348 = vmatpush2.msra.mxu0 0.0
      %3349 = vmatprep.subr.mxu0 0.0
      %3350 = vmatpush2.msra.mxu0 0.0
      %3351 = vmatprep.subr.mxu0 0.0
      %3352 = vmatpush2.msra.mxu0 0.0
      %3353 = vmatprep.subr.mxu0 0.0
      %3354 = vmatpush2.msra.mxu0 0.0
      %3355 = vmatprep.subr.mxu0 0.0
      %3356 = vmatpush2.msra.mxu0 0.0
      %3357 = vmatprep.subr.mxu0 0.0
      %3358 = vmatpush2.msra.mxu0 0.0
      %3359 = vmatprep.subr.mxu0 0.0
      %3360 = vmatpush2.msra.mxu0 0.0
      %3361 = vmatprep.subr.mxu0 0.0
      %3362 = vmatpush2.msra.mxu0 0.0
      %3363 = vmatprep.mubr.f32.mxu0 0.0
      %3364 = vmatmul.mubr.f32.gmra.mxu0 %v3294
      %v3365 = vpop.f32.mrf.mxu0
      %v3366 = vadd.f32 0.0, %v3365
      %v3367 = vpop.f32.mrf.mxu0
      %3368 = vmatprep.mubr.f32.mxu0 0.0
      %3369 = vmatmul.mubr.f32.gmra.mxu0 %v3297
      %v3370 = vpop.f32.mrf.mxu0
      %v3371 = vadd.f32 0.0, %v3370
      %v3372 = vpop.f32.mrf.mxu0
      %3373 = vdwg.mxu0
      %v3374 = vmul.f32 %v3366, 0.33333334
      %v3375 = vmul.f32 %v3371, 0.33333334
      %v3377 = vlaneseq
      %v3378 = vshrl.u32 %v3377, 7
      %v3379 = vsub.s32 0, %v3378
      %v3380 = vrot.slane %v2940, %v3379
      %v3382 = vadd.f32 %v3374, %v3380
      %v3383 = vadd.f32 %v3375, %v3380
      %vm3384 = vcmp.gt.f32.partialorder %v1022, 0.0
      %vm3385 = vcmp.gt.f32.partialorder %v1023, 0.0
      %v3386 = vsel %vm3384, 1, 0
      %v3387 = vsel %vm3385, 1, 0
      %3388 = vset.pattern.permute.xlu0 0
      %3389 = vperm.xlu0 %3388, %v3386
      %v3390 = vpop.permute.xlu0 %3389
      %3391 = vset.pattern.permute.xlu0 0
      %3392 = vperm.xlu0 %3391, %v3387
      %v3393 = vpop.permute.xlu0 %3392
      %vm3394 = vcmp.eq.s32.totalorder %v3390, 1
      %vm3395 = vcmp.eq.s32.totalorder %v3393, 1
      %v3396 = vsel %vm3394, %v2904, -1e+30
      %v3397 = vsel %vm3395, %v2905, -1e+30
      %v3398 = vsel %vm1734, %v3396, -inf
      %v3399 = vsel %vm1734, %v3397, -inf
      %v3400 = vmax.f32 %v3398, %v3399
      %v3401 = vrot.slane %v3400, 4
      %v3402 = vmax.f32 %v3400, %v3401
      %v3403 = vrot.slane %v3402, 2
      %v3404 = vmax.f32 %v3402, %v3403
      %v3405 = vrot.slane %v3404, 1
      %v3406 = vmax.f32 %v3404, %v3405
      %3407 = vset.pattern.permute.xlu0 1
      %3408 = vperm.xlu0 %3407, %v3386
      %v3409 = vpop.permute.xlu0 %3408
      %3410 = vset.pattern.permute.xlu0 1
      %3411 = vperm.xlu0 %3410, %v3387
      %v3412 = vpop.permute.xlu0 %3411
      %vm3413 = vcmp.eq.s32.totalorder %v3409, 1
      %vm3414 = vcmp.eq.s32.totalorder %v3412, 1
      %v3415 = vsel %vm3413, %v2904, -1e+30
      %v3416 = vsel %vm3414, %v2905, -1e+30
      %v3417 = vsel %vm1734, %v3415, -inf
      %v3418 = vsel %vm1734, %v3416, -inf
      %v3419 = vmax.f32 %v3417, %v3418
      %v3420 = vrot.slane %v3419, 4
      %v3421 = vmax.f32 %v3419, %v3420
      %v3422 = vrot.slane %v3421, 2
      %v3423 = vmax.f32 %v3421, %v3422
      %v3424 = vrot.slane %v3423, 1
      %v3425 = vmax.f32 %v3423, %v3424
      %vm3426 = vcmask 1040384
      %v3427 = vsel %vm3426, %v3406, %v3425
      %v3428 = vsel %vm3394, %v3382, -1e+30
      %v3429 = vsel %vm3395, %v3383, -1e+30
      %v3430 = vsel %vm1734, %v3428, -inf
      %v3431 = vsel %vm1734, %v3429, -inf
      %v3432 = vmax.f32 %v3430, %v3431
      %v3433 = vrot.slane %v3432, 4
      %v3434 = vmax.f32 %v3432, %v3433
      %v3435 = vrot.slane %v3434, 2
      %v3436 = vmax.f32 %v3434, %v3435
      %v3437 = vrot.slane %v3436, 1
      %v3438 = vmax.f32 %v3436, %v3437
      %v3439 = vsel %vm3413, %v3382, -1e+30
      %v3440 = vsel %vm3414, %v3383, -1e+30
      %v3441 = vsel %vm1734, %v3439, -inf
      %v3442 = vsel %vm1734, %v3440, -inf
      %v3443 = vmax.f32 %v3441, %v3442
      %v3444 = vrot.slane %v3443, 4
      %v3445 = vmax.f32 %v3443, %v3444
      %v3446 = vrot.slane %v3445, 2
      %v3447 = vmax.f32 %v3445, %v3446
      %v3448 = vrot.slane %v3447, 1
      %v3449 = vmax.f32 %v3447, %v3448
      %v3450 = vsel %vm3426, %v3438, %v3449
      %3452 = vrot.lane.b32.xlu0 %v3450, 64
      %v3453 = vpop.permute.xlu0 %3452
      %v3455 = vsel %vm1734, %v3427, %v3453
      %v3456 = vxor.u32 %v3455, 2147483648
      %v3457 = vmul.f32 %v3456, 1.442695
      %v3458 = vpow.pop %v3457
      %v3459 = vadd.f32 %v3458, 1.0
      %v3460 = vrcp.pop %v3459
      %v3461 = vmul.f32 1.0, %v3460
      %3462 = vst [vmem:[%s999] sm:$0x3] %v3461
      %v3463 = vstv %s1024
      %v3464 = vmul.f32 %v3463, %v3382
      %v3465 = vmul.f32 %v3463, %v3383
      %v3466 = vadd.f32 %v2904, %v3464
      %v3467 = vadd.f32 %v2905, %v3465
      %v3468 = vld [vmem:[%s21] sm:$0xff]
      %v3469 = vld [vmem:[%s21 + $0x8] sm:$0xff]
      %v3470 = vld [vmem:[%s21 + $0x10] sm:$0xff]
      %v3471 = vld [vmem:[%s21 + $0x18] sm:$0xff]
      %v3472 = vld [vmem:[%s21 + $0x20] sm:$0xff]
      %v3473 = vld [vmem:[%s21 + $0x28] sm:$0xff]
      %v3474 = vld [vmem:[%s21 + $0x30] sm:$0xff]
      %v3475 = vld [vmem:[%s21 + $0x38] sm:$0xff]
      %v3476 = vld [vmem:[%s22] sm:$0x1]
      %v3478 = vlaneseq
      %v3479 = vshrl.u32 %v3478, 7
      %v3480 = vsub.s32 0, %v3479
      %v3481 = vrot.slane %v3476, %v3480
      %v3484 = vsel %vm1734, %v3466, 0
      %v3487 = vsel %vm1734, %v3467, 0
      %3489 = vmatprep.subr.mxu0 0.0
      %3490 = vmatpush1.msra.mxu0 0.0
      %3491 = vmatprep.subr.mxu0 0.0
      %3492 = vmatpush1.msra.mxu0 0.0
      %3493 = vmatprep.subr.mxu0 0.0
      %3494 = vmatpush1.msra.mxu0 0.0
      %3495 = vmatprep.subr.mxu0 0.0
      %3496 = vmatpush1.msra.mxu0 0.0
      %3497 = vmatprep.subr.mxu0 0.0
      %3498 = vmatpush1.msra.mxu0 0.0
      %3499 = vmatprep.subr.mxu0 0.0
      %3500 = vmatpush1.msra.mxu0 0.0
      %3501 = vmatprep.subr.mxu0 0.0
      %3502 = vmatpush1.msra.mxu0 0.0
      %3503 = vmatprep.subr.mxu0 0.0
      %3504 = vmatpush1.msra.mxu0 0.0
      %3505 = vmatprep.subr.mxu0 0.0
      %3506 = vmatpush1.msra.mxu0 %v3475
      %3507 = vmatprep.subr.mxu0 0.0
      %3508 = vmatpush1.msra.mxu0 %v3474
      %3509 = vmatprep.subr.mxu0 0.0
      %3510 = vmatpush1.msra.mxu0 %v3473
      %3511 = vmatprep.subr.mxu0 0.0
      %3512 = vmatpush1.msra.mxu0 %v3472
      %3513 = vmatprep.subr.mxu0 0.0
      %3514 = vmatpush1.msra.mxu0 %v3471
      %3515 = vmatprep.subr.mxu0 0.0
      %3516 = vmatpush1.msra.mxu0 %v3470
      %3517 = vmatprep.subr.mxu0 0.0
      %3518 = vmatpush1.msra.mxu0 %v3469
      %3519 = vmatprep.subr.mxu0 0.0
      %3520 = vmatpush1.msra.mxu0 %v3468
      %3521 = vmatprep.subr.mxu0 0.0
      %3522 = vmatpush2.msra.mxu0 0.0
      %3523 = vmatprep.subr.mxu0 0.0
      %3524 = vmatpush2.msra.mxu0 0.0
      %3525 = vmatprep.subr.mxu0 0.0
      %3526 = vmatpush2.msra.mxu0 0.0
      %3527 = vmatprep.subr.mxu0 0.0
      %3528 = vmatpush2.msra.mxu0 0.0
      %3529 = vmatprep.subr.mxu0 0.0
      %3530 = vmatpush2.msra.mxu0 0.0
      %3531 = vmatprep.subr.mxu0 0.0
      %3532 = vmatpush2.msra.mxu0 0.0
      %3533 = vmatprep.subr.mxu0 0.0
      %3534 = vmatpush2.msra.mxu0 0.0
      %3535 = vmatprep.subr.mxu0 0.0
      %3536 = vmatpush2.msra.mxu0 0.0
      %3537 = vmatprep.subr.mxu0 0.0
      %3538 = vmatpush2.msra.mxu0 0.0
      %3539 = vmatprep.subr.mxu0 0.0
      %3540 = vmatpush2.msra.mxu0 0.0
      %3541 = vmatprep.subr.mxu0 0.0
      %3542 = vmatpush2.msra.mxu0 0.0
      %3543 = vmatprep.subr.mxu0 0.0
      %3544 = vmatpush2.msra.mxu0 0.0
      %3545 = vmatprep.subr.mxu0 0.0
      %3546 = vmatpush2.msra.mxu0 0.0
      %3547 = vmatprep.subr.mxu0 0.0
      %3548 = vmatpush2.msra.mxu0 0.0
      %3549 = vmatprep.subr.mxu0 0.0
      %3550 = vmatpush2.msra.mxu0 0.0
      %3551 = vmatprep.subr.mxu0 0.0
      %3552 = vmatpush2.msra.mxu0 0.0
      %3553 = vmatprep.mubr.f32.mxu0 0.0
      %3554 = vmatmul.mubr.f32.gmra.mxu0 %v3484
      %v3555 = vpop.f32.mrf.mxu0
      %v3556 = vadd.f32 %v3481, %v3555
      %v3557 = vpop.f32.mrf.mxu0
      %3558 = vmatprep.mubr.f32.mxu0 0.0
      %3559 = vmatmul.mubr.f32.gmra.mxu0 %v3487
      %v3560 = vpop.f32.mrf.mxu0
      %v3561 = vadd.f32 %v3481, %v3560
      %v3562 = vpop.f32.mrf.mxu0
      %3563 = vdwg.mxu0
      %v3564 = vmax.f32 %v3556, 0.0
      %v3565 = vmax.f32 %v3561, 0.0
      %v3566 = vld [vmem:[%s23] sm:$0xf]
      %v3567 = vld [vmem:[%s24] sm:$0x1]
      %v3569 = vlaneseq
      %v3570 = vshrl.u32 %v3569, 7
      %v3571 = vsub.s32 0, %v3570
      %v3572 = vrot.slane %v3567, %v3571
      %vm3574 = vcmask 31744
      %v3576 = vsel %vm3574, %v3564, 0
      %v3579 = vsel %vm3574, %v3565, 0
      %vm3581 = vcmask 1043456
      %v3583 = vsel %vm3581, %v3566, 0
      %3585 = vmatprep.subr.mxu0 0.0
      %3586 = vmatpush1.msra.mxu0 0.0
      %3587 = vmatprep.subr.mxu0 0.0
      %3588 = vmatpush1.msra.mxu0 0.0
      %3589 = vmatprep.subr.mxu0 0.0
      %3590 = vmatpush1.msra.mxu0 0.0
      %3591 = vmatprep.subr.mxu0 0.0
      %3592 = vmatpush1.msra.mxu0 0.0
      %3593 = vmatprep.subr.mxu0 0.0
      %3594 = vmatpush1.msra.mxu0 0.0
      %3595 = vmatprep.subr.mxu0 0.0
      %3596 = vmatpush1.msra.mxu0 0.0
      %3597 = vmatprep.subr.mxu0 0.0
      %3598 = vmatpush1.msra.mxu0 0.0
      %3599 = vmatprep.subr.mxu0 0.0
      %3600 = vmatpush1.msra.mxu0 0.0
      %3601 = vmatprep.subr.mxu0 0.0
      %3602 = vmatpush1.msra.mxu0 0.0
      %3603 = vmatprep.subr.mxu0 0.0
      %3604 = vmatpush1.msra.mxu0 0.0
      %3605 = vmatprep.subr.mxu0 0.0
      %3606 = vmatpush1.msra.mxu0 0.0
      %3607 = vmatprep.subr.mxu0 0.0
      %3608 = vmatpush1.msra.mxu0 0.0
      %3609 = vmatprep.subr.mxu0 0.0
      %3610 = vmatpush1.msra.mxu0 0.0
      %3611 = vmatprep.subr.mxu0 0.0
      %3612 = vmatpush1.msra.mxu0 0.0
      %3613 = vmatprep.subr.mxu0 0.0
      %3614 = vmatpush1.msra.mxu0 0.0
      %3615 = vmatprep.subr.mxu0 0.0
      %3616 = vmatpush1.msra.mxu0 %v3583
      %3617 = vmatprep.subr.mxu0 0.0
      %3618 = vmatpush2.msra.mxu0 0.0
      %3619 = vmatprep.subr.mxu0 0.0
      %3620 = vmatpush2.msra.mxu0 0.0
      %3621 = vmatprep.subr.mxu0 0.0
      %3622 = vmatpush2.msra.mxu0 0.0
      %3623 = vmatprep.subr.mxu0 0.0
      %3624 = vmatpush2.msra.mxu0 0.0
      %3625 = vmatprep.subr.mxu0 0.0
      %3626 = vmatpush2.msra.mxu0 0.0
      %3627 = vmatprep.subr.mxu0 0.0
      %3628 = vmatpush2.msra.mxu0 0.0
      %3629 = vmatprep.subr.mxu0 0.0
      %3630 = vmatpush2.msra.mxu0 0.0
      %3631 = vmatprep.subr.mxu0 0.0
      %3632 = vmatpush2.msra.mxu0 0.0
      %3633 = vmatprep.subr.mxu0 0.0
      %3634 = vmatpush2.msra.mxu0 0.0
      %3635 = vmatprep.subr.mxu0 0.0
      %3636 = vmatpush2.msra.mxu0 0.0
      %3637 = vmatprep.subr.mxu0 0.0
      %3638 = vmatpush2.msra.mxu0 0.0
      %3639 = vmatprep.subr.mxu0 0.0
      %3640 = vmatpush2.msra.mxu0 0.0
      %3641 = vmatprep.subr.mxu0 0.0
      %3642 = vmatpush2.msra.mxu0 0.0
      %3643 = vmatprep.subr.mxu0 0.0
      %3644 = vmatpush2.msra.mxu0 0.0
      %3645 = vmatprep.subr.mxu0 0.0
      %3646 = vmatpush2.msra.mxu0 0.0
      %3647 = vmatprep.subr.mxu0 0.0
      %3648 = vmatpush2.msra.mxu0 0.0
      %3649 = vmatprep.mubr.f32.mxu0 0.0
      %3650 = vmatmul.mubr.f32.gmra.mxu0 %v3576
      %v3651 = vpop.f32.mrf.mxu0
      %v3652 = vadd.f32 %v3572, %v3651
      %v3653 = vpop.f32.mrf.mxu0
      %3654 = vmatprep.mubr.f32.mxu0 0.0
      %3655 = vmatmul.mubr.f32.gmra.mxu0 %v3579
      %v3656 = vpop.f32.mrf.mxu0
      %v3657 = vadd.f32 %v3572, %v3656
      %v3658 = vpop.f32.mrf.mxu0
      %3659 = vdwg.mxu0
      %v3660 = vmax.f32 %v3652, 0.0
      %v3661 = vmax.f32 %v3657, 0.0
      %vm3662 = vcmask 23552
      %3663 = vst.msk [vmem:[%s995] sm:$0xff] %vm3662, %v3660
      %3664 = vst.msk [vmem:[%s995 + $0x8] sm:$0xff] %vm3662, %v3661
      %p3665 = scmp.lt.s32.totalorder %s39, 1
      %s3666 = scalar_select %p3665, %s39, 1
      %s3667 = smul.addr %s3666, 2
      %s3668 = smul.addr %s3667, 8
      %s3669 = scalar_lea.vmem %s25, %s3668
      %p3670 = scmp.lt.s32.totalorder %s39, 1
      %s3671 = scalar_select %p3670, %s39, 1
      %s3672 = smul.addr %s3671, 2
      %s3673 = scalar_lea.vmem %s26, %s3672
      // Predicated region
      $region121: #{run.1} parent=119 // pred_check
        %p3674 = pneg %p642
      $region122: #{run.1} parent=119 // pred_check_branch
        %3676 = sbr.rel (%p3674) target = $region124
      $region123: #{run.1} parent=119 // pred_region
        _
      $region124: #{run.1} parent=119 // pred_fallthru
        _
      // Predicated region
      $region125: #{run.1} parent=119 // pred_check
        %p3677 = pneg %p668
      $region126: #{run.1} parent=119 // pred_check_branch
        %3679 = sbr.rel (%p3677) target = $region128
      $region127: #{run.1} parent=119 // pred_region
        _
      $region128: #{run.1} parent=119 // pred_fallthru
        _
    $region120: #{run.1} parent=5 // pred_fallthru
      _
    %p3680 = scmp.le.s32.totalorder 2, %s34
    // Predicated region
    $region129: #{run.1} parent=5 // pred_check
      %p3681 = pneg %p3680
    $region130: #{run.1} parent=5 // pred_check_branch
      %3683 = sbr.rel (%p3681) target = $region132
    $region131: #{run.1} parent=5 // pred_region
      %s3684 = ssub.s32 %s34, 2
      // Predicated region
      $region133: #{run.1} parent=131 // pred_check
        %p3685 = pneg %p648
      $region134: #{run.1} parent=131 // pred_check_branch
        %3687 = sbr.rel (%p3685) target = $region136
      $region135: #{run.1} parent=131 // pred_region
        %p3688 = scmp.lt.s32.totalorder %s40, 1
        %s3689 = scalar_select %p3688, %s40, 1
        %s3690 = smul.addr %s3689, 2
        %s3691 = smul.addr %s3690, 8
        %s3692 = scalar_lea.vmem %s25, %s3691
      $region136: #{run.1} parent=131 // pred_fallthru
        _
      // Predicated region
      $region137: #{run.1} parent=131 // pred_check
        %p3693 = pneg %p674
      $region138: #{run.1} parent=131 // pred_check_branch
        %3695 = sbr.rel (%p3693) target = $region140
      $region139: #{run.1} parent=131 // pred_region
        %p3696 = scmp.lt.s32.totalorder %s40, 1
        %s3697 = scalar_select %p3696, %s40, 1
        %s3698 = smul.addr %s3697, 2
        %s3699 = scalar_lea.vmem %s26, %s3698
      $region140: #{run.1} parent=131 // pred_fallthru
        _
    $region132: #{run.1} parent=5 // pred_fallthru
      _
  $region6: #{run.1} parent=0 // loop_footer
    %s38 = sadd.s32 1, %s34
  $region7: #{run.1} parent=0 // loop_footer_branch
    %33 = sbr.rel target = $region3
  $region8: #{run.1} parent=0 // loop_exit
    _

</llo_original>
